<compile_context>
chip_gen: v5e
topology: v5e:2x2
jax: 0.10.0
libtpu: 0.0.40
codegen_flags: <defaults>
</compile_context>

<pallas_src>
from functools import partial

import numpy as np
import jax
import jax.numpy as jnp
from jax.experimental import pallas as pl
from jax.experimental.pallas import tpu as pltpu


def _round_up(x, m):
    return ((x + m - 1) // m) * m


def _pick_row_tile(H, cap=8):
    """Largest divisor of H that is <= cap (row-tile height).

    `cap` should be swept / re-derived per generation from the VMEM budget
    (v5e/v6e: 128 MiB physical, v7x: 64 MiB); 8 keeps the test tiny and still
    exercises the multi-tile pipelined path.
    """
    cap = min(H, cap)
    for th in range(cap, 0, -1):
        if H % th == 0:
            return th
    return H


def _resblock_kernel(x_ref, w1_ref, b1_ref, w2_ref, b2_ref, col_ref, row_ref,
                     out_ref, *, K, pad, H, W, TH, Cp, res_scale):
    """One (batch, row-tile) block per grid step.

    x_ref   : (1, TH + 4*pad, W, Cp)  f32 input rows incl. halo (rows already
              zero-padded globally by 2*pad; channels zero-padded to Cp)
    w*_ref  : (K*K*Cp, Cp)            bf16 weights, taps folded into rows
    b*_ref  : (1, Cp)                 f32 biases
    col_ref : (Rin*W, 1) int32        flat-index -> column (w) lookup
    row_ref : (Rin*W, 1) int32        flat-index -> local row lookup
    out_ref : (1, TH, W, Cp)          f32
    """
    t = pl.program_id(1)
    Rin = TH + 4 * pad            # input rows in this block
    R1 = TH + 2 * pad             # conv1 output rows needed by conv2
    M1 = R1 * W
    Mo = TH * W

    xf = x_ref[0].reshape(Rin * W, Cp)        # (Rin*W, Cp) f32, lane-dense
    col = col_ref[...]                        # (Rin*W, 1) int32
    row = row_ref[...]                        # (Rin*W, 1) int32

    def shifted(v, d):
        # y[i] = v[i + d] when the source column (i % W) + d stays inside
        # [0, W), else 0 -- i.e. the conv's zero padding along W is realized
        # by the mask.  Output is bf16 so both MXU operands are bf16.
        # NOTE: pltpu.roll(v, -d, axis=0) could do the shift in the XLU slot;
        # the explicit slice+zero-concat keeps the semantics unambiguous.
        m = v.shape[0]
        if d == 0:
            return v.astype(jnp.bfloat16)
        z = jnp.zeros((abs(d), Cp), v.dtype)
        if d > 0:
            y = jnp.concatenate([v[d:], z], axis=0)
        else:
            y = jnp.concatenate([z, v[:m + d]], axis=0)
        ok = (col[:m] + d >= 0) & (col[:m] + d <= W - 1)
        return jnp.where(ok, y, 0.0).astype(jnp.bfloat16)

    # ---- conv1: all K*K taps folded into one (M1, K*K*Cp) @ (K*K*Cp, Cp) ----
    s_in = [shifted(xf, dx - pad) for dx in range(K)]   # K dx-shifted copies
    p1 = jnp.concatenate(
        [s_in[dx][dy * W:dy * W + M1] for dy in range(K) for dx in range(K)],
        axis=1)                                         # (M1, K*K*Cp) bf16
    h1 = jnp.dot(p1, w1_ref[...], preferred_element_type=jnp.float32)
    h1 = jnp.maximum(h1 + b1_ref[...], 0.0)             # bias + ReLU (f32)

    # zero h1 rows that fall outside the image: this is conv2's zero padding
    # along H (computed once per step with scalar grid arithmetic, no scratch).
    g = row[:M1] + (t * TH - pad)                       # global image row
    h1 = jnp.where((g >= 0) & (g <= H - 1), h1, 0.0)

    # ---- conv2: same fused-tap matmul on h1 ----
    s_h = [shifted(h1, dx - pad) for dx in range(K)]
    p2 = jnp.concatenate(
        [s_h[dx][dy * W:dy * W + Mo] for dy in range(K) for dx in range(K)],
        axis=1)                                         # (Mo, K*K*Cp) bf16
    res = jnp.dot(p2, w2_ref[...], preferred_element_type=jnp.float32)
    res = res + b2_ref[...]

    # ---- scale + residual add (residual read from the same input block) ----
    x_res = xf[2 * pad * W: 2 * pad * W + Mo, :]        # rows [2p, 2p+TH)
    out = res * res_scale + x_res
    out_ref[...] = out.reshape(1, TH, W, Cp).astype(out_ref.dtype)


def resblock_forward(x_nchw, w1, b1, w2, b2, res_scale=1.0, row_tile_cap=8):
    """x_nchw: (N, C, H, W) float32; w*: (K, K, C, C) HWIO; b*: (C,)."""
    N, C, H, W = x_nchw.shape
    K = w1.shape[0]
    pad = K // 2
    Cp = _round_up(C, 128)                 # lane-dense channel dim
    TH = _pick_row_tile(H, row_tile_cap)   # output rows per grid step
    n_t = H // TH
    Rin = TH + 4 * pad
    Min = Rin * W

    # NHWC, channels zero-padded to a full 128-lane width (single f32 copy:
    # the kernel casts to bf16 for the MXU and reuses f32 for the residual).
    x = jnp.transpose(x_nchw, (0, 2, 3, 1)).astype(jnp.float32)
    x = jnp.pad(x, ((0, 0), (0, 0), (0, 0), (0, Cp - C)))
    # rows zero-padded by 2*pad: conv1's halo for conv2's halo rows
    xr = jnp.pad(x, ((0, 0), (2 * pad, 2 * pad), (0, 0), (0, 0)))
    # pre-gathered overlapping row tiles -> plain Blocked BlockSpecs pipeline
    # them (no overlapping-window / manual-DMA machinery needed)
    tiles = jnp.stack([xr[:, ti * TH: ti * TH + Rin] for ti in range(n_t)],
                      axis=1)
    tiles = tiles.reshape(N * n_t, Rin, W, Cp)

    # weights: pad channels to Cp, fold the K*K taps into the contraction,
    # cast to bf16 (MXU operands); biases stay f32 for the VPU epilogue.
    w1r = jnp.pad(w1, ((0, 0), (0, 0), (0, Cp - C), (0, Cp - C))
                  ).reshape(K * K * Cp, Cp).astype(jnp.bfloat16)
    w2r = jnp.pad(w2, ((0, 0), (0, 0), (0, Cp - C), (0, Cp - C))
                  ).reshape(K * K * Cp, Cp).astype(jnp.bfloat16)
    b1r = jnp.pad(b1, (0, Cp - C)).reshape(1, Cp).astype(jnp.float32)
    b2r = jnp.pad(b2, (0, Cp - C)).reshape(1, Cp).astype(jnp.float32)

    # static index lookups for the in-kernel boundary masks (avoids vector
    # integer div/mod inside the kernel).
    flat = np.arange(Min, dtype=np.int32)
    col_ids = jnp.asarray((flat % W).reshape(Min, 1))
    row_ids = jnp.asarray((flat // W).reshape(Min, 1))

    kernel = partial(_resblock_kernel, K=K, pad=pad, H=H, W=W, TH=TH, Cp=Cp,
                     res_scale=float(res_scale))

    out = pl.pallas_call(
        kernel,
        out_shape=jax.ShapeDtypeStruct((N, H, W, Cp), jnp.float32),
        grid_spec=pltpu.PrefetchScalarGridSpec(
            num_scalar_prefetch=0,
            grid=(N, n_t),
            in_specs=[
                pl.BlockSpec((1, Rin, W, Cp),
                             lambda n, t: (n * n_t + t, 0, 0, 0)),   # row tile
                pl.BlockSpec((K * K * Cp, Cp), lambda n, t: (0, 0)),  # w1
                pl.BlockSpec((1, Cp), lambda n, t: (0, 0)),           # b1
                pl.BlockSpec((K * K * Cp, Cp), lambda n, t: (0, 0)),  # w2
                pl.BlockSpec((1, Cp), lambda n, t: (0, 0)),           # b2
                pl.BlockSpec((Min, 1), lambda n, t: (0, 0)),          # col ids
                pl.BlockSpec((Min, 1), lambda n, t: (0, 0)),          # row ids
            ],
            out_specs=pl.BlockSpec((1, TH, W, Cp), lambda n, t: (n, t, 0, 0)),
        ),
        compiler_params=pltpu.CompilerParams(
            dimension_semantics=("parallel", "parallel"),
            # explicit budget: ~3 MiB/step footprint + generous headroom;
            # safe on all generations (<= physical VMEM incl. v7x's 64 MiB).
            vmem_limit_bytes=32 * 1024 * 1024),
    )(tiles, w1r, b1r, w2r, b2r, col_ids, row_ids)

    out = out[..., :C]                          # drop channel padding (lanes)
    return jnp.transpose(out, (0, 3, 1, 2))     # back to NCHW


def _reference_resblock(x_nchw, w1, b1, w2, b2, res_scale=1.0):
    """Pure-JAX reference (NHWC conv) for a numerical sanity check."""
    x = jnp.transpose(x_nchw, (0, 2, 3, 1))
    dn = ("NHWC", "HWIO", "NHWC")
    h = jax.lax.conv_general_dilated(x, w1, (1, 1), "SAME",
                                     dimension_numbers=dn) + b1
    h = jnp.maximum(h, 0.0)
    r = jax.lax.conv_general_dilated(h, w2, (1, 1), "SAME",
                                     dimension_numbers=dn) + b2
    out = r * res_scale + x
    return jnp.transpose(out, (0, 3, 1, 2))


if __name__ == "__main__":
    # small shapes consistent with the module: n_feat=4, kernel_size=3
    N, C, H, W, K = 2, 4, 16, 16, 3
    key = jax.random.PRNGKey(0)
    kx, kw1, kb1, kw2, kb2 = jax.random.split(key, 5)

    x = jax.random.normal(kx, (N, C, H, W), dtype=jnp.float32)
    # deterministic synthetic parameters (HWIO layout)
    w1 = jax.random.normal(kw1, (K, K, C, C), dtype=jnp.float32) * 0.1
    b1 = jax.random.normal(kb1, (C,), dtype=jnp.float32) * 0.1
    w2 = jax.random.normal(kw2, (K, K, C, C), dtype=jnp.float32) * 0.1
    b2 = jax.random.normal(kb2, (C,), dtype=jnp.float32) * 0.1

    out = resblock_forward(x, w1, b1, w2, b2, res_scale=1.0)
    out = jax.block_until_ready(out)

    ref = _reference_resblock(x, w1, b1, w2, b2, res_scale=1.0)
    assert out.shape == (N, C, H, W)
    err = float(jnp.max(jnp.abs(out - ref)))
    assert jnp.allclose(out, ref, atol=1e-2, rtol=1e-2), f"max abs err {err}"

    print("KERNEL_OK")
</pallas_src>

<mosaic_0001>
module attributes {stable_mosaic.version = 11 : i64} {
  func.func @_resblock_kernel(%arg0: i32, %arg1: i32, %arg2: memref<1x12x16x128xf32, #tpu.memory_space<vmem>>, %arg3: memref<1152x128xbf16, #tpu.memory_space<vmem>>, %arg4: memref<1x128xf32, #tpu.memory_space<vmem>>, %arg5: memref<1152x128xbf16, #tpu.memory_space<vmem>>, %arg6: memref<1x128xf32, #tpu.memory_space<vmem>>, %arg7: memref<192x1xi32, #tpu.memory_space<vmem>>, %arg8: memref<192x1xi32, #tpu.memory_space<vmem>>, %arg9: memref<1x8x16x128xf32, #tpu.memory_space<vmem>>) attributes {dimension_semantics = [#tpu.dimension_semantics<parallel>, #tpu.dimension_semantics<parallel>], iteration_bounds = array<i64: 2, 2>, scalar_prefetch = 0 : i64, scratch_operands = 0 : i64, tpu.core_type = #tpu.core_type<tc>, window_params = [{transform_indices = @transform_0, window_bounds = array<i64: 1, 12, 16, 128>}, {pipeline_mode = #tpu.pipeline_mode<synchronous>, transform_indices = @transform_1, window_bounds = array<i64: 1152, 128>}, {pipeline_mode = #tpu.pipeline_mode<synchronous>, transform_indices = @transform_2, window_bounds = array<i64: 1, 128>}, {pipeline_mode = #tpu.pipeline_mode<synchronous>, transform_indices = @transform_3, window_bounds = array<i64: 1152, 128>}, {pipeline_mode = #tpu.pipeline_mode<synchronous>, transform_indices = @transform_4, window_bounds = array<i64: 1, 128>}, {pipeline_mode = #tpu.pipeline_mode<synchronous>, transform_indices = @transform_5, window_bounds = array<i64: 192, 1>}, {pipeline_mode = #tpu.pipeline_mode<synchronous>, transform_indices = @transform_6, window_bounds = array<i64: 192, 1>}, {transform_indices = @transform_7, window_bounds = array<i64: 1, 8, 16, 128>}]} {
    %c0 = arith.constant 0 : index
    %c0_0 = arith.constant 0 : index
    %c0_1 = arith.constant 0 : index
    %c0_2 = arith.constant 0 : index
    %0 = vector.load %arg2[%c0, %c0_0, %c0_1, %c0_2] : memref<1x12x16x128xf32, #tpu.memory_space<vmem>>, vector<1x12x16x128xf32>
    %1 = vector.shape_cast %0 : vector<1x12x16x128xf32> to vector<12x16x128xf32>
    %2 = vector.shape_cast %1 : vector<12x16x128xf32> to vector<192x128xf32>
    %c0_3 = arith.constant 0 : index
    %c0_4 = arith.constant 0 : index
    %3 = vector.load %arg7[%c0_3, %c0_4] : memref<192x1xi32, #tpu.memory_space<vmem>>, vector<192x1xi32>
    %c0_5 = arith.constant 0 : index
    %c0_6 = arith.constant 0 : index
    %4 = vector.load %arg8[%c0_5, %c0_6] : memref<192x1xi32, #tpu.memory_space<vmem>>, vector<192x1xi32>
    %cst = arith.constant 0.000000e+00 : f32
    %5 = vector.broadcast %cst : f32 to vector<1x128xf32>
    %6 = vector.extract_strided_slice %2 {offsets = [0, 0], sizes = [191, 128], strides = [1, 1]} : vector<192x128xf32> to vector<191x128xf32>
    %7 = tpu.concatenate %5, %6 in 0 : vector<1x128xf32>, vector<191x128xf32> -> vector<192x128xf32>
    %c-1_i32 = arith.constant -1 : i32
    %8 = vector.broadcast %c-1_i32 : i32 to vector<192x1xi32>
    %9 = arith.addi %3, %8 : vector<192x1xi32>
    %c0_i32 = arith.constant 0 : i32
    %10 = vector.broadcast %c0_i32 : i32 to vector<192x1xi32>
    %11 = arith.cmpi sge, %9, %10 : vector<192x1xi32>
    %c-1_i32_7 = arith.constant -1 : i32
    %12 = vector.broadcast %c-1_i32_7 : i32 to vector<192x1xi32>
    %13 = arith.addi %3, %12 : vector<192x1xi32>
    %c15_i32 = arith.constant 15 : i32
    %14 = vector.broadcast %c15_i32 : i32 to vector<192x1xi32>
    %15 = arith.cmpi sle, %13, %14 : vector<192x1xi32>
    %16 = arith.andi %11, %15 : vector<192x1xi1>
    %cst_8 = arith.constant 0.000000e+00 : f32
    %17 = vector.shape_cast %16 : vector<192x1xi1> to vector<192x1xi1>
    %18 = vector.broadcast %17 : vector<192x1xi1> to vector<192x128xi1>
    %19 = vector.broadcast %cst_8 : f32 to vector<192x128xf32>
    %20 = arith.select %18, %7, %19 : vector<192x128xi1>, vector<192x128xf32>
    %21 = arith.truncf %20 : vector<192x128xf32> to vector<192x128xbf16>
    %22 = arith.truncf %2 : vector<192x128xf32> to vector<192x128xbf16>
    %cst_9 = arith.constant 0.000000e+00 : f32
    %23 = vector.broadcast %cst_9 : f32 to vector<1x128xf32>
    %24 = vector.extract_strided_slice %2 {offsets = [1, 0], sizes = [191, 128], strides = [1, 1]} : vector<192x128xf32> to vector<191x128xf32>
    %25 = tpu.concatenate %24, %23 in 0 : vector<191x128xf32>, vector<1x128xf32> -> vector<192x128xf32>
    %c1_i32 = arith.constant 1 : i32
    %26 = vector.broadcast %c1_i32 : i32 to vector<192x1xi32>
    %27 = arith.addi %3, %26 : vector<192x1xi32>
    %c0_i32_10 = arith.constant 0 : i32
    %28 = vector.broadcast %c0_i32_10 : i32 to vector<192x1xi32>
    %29 = arith.cmpi sge, %27, %28 : vector<192x1xi32>
    %c1_i32_11 = arith.constant 1 : i32
    %30 = vector.broadcast %c1_i32_11 : i32 to vector<192x1xi32>
    %31 = arith.addi %3, %30 : vector<192x1xi32>
    %c15_i32_12 = arith.constant 15 : i32
    %32 = vector.broadcast %c15_i32_12 : i32 to vector<192x1xi32>
    %33 = arith.cmpi sle, %31, %32 : vector<192x1xi32>
    %34 = arith.andi %29, %33 : vector<192x1xi1>
    %cst_13 = arith.constant 0.000000e+00 : f32
    %35 = vector.shape_cast %34 : vector<192x1xi1> to vector<192x1xi1>
    %36 = vector.broadcast %35 : vector<192x1xi1> to vector<192x128xi1>
    %37 = vector.broadcast %cst_13 : f32 to vector<192x128xf32>
    %38 = arith.select %36, %25, %37 : vector<192x128xi1>, vector<192x128xf32>
    %39 = arith.truncf %38 : vector<192x128xf32> to vector<192x128xbf16>
    %40 = vector.extract_strided_slice %21 {offsets = [0, 0], sizes = [160, 128], strides = [1, 1]} : vector<192x128xbf16> to vector<160x128xbf16>
    %41 = vector.extract_strided_slice %22 {offsets = [0, 0], sizes = [160, 128], strides = [1, 1]} : vector<192x128xbf16> to vector<160x128xbf16>
    %42 = vector.extract_strided_slice %39 {offsets = [0, 0], sizes = [160, 128], strides = [1, 1]} : vector<192x128xbf16> to vector<160x128xbf16>
    %43 = vector.extract_strided_slice %21 {offsets = [16, 0], sizes = [160, 128], strides = [1, 1]} : vector<192x128xbf16> to vector<160x128xbf16>
    %44 = vector.extract_strided_slice %22 {offsets = [16, 0], sizes = [160, 128], strides = [1, 1]} : vector<192x128xbf16> to vector<160x128xbf16>
    %45 = vector.extract_strided_slice %39 {offsets = [16, 0], sizes = [160, 128], strides = [1, 1]} : vector<192x128xbf16> to vector<160x128xbf16>
    %46 = vector.extract_strided_slice %21 {offsets = [32, 0], sizes = [160, 128], strides = [1, 1]} : vector<192x128xbf16> to vector<160x128xbf16>
    %47 = vector.extract_strided_slice %22 {offsets = [32, 0], sizes = [160, 128], strides = [1, 1]} : vector<192x128xbf16> to vector<160x128xbf16>
    %48 = vector.extract_strided_slice %39 {offsets = [32, 0], sizes = [160, 128], strides = [1, 1]} : vector<192x128xbf16> to vector<160x128xbf16>
    %49 = tpu.concatenate %40, %41, %42, %43, %44, %45, %46, %47, %48 in 1 : vector<160x128xbf16>, vector<160x128xbf16>, vector<160x128xbf16>, vector<160x128xbf16>, vector<160x128xbf16>, vector<160x128xbf16>, vector<160x128xbf16>, vector<160x128xbf16>, vector<160x128xbf16> -> vector<160x1152xbf16>
    %c0_14 = arith.constant 0 : index
    %c0_15 = arith.constant 0 : index
    %50 = vector.load %arg3[%c0_14, %c0_15] : memref<1152x128xbf16, #tpu.memory_space<vmem>>, vector<1152x128xbf16>
    %cst_16 = arith.constant dense<0.000000e+00> : vector<160x128xf32>
    %51 = tpu.matmul %49, %50, %cst_16 {dimension_numbers = #tpu.dot_dimension_numbers<[1], [0], [0], [1], [0, 0, 1, 1], [], []>} : vector<160x1152xbf16>, vector<1152x128xbf16>, vector<160x128xf32> -> vector<160x128xf32>
    %c0_17 = arith.constant 0 : index
    %c0_18 = arith.constant 0 : index
    %52 = vector.load %arg4[%c0_17, %c0_18] : memref<1x128xf32, #tpu.memory_space<vmem>>, vector<1x128xf32>
    %53 = vector.broadcast %52 : vector<1x128xf32> to vector<160x128xf32>
    %54 = arith.addf %51, %53 : vector<160x128xf32>
    %cst_19 = arith.constant 0.000000e+00 : f32
    %55 = vector.broadcast %cst_19 : f32 to vector<160x128xf32>
    %56 = arith.maximumf %54, %55 : vector<160x128xf32>
    %57 = vector.extract_strided_slice %4 {offsets = [0, 0], sizes = [160, 1], strides = [1, 1]} : vector<192x1xi32> to vector<160x1xi32>
    %c8_i32 = arith.constant 8 : i32
    %58 = arith.muli %arg1, %c8_i32 : i32
    %c1_i32_20 = arith.constant 1 : i32
    %59 = arith.subi %58, %c1_i32_20 : i32
    %60 = vector.broadcast %59 : i32 to vector<160x1xi32>
    %61 = arith.addi %57, %60 : vector<160x1xi32>
    %c0_i32_21 = arith.constant 0 : i32
    %62 = vector.broadcast %c0_i32_21 : i32 to vector<160x1xi32>
    %63 = arith.cmpi sge, %61, %62 : vector<160x1xi32>
    %c15_i32_22 = arith.constant 15 : i32
    %64 = vector.broadcast %c15_i32_22 : i32 to vector<160x1xi32>
    %65 = arith.cmpi sle, %61, %64 : vector<160x1xi32>
    %66 = arith.andi %63, %65 : vector<160x1xi1>
    %cst_23 = arith.constant 0.000000e+00 : f32
    %67 = vector.shape_cast %66 : vector<160x1xi1> to vector<160x1xi1>
    %68 = vector.broadcast %67 : vector<160x1xi1> to vector<160x128xi1>
    %69 = vector.broadcast %cst_23 : f32 to vector<160x128xf32>
    %70 = arith.select %68, %56, %69 : vector<160x128xi1>, vector<160x128xf32>
    %cst_24 = arith.constant 0.000000e+00 : f32
    %71 = vector.broadcast %cst_24 : f32 to vector<1x128xf32>
    %72 = vector.extract_strided_slice %70 {offsets = [0, 0], sizes = [159, 128], strides = [1, 1]} : vector<160x128xf32> to vector<159x128xf32>
    %73 = tpu.concatenate %71, %72 in 0 : vector<1x128xf32>, vector<159x128xf32> -> vector<160x128xf32>
    %74 = vector.extract_strided_slice %3 {offsets = [0, 0], sizes = [160, 1], strides = [1, 1]} : vector<192x1xi32> to vector<160x1xi32>
    %c-1_i32_25 = arith.constant -1 : i32
    %75 = vector.broadcast %c-1_i32_25 : i32 to vector<160x1xi32>
    %76 = arith.addi %74, %75 : vector<160x1xi32>
    %c0_i32_26 = arith.constant 0 : i32
    %77 = vector.broadcast %c0_i32_26 : i32 to vector<160x1xi32>
    %78 = arith.cmpi sge, %76, %77 : vector<160x1xi32>
    %79 = vector.extract_strided_slice %3 {offsets = [0, 0], sizes = [160, 1], strides = [1, 1]} : vector<192x1xi32> to vector<160x1xi32>
    %c-1_i32_27 = arith.constant -1 : i32
    %80 = vector.broadcast %c-1_i32_27 : i32 to vector<160x1xi32>
    %81 = arith.addi %79, %80 : vector<160x1xi32>
    %c15_i32_28 = arith.constant 15 : i32
    %82 = vector.broadcast %c15_i32_28 : i32 to vector<160x1xi32>
    %83 = arith.cmpi sle, %81, %82 : vector<160x1xi32>
    %84 = arith.andi %78, %83 : vector<160x1xi1>
    %cst_29 = arith.constant 0.000000e+00 : f32
    %85 = vector.shape_cast %84 : vector<160x1xi1> to vector<160x1xi1>
    %86 = vector.broadcast %85 : vector<160x1xi1> to vector<160x128xi1>
    %87 = vector.broadcast %cst_29 : f32 to vector<160x128xf32>
    %88 = arith.select %86, %73, %87 : vector<160x128xi1>, vector<160x128xf32>
    %89 = arith.truncf %88 : vector<160x128xf32> to vector<160x128xbf16>
    %90 = arith.truncf %70 : vector<160x128xf32> to vector<160x128xbf16>
    %cst_30 = arith.constant 0.000000e+00 : f32
    %91 = vector.broadcast %cst_30 : f32 to vector<1x128xf32>
    %92 = vector.extract_strided_slice %70 {offsets = [1, 0], sizes = [159, 128], strides = [1, 1]} : vector<160x128xf32> to vector<159x128xf32>
    %93 = tpu.concatenate %92, %91 in 0 : vector<159x128xf32>, vector<1x128xf32> -> vector<160x128xf32>
    %94 = vector.extract_strided_slice %3 {offsets = [0, 0], sizes = [160, 1], strides = [1, 1]} : vector<192x1xi32> to vector<160x1xi32>
    %c1_i32_31 = arith.constant 1 : i32
    %95 = vector.broadcast %c1_i32_31 : i32 to vector<160x1xi32>
    %96 = arith.addi %94, %95 : vector<160x1xi32>
    %c0_i32_32 = arith.constant 0 : i32
    %97 = vector.broadcast %c0_i32_32 : i32 to vector<160x1xi32>
    %98 = arith.cmpi sge, %96, %97 : vector<160x1xi32>
    %99 = vector.extract_strided_slice %3 {offsets = [0, 0], sizes = [160, 1], strides = [1, 1]} : vector<192x1xi32> to vector<160x1xi32>
    %c1_i32_33 = arith.constant 1 : i32
    %100 = vector.broadcast %c1_i32_33 : i32 to vector<160x1xi32>
    %101 = arith.addi %99, %100 : vector<160x1xi32>
    %c15_i32_34 = arith.constant 15 : i32
    %102 = vector.broadcast %c15_i32_34 : i32 to vector<160x1xi32>
    %103 = arith.cmpi sle, %101, %102 : vector<160x1xi32>
    %104 = arith.andi %98, %103 : vector<160x1xi1>
    %cst_35 = arith.constant 0.000000e+00 : f32
    %105 = vector.shape_cast %104 : vector<160x1xi1> to vector<160x1xi1>
    %106 = vector.broadcast %105 : vector<160x1xi1> to vector<160x128xi1>
    %107 = vector.broadcast %cst_35 : f32 to vector<160x128xf32>
    %108 = arith.select %106, %93, %107 : vector<160x128xi1>, vector<160x128xf32>
    %109 = arith.truncf %108 : vector<160x128xf32> to vector<160x128xbf16>
    %110 = vector.extract_strided_slice %89 {offsets = [0, 0], sizes = [128, 128], strides = [1, 1]} : vector<160x128xbf16> to vector<128x128xbf16>
    %111 = vector.extract_strided_slice %90 {offsets = [0, 0], sizes = [128, 128], strides = [1, 1]} : vector<160x128xbf16> to vector<128x128xbf16>
    %112 = vector.extract_strided_slice %109 {offsets = [0, 0], sizes = [128, 128], strides = [1, 1]} : vector<160x128xbf16> to vector<128x128xbf16>
    %113 = vector.extract_strided_slice %89 {offsets = [16, 0], sizes = [128, 128], strides = [1, 1]} : vector<160x128xbf16> to vector<128x128xbf16>
    %114 = vector.extract_strided_slice %90 {offsets = [16, 0], sizes = [128, 128], strides = [1, 1]} : vector<160x128xbf16> to vector<128x128xbf16>
    %115 = vector.extract_strided_slice %109 {offsets = [16, 0], sizes = [128, 128], strides = [1, 1]} : vector<160x128xbf16> to vector<128x128xbf16>
    %116 = vector.extract_strided_slice %89 {offsets = [32, 0], sizes = [128, 128], strides = [1, 1]} : vector<160x128xbf16> to vector<128x128xbf16>
    %117 = vector.extract_strided_slice %90 {offsets = [32, 0], sizes = [128, 128], strides = [1, 1]} : vector<160x128xbf16> to vector<128x128xbf16>
    %118 = vector.extract_strided_slice %109 {offsets = [32, 0], sizes = [128, 128], strides = [1, 1]} : vector<160x128xbf16> to vector<128x128xbf16>
    %119 = tpu.concatenate %110, %111, %112, %113, %114, %115, %116, %117, %118 in 1 : vector<128x128xbf16>, vector<128x128xbf16>, vector<128x128xbf16>, vector<128x128xbf16>, vector<128x128xbf16>, vector<128x128xbf16>, vector<128x128xbf16>, vector<128x128xbf16>, vector<128x128xbf16> -> vector<128x1152xbf16>
    %c0_36 = arith.constant 0 : index
    %c0_37 = arith.constant 0 : index
    %120 = vector.load %arg5[%c0_36, %c0_37] : memref<1152x128xbf16, #tpu.memory_space<vmem>>, vector<1152x128xbf16>
    %cst_38 = arith.constant dense<0.000000e+00> : vector<128x128xf32>
    %121 = tpu.matmul %119, %120, %cst_38 {dimension_numbers = #tpu.dot_dimension_numbers<[1], [0], [0], [1], [0, 0, 1, 1], [], []>} : vector<128x1152xbf16>, vector<1152x128xbf16>, vector<128x128xf32> -> vector<128x128xf32>
    %c0_39 = arith.constant 0 : index
    %c0_40 = arith.constant 0 : index
    %122 = vector.load %arg6[%c0_39, %c0_40] : memref<1x128xf32, #tpu.memory_space<vmem>>, vector<1x128xf32>
    %123 = vector.broadcast %122 : vector<1x128xf32> to vector<128x128xf32>
    %124 = arith.addf %121, %123 : vector<128x128xf32>
    %125 = vector.extract_strided_slice %2 {offsets = [32, 0], sizes = [128, 128], strides = [1, 1]} : vector<192x128xf32> to vector<128x128xf32>
    %cst_41 = arith.constant 1.000000e+00 : f32
    %126 = vector.broadcast %cst_41 : f32 to vector<128x128xf32>
    %127 = arith.mulf %124, %126 : vector<128x128xf32>
    %128 = arith.addf %127, %125 : vector<128x128xf32>
    %129 = vector.shape_cast %128 : vector<128x128xf32> to vector<1x8x16x128xf32>
    %c0_42 = arith.constant 0 : index
    %c0_43 = arith.constant 0 : index
    %c0_44 = arith.constant 0 : index
    %c0_45 = arith.constant 0 : index
    %130 = vector.load %arg9[%c0_42, %c0_43, %c0_44, %c0_45] : memref<1x8x16x128xf32, #tpu.memory_space<vmem>>, vector<1x8x16x128xf32>
    tpu.vector_store %arg9[%c0_42, %c0_43, %c0_44, %c0_45], %129 {strides = array<i32>} : memref<1x8x16x128xf32, #tpu.memory_space<vmem>>, vector<1x8x16x128xf32>,
    return
  }
  func.func @transform_0(%arg0: i32, %arg1: i32) -> (i32, i32, i32, i32) {
    %c2_i32 = arith.constant 2 : i32
    %0 = arith.muli %arg0, %c2_i32 : i32
    %1 = arith.addi %0, %arg1 : i32
    %c0_i32 = arith.constant 0 : i32
    %c0_i32_0 = arith.constant 0 : i32
    %c0_i32_1 = arith.constant 0 : i32
    %c0_i32_2 = arith.constant 0 : i32
    return %1, %c0_i32, %c0_i32_0, %c0_i32_1 : i32, i32, i32, i32
  }
  func.func @transform_1(%arg0: i32, %arg1: i32) -> (i32, i32) {
    %c0_i32 = arith.constant 0 : i32
    %c0_i32_0 = arith.constant 0 : i32
    %c0_i32_1 = arith.constant 0 : i32
    return %c0_i32, %c0_i32_0 : i32, i32
  }
  func.func @transform_2(%arg0: i32, %arg1: i32) -> (i32, i32) {
    %c0_i32 = arith.constant 0 : i32
    %c0_i32_0 = arith.constant 0 : i32
    %c0_i32_1 = arith.constant 0 : i32
    return %c0_i32, %c0_i32_0 : i32, i32
  }
  func.func @transform_3(%arg0: i32, %arg1: i32) -> (i32, i32) {
    %c0_i32 = arith.constant 0 : i32
    %c0_i32_0 = arith.constant 0 : i32
    %c0_i32_1 = arith.constant 0 : i32
    return %c0_i32, %c0_i32_0 : i32, i32
  }
  func.func @transform_4(%arg0: i32, %arg1: i32) -> (i32, i32) {
    %c0_i32 = arith.constant 0 : i32
    %c0_i32_0 = arith.constant 0 : i32
    %c0_i32_1 = arith.constant 0 : i32
    return %c0_i32, %c0_i32_0 : i32, i32
  }
  func.func @transform_5(%arg0: i32, %arg1: i32) -> (i32, i32) {
    %c0_i32 = arith.constant 0 : i32
    %c0_i32_0 = arith.constant 0 : i32
    %c0_i32_1 = arith.constant 0 : i32
    return %c0_i32, %c0_i32_0 : i32, i32
  }
  func.func @transform_6(%arg0: i32, %arg1: i32) -> (i32, i32) {
    %c0_i32 = arith.constant 0 : i32
    %c0_i32_0 = arith.constant 0 : i32
    %c0_i32_1 = arith.constant 0 : i32
    return %c0_i32, %c0_i32_0 : i32, i32
  }
  func.func @transform_7(%arg0: i32, %arg1: i32) -> (i32, i32, i32, i32) {
    %c0_i32 = arith.constant 0 : i32
    %c0_i32_0 = arith.constant 0 : i32
    %c0_i32_1 = arith.constant 0 : i32
    return %arg0, %arg1, %c0_i32, %c0_i32_0 : i32, i32, i32, i32
  }
}

</mosaic_0001>

<llo_original>
// kernel: tpu_custom_call.1
$region0: #{tpu_custom_call.1}
  #allocation0 [shape = 'u32[]', space=smem, size = 0x4, offset = 0x4, fixed_abs, tag = 'smem constant byte address 0x4 - core index']
  #allocation1 [shape = 'u32[72,128]{1,0:T(1,128)}', space=vmem, size = 0x9000, scoped, tag = 'internal scratch']
  %s0 = inlined_call_operand.hbm [shape: f32[4,12,16,128], index: 0, kind: input, shape index: {}]
  %s1 = inlined_call_operand.hbm [shape: bf16[1152,128], index: 1, kind: input, shape index: {}]
  %s2 = inlined_call_operand.vmem [shape: f32[1,128], index: 2, kind: input, shape index: {}]
  %s3 = inlined_call_operand.hbm [shape: bf16[1152,128], index: 3, kind: input, shape index: {}]
  %s4 = inlined_call_operand.vmem [shape: f32[1,128], index: 4, kind: input, shape index: {}]
  %s5 = inlined_call_operand.vmem [shape: s32[192,1], index: 5, kind: input, shape index: {}]
  %s6 = inlined_call_operand.vmem [shape: s32[192,1], index: 6, kind: input, shape index: {}]
  %s7 = inlined_call_operand.hbm [shape: f32[2,16,16,128], index: 7, kind: output, shape index: {}]
  %s8 = sld [smem:[#allocation0]]
  $region73: #{tpu_custom_call.1} parent=0
    _
  %s10 = ssub.s32 1, %s8
  %s11 = scalar_select 0, %s10, %s8
  $region1: #{tpu_custom_call.1} parent=0
    #allocation2 [shape = 'u8[196608]{0}', space=vmem, size = 0x30000, scoped, tag = 'input window, operand 0']
    #allocation3 [shape = 's32[2]{0}', space=sflag, size = 0x8, scoped, tag = 'scoped memory for tpu_custom_call.1']
    #allocation4 [shape = 's32[2]{0}', space=sflag, size = 0x8, scoped, tag = 'scoped memory for tpu_custom_call.1']
    #allocation5 [shape = 'u8[294912]{0}', space=vmem, size = 0x48000, scoped, tag = 'input window, operand 1, single buffered']
    #allocation6 [shape = 's32[1]{0}', space=sflag, size = 0x4, scoped, tag = 'scoped memory for tpu_custom_call.1']
    #allocation7 [shape = 'u8[294912]{0}', space=vmem, size = 0x48000, scoped, tag = 'input window, operand 3, single buffered']
    #allocation8 [shape = 'u8[131072]{0}', space=vmem, size = 0x20000, scoped, tag = 'output window, operand 0']
    %12 = vsyncpa [#allocation3], 0
    %s13 = scalar_lea.sflag [#allocation3], 1
    %14 = vsyncpa %s13, 0
    %15 = vsyncpa [#allocation6], 0
    %16 = vsyncpa [#allocation4], 0
    %s17 = scalar_lea.sflag [#allocation4], 1
    %18 = vsyncpa %s17, 0
    loop: start=0, step=1, limit=6
    $region2: #{tpu_custom_call.1} parent=1 // loop_pre_header
      _
    $region3: #{tpu_custom_call.1} parent=1 // loop_header
      %s20 = sphi 0, %s24
      %p21 = scmp.ge.s32.totalorder %s20, 6
      %s27 = sphi 0, %s39
      %s28 = sphi 0, %s35
      %s29 = sphi 0, %s27
      %s30 = sphi 0, %s28
      %s31 = sphi 0, %s29
      %s32 = sphi 0, %s30
      %s46 = sphi 0, %s48
      %s49 = sphi 0, %s46
      %s50 = sphi 0, %s49
      %s66 = sphi 0, %s50
      %s70 = sphi 0, %s70
      %s72 = sphi 0, %s70
      %s73 = sphi 0, %s72
      %s87 = sphi 0, %s73
      %s91 = sphi 0, %s91
      %s93 = sphi 0, %s91
      %s94 = sphi 0, %s93
      %s108 = sphi 0, %s94
      %s112 = sphi 0, %s112
      %s114 = sphi 0, %s112
      %s115 = sphi 0, %s114
      %s129 = sphi 0, %s115
      %s133 = sphi 0, %s133
      %s135 = sphi 0, %s133
      %s136 = sphi 0, %s135
      %s150 = sphi 0, %s136
      %s154 = sphi 0, %s154
      %s156 = sphi 0, %s154
      %s157 = sphi 0, %s156
      %s171 = sphi 0, %s157
      %s175 = sphi 0, %s175
      %s177 = sphi 0, %s175
      %s178 = sphi 0, %s177
      %s192 = sphi 0, %s178
      %s200 = sphi 0, %s202
      %s203 = sphi 0, %s200
      %s204 = sphi 0, %s203
      %s220 = sphi 0, %s204
    $region4: #{tpu_custom_call.1} parent=1 // loop_header_branch
      %23 = sbr.rel (%p21) target = $region8
    $region5: #{tpu_custom_call.1} parent=1 // loop_body
      %s25 = ssub.s32 %s20, 1
      %s26 = ssub.s32 %s20, 2
      %s33 = sadd.s32 1, %s28
      %p34 = scmp.ge.s32.totalorder %s33, 2
      %s35 = scalar_select %p34, 0, %s33
      %s36 = sadd.s32 1, %s27
      %s37 = scalar_select %p34, %s36, %s27
      %p38 = scmp.ge.s32.totalorder %s37, 2
      %s39 = scalar_select %p38, 0, %s37
      %s40 = smul.u32 %s27, 2
      %s41 = sadd.s32 %s40, %s28
      %s42 = smul.u32 %s39, 2
      %s43 = sadd.s32 %s42, %s35
      %s44 = ssub.s32 %s41, %s43
      %p45 = scmp.eq.s32.totalorder %s44, 0
      %s47 = sadd.s32 %s46, 1
      %s48 = scalar_select %p45, %s46, %s47
      %p51 = pneg %p45
      %p52 = scmp.eq.s32.totalorder %s20, 3
      %p53 = por %p51, %p52
      %p54 = scmp.ne.s32.totalorder %s46, %s49
      %p55 = scmp.eq.s32.totalorder %s20, 0
      %p56 = por %p54, %p55
      %p57 = scmp.ne.s32.totalorder %s46, %s49
      %p58 = scmp.eq.s32.totalorder %s25, 3
      %p59 = por %p57, %p58
      %p60 = scmp.ne.s32.totalorder %s49, %s50
      %p61 = scmp.eq.s32.totalorder %s25, 0
      %p62 = por %p60, %p61
      %p63 = scmp.ne.s32.totalorder %s49, %s50
      %p64 = scmp.eq.s32.totalorder %s26, 3
      %p65 = por %p63, %p64
      %p67 = scmp.ne.s32.totalorder %s50, %s66
      %p68 = scmp.eq.s32.totalorder %s26, 0
      %p69 = por %p67, %p68
      %s71 = sadd.s32 %s70, 1
      %p74 = scmp.eq.s32.totalorder %s20, 3
      %p75 = scmp.ne.s32.totalorder %s70, %s72
      %p76 = scmp.eq.s32.totalorder %s20, 0
      %p77 = por %p75, %p76
      %p78 = scmp.ne.s32.totalorder %s70, %s72
      %p79 = scmp.eq.s32.totalorder %s25, 3
      %p80 = por %p78, %p79
      %p81 = scmp.ne.s32.totalorder %s72, %s73
      %p82 = scmp.eq.s32.totalorder %s25, 0
      %p83 = por %p81, %p82
      %p84 = scmp.ne.s32.totalorder %s72, %s73
      %p85 = scmp.eq.s32.totalorder %s26, 3
      %p86 = por %p84, %p85
      %p88 = scmp.ne.s32.totalorder %s73, %s87
      %p89 = scmp.eq.s32.totalorder %s26, 0
      %p90 = por %p88, %p89
      %s92 = sadd.s32 %s91, 1
      %p95 = scmp.eq.s32.totalorder %s20, 3
      %p96 = scmp.ne.s32.totalorder %s91, %s93
      %p97 = scmp.eq.s32.totalorder %s20, 0
      %p98 = por %p96, %p97
      %p99 = scmp.ne.s32.totalorder %s91, %s93
      %p100 = scmp.eq.s32.totalorder %s25, 3
      %p101 = por %p99, %p100
      %p102 = scmp.ne.s32.totalorder %s93, %s94
      %p103 = scmp.eq.s32.totalorder %s25, 0
      %p104 = por %p102, %p103
      %p105 = scmp.ne.s32.totalorder %s93, %s94
      %p106 = scmp.eq.s32.totalorder %s26, 3
      %p107 = por %p105, %p106
      %p109 = scmp.ne.s32.totalorder %s94, %s108
      %p110 = scmp.eq.s32.totalorder %s26, 0
      %p111 = por %p109, %p110
      %s113 = sadd.s32 %s112, 1
      %p116 = scmp.eq.s32.totalorder %s20, 3
      %p117 = scmp.ne.s32.totalorder %s112, %s114
      %p118 = scmp.eq.s32.totalorder %s20, 0
      %p119 = por %p117, %p118
      %p120 = scmp.ne.s32.totalorder %s112, %s114
      %p121 = scmp.eq.s32.totalorder %s25, 3
      %p122 = por %p120, %p121
      %p123 = scmp.ne.s32.totalorder %s114, %s115
      %p124 = scmp.eq.s32.totalorder %s25, 0
      %p125 = por %p123, %p124
      %p126 = scmp.ne.s32.totalorder %s114, %s115
      %p127 = scmp.eq.s32.totalorder %s26, 3
      %p128 = por %p126, %p127
      %p130 = scmp.ne.s32.totalorder %s115, %s129
      %p131 = scmp.eq.s32.totalorder %s26, 0
      %p132 = por %p130, %p131
      %s134 = sadd.s32 %s133, 1
      %p137 = scmp.eq.s32.totalorder %s20, 3
      %p138 = scmp.ne.s32.totalorder %s133, %s135
      %p139 = scmp.eq.s32.totalorder %s20, 0
      %p140 = por %p138, %p139
      %p141 = scmp.ne.s32.totalorder %s133, %s135
      %p142 = scmp.eq.s32.totalorder %s25, 3
      %p143 = por %p141, %p142
      %p144 = scmp.ne.s32.totalorder %s135, %s136
      %p145 = scmp.eq.s32.totalorder %s25, 0
      %p146 = por %p144, %p145
      %p147 = scmp.ne.s32.totalorder %s135, %s136
      %p148 = scmp.eq.s32.totalorder %s26, 3
      %p149 = por %p147, %p148
      %p151 = scmp.ne.s32.totalorder %s136, %s150
      %p152 = scmp.eq.s32.totalorder %s26, 0
      %p153 = por %p151, %p152
      %s155 = sadd.s32 %s154, 1
      %p158 = scmp.eq.s32.totalorder %s20, 3
      %p159 = scmp.ne.s32.totalorder %s154, %s156
      %p160 = scmp.eq.s32.totalorder %s20, 0
      %p161 = por %p159, %p160
      %p162 = scmp.ne.s32.totalorder %s154, %s156
      %p163 = scmp.eq.s32.totalorder %s25, 3
      %p164 = por %p162, %p163
      %p165 = scmp.ne.s32.totalorder %s156, %s157
      %p166 = scmp.eq.s32.totalorder %s25, 0
      %p167 = por %p165, %p166
      %p168 = scmp.ne.s32.totalorder %s156, %s157
      %p169 = scmp.eq.s32.totalorder %s26, 3
      %p170 = por %p168, %p169
      %p172 = scmp.ne.s32.totalorder %s157, %s171
      %p173 = scmp.eq.s32.totalorder %s26, 0
      %p174 = por %p172, %p173
      %s176 = sadd.s32 %s175, 1
      %p179 = scmp.eq.s32.totalorder %s20, 3
      %p180 = scmp.ne.s32.totalorder %s175, %s177
      %p181 = scmp.eq.s32.totalorder %s20, 0
      %p182 = por %p180, %p181
      %p183 = scmp.ne.s32.totalorder %s175, %s177
      %p184 = scmp.eq.s32.totalorder %s25, 3
      %p185 = por %p183, %p184
      %p186 = scmp.ne.s32.totalorder %s177, %s178
      %p187 = scmp.eq.s32.totalorder %s25, 0
      %p188 = por %p186, %p187
      %p189 = scmp.ne.s32.totalorder %s177, %s178
      %p190 = scmp.eq.s32.totalorder %s26, 3
      %p191 = por %p189, %p190
      %p193 = scmp.ne.s32.totalorder %s178, %s192
      %p194 = scmp.eq.s32.totalorder %s26, 0
      %p195 = por %p193, %p194
      %s196 = ssub.s32 %s27, %s39
      %s197 = ssub.s32 %s28, %s35
      %s198 = sor.u32 %s196, %s197
      %p199 = scmp.eq.s32.totalorder %s198, 0
      %s201 = sadd.s32 %s200, 1
      %s202 = scalar_select %p199, %s200, %s201
      %p205 = pneg %p199
      %p206 = scmp.eq.s32.totalorder %s20, 3
      %p207 = por %p205, %p206
      %p208 = scmp.ne.s32.totalorder %s200, %s203
      %p209 = scmp.eq.s32.totalorder %s20, 0
      %p210 = por %p208, %p209
      %p211 = scmp.ne.s32.totalorder %s200, %s203
      %p212 = scmp.eq.s32.totalorder %s25, 3
      %p213 = por %p211, %p212
      %p214 = scmp.ne.s32.totalorder %s203, %s204
      %p215 = scmp.eq.s32.totalorder %s25, 0
      %p216 = por %p214, %p215
      %p217 = scmp.ne.s32.totalorder %s203, %s204
      %p218 = scmp.eq.s32.totalorder %s26, 3
      %p219 = por %p217, %p218
      %p221 = scmp.ne.s32.totalorder %s204, %s220
      %p222 = scmp.eq.s32.totalorder %s26, 0
      %p223 = por %p221, %p222
      %p224 = scmp.le.s32.totalorder 1, %s20
      %p225 = scmp.lt.s32.totalorder %s20, 5
      %p226 = pnand %p224, %p225
      %p227 = pneg %p226
      // Predicated region
      $region9: #{tpu_custom_call.1} parent=5 // pred_check
        _
      $region10: #{tpu_custom_call.1} parent=5 // pred_check_branch
        %229 = sbr.rel (%p226) target = $region12
      $region11: #{tpu_custom_call.1} parent=5 // pred_region
        %s230 = ssub.s32 %s20, 1
        // Predicated region
        $region13: #{tpu_custom_call.1} parent=11 // pred_check
          %p231 = pneg %p83
        $region14: #{tpu_custom_call.1} parent=11 // pred_check_branch
          %233 = sbr.rel (%p231) target = $region16
        $region15: #{tpu_custom_call.1} parent=11 // pred_region
          %235 = vsyncadd [#allocation6], 0
          %s236 = sshll.u32 %s1, 4
          %s237 = int_to_ptr.hbm [resolvable:$true] %s236
          %s238 = sshll.u32 [#allocation5], 4
          %s239 = int_to_ptr.vmem [resolvable:$true] %s238
          %244 = dma.hbm_to_vmem [thread:$0]  %s237, 9216, %s239, [#allocation6], 64, 64, 4
        $region16: #{tpu_custom_call.1} parent=11 // pred_fallthru
          _
        // Predicated region
        $region17: #{tpu_custom_call.1} parent=11 // pred_check
          %p245 = pneg %p104
        $region18: #{tpu_custom_call.1} parent=11 // pred_check_branch
          %247 = sbr.rel (%p245) target = $region20
        $region19: #{tpu_custom_call.1} parent=11 // pred_region
          _
        $region20: #{tpu_custom_call.1} parent=11 // pred_fallthru
          _
        // Predicated region
        $region21: #{tpu_custom_call.1} parent=11 // pred_check
          %p248 = pneg %p125
        $region22: #{tpu_custom_call.1} parent=11 // pred_check_branch
          %250 = sbr.rel (%p248) target = $region24
        $region23: #{tpu_custom_call.1} parent=11 // pred_region
          %252 = vsyncadd [#allocation6], 0
          %s253 = sshll.u32 %s3, 4
          %s254 = int_to_ptr.hbm [resolvable:$true] %s253
          %s255 = sshll.u32 [#allocation7], 4
          %s256 = int_to_ptr.vmem [resolvable:$true] %s255
          %261 = dma.hbm_to_vmem [thread:$0]  %s254, 9216, %s256, [#allocation6], 64, 64, 4
        $region24: #{tpu_custom_call.1} parent=11 // pred_fallthru
          _
        // Predicated region
        $region25: #{tpu_custom_call.1} parent=11 // pred_check
          %p262 = pneg %p146
        $region26: #{tpu_custom_call.1} parent=11 // pred_check_branch
          %264 = sbr.rel (%p262) target = $region28
        $region27: #{tpu_custom_call.1} parent=11 // pred_region
          _
        $region28: #{tpu_custom_call.1} parent=11 // pred_fallthru
          _
        // Predicated region
        $region29: #{tpu_custom_call.1} parent=11 // pred_check
          %p265 = pneg %p167
        $region30: #{tpu_custom_call.1} parent=11 // pred_check_branch
          %267 = sbr.rel (%p265) target = $region32
        $region31: #{tpu_custom_call.1} parent=11 // pred_region
          _
        $region32: #{tpu_custom_call.1} parent=11 // pred_fallthru
          _
        // Predicated region
        $region33: #{tpu_custom_call.1} parent=11 // pred_check
          %p268 = pneg %p188
        $region34: #{tpu_custom_call.1} parent=11 // pred_check_branch
          %270 = sbr.rel (%p268) target = $region36
        $region35: #{tpu_custom_call.1} parent=11 // pred_region
          _
        $region36: #{tpu_custom_call.1} parent=11 // pred_fallthru
          _
      $region12: #{tpu_custom_call.1} parent=5 // pred_fallthru
        _
      %p271 = scmp.lt.s32.totalorder %s20, 4
      // Predicated region
      $region37: #{tpu_custom_call.1} parent=5 // pred_check
        %p272 = pneg %p271
      $region38: #{tpu_custom_call.1} parent=5 // pred_check_branch
        %274 = sbr.rel (%p272) target = $region40
      $region39: #{tpu_custom_call.1} parent=5 // pred_region
        // Predicated region
        $region41: #{tpu_custom_call.1} parent=39 // pred_check
          %p275 = pneg %p56
        $region42: #{tpu_custom_call.1} parent=39 // pred_check_branch
          %277 = sbr.rel (%p275) target = $region44
        $region43: #{tpu_custom_call.1} parent=39 // pred_region
          %s278 = sand.u32 %s46, 1
          %s279 = scalar_lea.sflag [#allocation3], %s278
          %s280 = sand.u32 %s46, 1
          %s281 = smul.addr %s280, 192
          %s282 = scalar_lea.vmem [#allocation2], %s281
          %s283 = smul.u32 %s27, 2
          %s284 = sadd.s32 %s283, %s28
          %286 = vsyncadd %s279, 0
          %s287 = smul.addr %s284, 24
          %s288 = smul.addr %s287, 8
          %s289 = scalar_lea.hbm %s0, %s288
          %s290 = sshll.u32 %s289, 4
          %s291 = int_to_ptr.hbm [resolvable:$true] %s290
          %s292 = sshll.u32 %s282, 4
          %s293 = int_to_ptr.vmem [resolvable:$true] %s292
          %298 = dma.hbm_to_vmem [thread:$0]  %s291, 3072, %s293, %s279, 128, 128, 8
        $region44: #{tpu_custom_call.1} parent=39 // pred_fallthru
          _
      $region40: #{tpu_custom_call.1} parent=5 // pred_fallthru
        _
      %p299 = scmp.le.s32.totalorder 1, %s20
      %p300 = scmp.lt.s32.totalorder %s20, 5
      %p301 = pnand %p299, %p300
      %p302 = pneg %p301
      // Predicated region
      $region45: #{tpu_custom_call.1} parent=5 // pred_check
        _
      $region46: #{tpu_custom_call.1} parent=5 // pred_check_branch
        %304 = sbr.rel (%p301) target = $region48
      $region47: #{tpu_custom_call.1} parent=5 // pred_region
        %s305 = ssub.s32 %s20, 1
        %s306 = sand.u32 %s49, 1
        %s307 = scalar_lea.sflag [#allocation3], %s306
        %s308 = sand.u32 %s49, 1
        %s309 = smul.addr %s308, 192
        %s310 = scalar_lea.vmem [#allocation2], %s309
        // Predicated region
        $region49: #{tpu_custom_call.1} parent=47 // pred_check
          %p311 = pneg %p62
        $region50: #{tpu_custom_call.1} parent=47 // pred_check_branch
          %313 = sbr.rel (%p311) target = $region52
        $region51: #{tpu_custom_call.1} parent=47 // pred_region
          %315 = dma.done %s307, 3072
        $region52: #{tpu_custom_call.1} parent=47 // pred_fallthru
          _
        // Predicated region
        $region53: #{tpu_custom_call.1} parent=47 // pred_check
          %p316 = pneg %p83
        $region54: #{tpu_custom_call.1} parent=47 // pred_check_branch
          %318 = sbr.rel (%p316) target = $region56
        $region55: #{tpu_custom_call.1} parent=47 // pred_region
          %320 = dma.done [#allocation6], 9216
        $region56: #{tpu_custom_call.1} parent=47 // pred_fallthru
          _
        // Predicated region
        $region57: #{tpu_custom_call.1} parent=47 // pred_check
          %p321 = pneg %p125
        $region58: #{tpu_custom_call.1} parent=47 // pred_check_branch
          %323 = sbr.rel (%p321) target = $region60
        $region59: #{tpu_custom_call.1} parent=47 // pred_region
          %325 = dma.done [#allocation6], 9216
        $region60: #{tpu_custom_call.1} parent=47 // pred_fallthru
          _
        %s326 = sand.u32 %s49, 1
        %s327 = scalar_lea.sflag [#allocation3], %s326
        %s328 = sand.u32 %s49, 1
        %s329 = smul.addr %s328, 192
        %s330 = scalar_lea.vmem [#allocation2], %s329
        %p331 = pneg %p62
        %p332 = pneg %p59
        %p333 = pneg %p83
        %p334 = pneg %p80
        %p335 = pneg %p104
        %p336 = pneg %p101
        %p337 = pneg %p125
        %p338 = pneg %p122
        %p339 = pneg %p146
        %p340 = pneg %p143
        %p341 = pneg %p167
        %p342 = pneg %p164
        %p343 = pneg %p188
        %p344 = pneg %p185
        %p345 = pneg %p216
        %p346 = pneg %p213
        %s347 = sand.u32 %s203, 1
        %s348 = scalar_lea.sflag [#allocation4], %s347
        %s349 = sand.u32 %s203, 1
        %s350 = smul.addr %s349, 128
        %s351 = scalar_lea.vmem [#allocation8], %s350
        %s352 = smul.u32 %s29, 2
        %s353 = sadd.s32 %s352, %s30
        %s354 = smul.u32 8, %s30
        %v355 = vld [vmem:[%s310] sm:$0xff]
        %v356 = vld [vmem:[%s310 + $0x8] sm:$0xff]
        %v357 = vld [vmem:[%s310 + $0x10] sm:$0xff]
        %v358 = vld [vmem:[%s310 + $0x18] sm:$0xff]
        %v359 = vld [vmem:[%s310 + $0x20] sm:$0xff]
        %v360 = vld [vmem:[%s310 + $0x28] sm:$0xff]
        %v361 = vld [vmem:[%s310 + $0x30] sm:$0xff]
        %v362 = vld [vmem:[%s310 + $0x38] sm:$0xff]
        %v363 = vld [vmem:[%s310 + $0x40] sm:$0xff]
        %v364 = vld [vmem:[%s310 + $0x48] sm:$0xff]
        %v365 = vld [vmem:[%s310 + $0x50] sm:$0xff]
        %v366 = vld [vmem:[%s310 + $0x58] sm:$0xff]
        %v367 = vld [vmem:[%s310 + $0x60] sm:$0xff]
        %v368 = vld [vmem:[%s310 + $0x68] sm:$0xff]
        %v369 = vld [vmem:[%s310 + $0x70] sm:$0xff]
        %v370 = vld [vmem:[%s310 + $0x78] sm:$0xff]
        %v371 = vld [vmem:[%s310 + $0x80] sm:$0xff]
        %v372 = vld [vmem:[%s310 + $0x88] sm:$0xff]
        %v373 = vld [vmem:[%s310 + $0x90] sm:$0xff]
        %v374 = vld [vmem:[%s310 + $0x98] sm:$0xff]
        %v375 = vld [vmem:[%s310 + $0xa0] sm:$0xff]
        %v376 = vld [vmem:[%s310 + $0xa8] sm:$0xff]
        %v377 = vld [vmem:[%s310 + $0xb0] sm:$0xff]
        %v378 = vld [vmem:[%s310 + $0xb8] sm:$0xff]
        %v379 = vld [vmem:[%s5] sm:$0xff]
        %v380 = vld [vmem:[%s5 + $0x8] sm:$0xff]
        %v381 = vld [vmem:[%s5 + $0x10] sm:$0xff]
        %v382 = vld [vmem:[%s5 + $0x18] sm:$0xff]
        %v383 = vld [vmem:[%s5 + $0x20] sm:$0xff]
        %v384 = vld [vmem:[%s5 + $0x28] sm:$0xff]
        %v385 = vld [vmem:[%s5 + $0x30] sm:$0xff]
        %v386 = vld [vmem:[%s5 + $0x38] sm:$0xff]
        %v387 = vld [vmem:[%s5 + $0x40] sm:$0xff]
        %v388 = vld [vmem:[%s5 + $0x48] sm:$0xff]
        %v389 = vld [vmem:[%s5 + $0x50] sm:$0xff]
        %v390 = vld [vmem:[%s5 + $0x58] sm:$0xff]
        %v391 = vld [vmem:[%s5 + $0x60] sm:$0xff]
        %v392 = vld [vmem:[%s5 + $0x68] sm:$0xff]
        %v393 = vld [vmem:[%s5 + $0x70] sm:$0xff]
        %v394 = vld [vmem:[%s5 + $0x78] sm:$0xff]
        %v395 = vld [vmem:[%s5 + $0x80] sm:$0xff]
        %v396 = vld [vmem:[%s5 + $0x88] sm:$0xff]
        %v397 = vld [vmem:[%s5 + $0x90] sm:$0xff]
        %v398 = vld [vmem:[%s5 + $0x98] sm:$0xff]
        %v399 = vld [vmem:[%s5 + $0xa0] sm:$0xff]
        %v400 = vld [vmem:[%s5 + $0xa8] sm:$0xff]
        %v401 = vld [vmem:[%s5 + $0xb0] sm:$0xff]
        %v402 = vld [vmem:[%s5 + $0xb8] sm:$0xff]
        %v403 = vld [vmem:[%s6] sm:$0xff]
        %v404 = vld [vmem:[%s6 + $0x8] sm:$0xff]
        %v405 = vld [vmem:[%s6 + $0x10] sm:$0xff]
        %v406 = vld [vmem:[%s6 + $0x18] sm:$0xff]
        %v407 = vld [vmem:[%s6 + $0x20] sm:$0xff]
        %v408 = vld [vmem:[%s6 + $0x28] sm:$0xff]
        %v409 = vld [vmem:[%s6 + $0x30] sm:$0xff]
        %v410 = vld [vmem:[%s6 + $0x38] sm:$0xff]
        %v411 = vld [vmem:[%s6 + $0x40] sm:$0xff]
        %v412 = vld [vmem:[%s6 + $0x48] sm:$0xff]
        %v413 = vld [vmem:[%s6 + $0x50] sm:$0xff]
        %v414 = vld [vmem:[%s6 + $0x58] sm:$0xff]
        %v415 = vld [vmem:[%s6 + $0x60] sm:$0xff]
        %v416 = vld [vmem:[%s6 + $0x68] sm:$0xff]
        %v417 = vld [vmem:[%s6 + $0x70] sm:$0xff]
        %v418 = vld [vmem:[%s6 + $0x78] sm:$0xff]
        %v419 = vld [vmem:[%s6 + $0x80] sm:$0xff]
        %v420 = vld [vmem:[%s6 + $0x88] sm:$0xff]
        %v421 = vld [vmem:[%s6 + $0x90] sm:$0xff]
        %v422 = vld [vmem:[%s6 + $0x98] sm:$0xff]
        %vm447 = vcmask 1040384
        %v448 = vrot.slane %v355, 7
        %v449 = vrot.slane %v356, 7
        %v450 = vsel %vm447, %v448, %v449
        %v451 = vrot.slane %v357, 7
        %v452 = vsel %vm447, %v449, %v451
        %v453 = vrot.slane %v358, 7
        %v454 = vsel %vm447, %v451, %v453
        %v455 = vrot.slane %v359, 7
        %v456 = vsel %vm447, %v453, %v455
        %v457 = vrot.slane %v360, 7
        %v458 = vsel %vm447, %v455, %v457
        %v459 = vrot.slane %v361, 7
        %v460 = vsel %vm447, %v457, %v459
        %v461 = vrot.slane %v362, 7
        %v462 = vsel %vm447, %v459, %v461
        %v463 = vrot.slane %v363, 7
        %v464 = vsel %vm447, %v461, %v463
        %v465 = vrot.slane %v364, 7
        %v466 = vsel %vm447, %v463, %v465
        %v467 = vrot.slane %v365, 7
        %v468 = vsel %vm447, %v465, %v467
        %v469 = vrot.slane %v366, 7
        %v470 = vsel %vm447, %v467, %v469
        %v471 = vrot.slane %v367, 7
        %v472 = vsel %vm447, %v469, %v471
        %v473 = vrot.slane %v368, 7
        %v474 = vsel %vm447, %v471, %v473
        %v475 = vrot.slane %v369, 7
        %v476 = vsel %vm447, %v473, %v475
        %v477 = vrot.slane %v370, 7
        %v478 = vsel %vm447, %v475, %v477
        %v479 = vrot.slane %v371, 7
        %v480 = vsel %vm447, %v477, %v479
        %v481 = vrot.slane %v372, 7
        %v482 = vsel %vm447, %v479, %v481
        %v483 = vrot.slane %v373, 7
        %v484 = vsel %vm447, %v481, %v483
        %v485 = vrot.slane %v374, 7
        %v486 = vsel %vm447, %v483, %v485
        %v487 = vrot.slane %v375, 7
        %v488 = vsel %vm447, %v485, %v487
        %v489 = vrot.slane %v376, 7
        %v490 = vsel %vm447, %v487, %v489
        %v491 = vrot.slane %v377, 7
        %v492 = vsel %vm447, %v489, %v491
        %v493 = vrot.slane %v378, 7
        %v494 = vsel %vm447, %v491, %v493
        %v519 = vsel %vm447, 0.0, %v448
        %v520 = vadd.s32 %v379, 4294967295
        %v521 = vadd.s32 %v380, 4294967295
        %v522 = vadd.s32 %v381, 4294967295
        %v523 = vadd.s32 %v382, 4294967295
        %v524 = vadd.s32 %v383, 4294967295
        %v525 = vadd.s32 %v384, 4294967295
        %v526 = vadd.s32 %v385, 4294967295
        %v527 = vadd.s32 %v386, 4294967295
        %v528 = vadd.s32 %v387, 4294967295
        %v529 = vadd.s32 %v388, 4294967295
        %v530 = vadd.s32 %v389, 4294967295
        %v531 = vadd.s32 %v390, 4294967295
        %v532 = vadd.s32 %v391, 4294967295
        %v533 = vadd.s32 %v392, 4294967295
        %v534 = vadd.s32 %v393, 4294967295
        %v535 = vadd.s32 %v394, 4294967295
        %v536 = vadd.s32 %v395, 4294967295
        %v537 = vadd.s32 %v396, 4294967295
        %v538 = vadd.s32 %v397, 4294967295
        %v539 = vadd.s32 %v398, 4294967295
        %v540 = vadd.s32 %v399, 4294967295
        %v541 = vadd.s32 %v400, 4294967295
        %v542 = vadd.s32 %v401, 4294967295
        %v543 = vadd.s32 %v402, 4294967295
        %vm544 = vcmp.ge.s32.totalorder %v520, 0
        %vm545 = vcmp.ge.s32.totalorder %v521, 0
        %vm546 = vcmp.ge.s32.totalorder %v522, 0
        %vm547 = vcmp.ge.s32.totalorder %v523, 0
        %vm548 = vcmp.ge.s32.totalorder %v524, 0
        %vm549 = vcmp.ge.s32.totalorder %v525, 0
        %vm550 = vcmp.ge.s32.totalorder %v526, 0
        %vm551 = vcmp.ge.s32.totalorder %v527, 0
        %vm552 = vcmp.ge.s32.totalorder %v528, 0
        %vm553 = vcmp.ge.s32.totalorder %v529, 0
        %vm554 = vcmp.ge.s32.totalorder %v530, 0
        %vm555 = vcmp.ge.s32.totalorder %v531, 0
        %vm556 = vcmp.ge.s32.totalorder %v532, 0
        %vm557 = vcmp.ge.s32.totalorder %v533, 0
        %vm558 = vcmp.ge.s32.totalorder %v534, 0
        %vm559 = vcmp.ge.s32.totalorder %v535, 0
        %vm560 = vcmp.ge.s32.totalorder %v536, 0
        %vm561 = vcmp.ge.s32.totalorder %v537, 0
        %vm562 = vcmp.ge.s32.totalorder %v538, 0
        %vm563 = vcmp.ge.s32.totalorder %v539, 0
        %vm564 = vcmp.ge.s32.totalorder %v540, 0
        %vm565 = vcmp.ge.s32.totalorder %v541, 0
        %vm566 = vcmp.ge.s32.totalorder %v542, 0
        %vm567 = vcmp.ge.s32.totalorder %v543, 0
        %vm568 = vcmp.le.s32.totalorder %v520, 15
        %vm569 = vcmp.le.s32.totalorder %v521, 15
        %vm570 = vcmp.le.s32.totalorder %v522, 15
        %vm571 = vcmp.le.s32.totalorder %v523, 15
        %vm572 = vcmp.le.s32.totalorder %v524, 15
        %vm573 = vcmp.le.s32.totalorder %v525, 15
        %vm574 = vcmp.le.s32.totalorder %v526, 15
        %vm575 = vcmp.le.s32.totalorder %v527, 15
        %vm576 = vcmp.le.s32.totalorder %v528, 15
        %vm577 = vcmp.le.s32.totalorder %v529, 15
        %vm578 = vcmp.le.s32.totalorder %v530, 15
        %vm579 = vcmp.le.s32.totalorder %v531, 15
        %vm580 = vcmp.le.s32.totalorder %v532, 15
        %vm581 = vcmp.le.s32.totalorder %v533, 15
        %vm582 = vcmp.le.s32.totalorder %v534, 15
        %vm583 = vcmp.le.s32.totalorder %v535, 15
        %vm584 = vcmp.le.s32.totalorder %v536, 15
        %vm585 = vcmp.le.s32.totalorder %v537, 15
        %vm586 = vcmp.le.s32.totalorder %v538, 15
        %vm587 = vcmp.le.s32.totalorder %v539, 15
        %vm588 = vcmp.le.s32.totalorder %v540, 15
        %vm589 = vcmp.le.s32.totalorder %v541, 15
        %vm590 = vcmp.le.s32.totalorder %v542, 15
        %vm591 = vcmp.le.s32.totalorder %v543, 15
        %vm592 = vmand %vm544, %vm568
        %vm593 = vmand %vm545, %vm569
        %vm594 = vmand %vm546, %vm570
        %vm595 = vmand %vm547, %vm571
        %vm596 = vmand %vm548, %vm572
        %vm597 = vmand %vm549, %vm573
        %vm598 = vmand %vm550, %vm574
        %vm599 = vmand %vm551, %vm575
        %vm600 = vmand %vm552, %vm576
        %vm601 = vmand %vm553, %vm577
        %vm602 = vmand %vm554, %vm578
        %vm603 = vmand %vm555, %vm579
        %vm604 = vmand %vm556, %vm580
        %vm605 = vmand %vm557, %vm581
        %vm606 = vmand %vm558, %vm582
        %vm607 = vmand %vm559, %vm583
        %vm608 = vmand %vm560, %vm584
        %vm609 = vmand %vm561, %vm585
        %vm610 = vmand %vm562, %vm586
        %vm611 = vmand %vm563, %vm587
        %vm612 = vmand %vm564, %vm588
        %vm613 = vmand %vm565, %vm589
        %vm614 = vmand %vm566, %vm590
        %vm615 = vmand %vm567, %vm591
        %v616 = vsel %vm592, 1, 0
        %v617 = vsel %vm593, 1, 0
        %v618 = vsel %vm594, 1, 0
        %v619 = vsel %vm595, 1, 0
        %v620 = vsel %vm596, 1, 0
        %v621 = vsel %vm597, 1, 0
        %v622 = vsel %vm598, 1, 0
        %v623 = vsel %vm599, 1, 0
        %v624 = vsel %vm600, 1, 0
        %v625 = vsel %vm601, 1, 0
        %v626 = vsel %vm602, 1, 0
        %v627 = vsel %vm603, 1, 0
        %v628 = vsel %vm604, 1, 0
        %v629 = vsel %vm605, 1, 0
        %v630 = vsel %vm606, 1, 0
        %v631 = vsel %vm607, 1, 0
        %v632 = vsel %vm608, 1, 0
        %v633 = vsel %vm609, 1, 0
        %v634 = vsel %vm610, 1, 0
        %v635 = vsel %vm611, 1, 0
        %v636 = vsel %vm612, 1, 0
        %v637 = vsel %vm613, 1, 0
        %v638 = vsel %vm614, 1, 0
        %v639 = vsel %vm615, 1, 0
        %640 = vset.pattern.permute.xlu0 0
        %641 = vperm.xlu0 %640, %v616
        %v642 = vpop.permute.xlu0 %641
        %643 = vset.pattern.permute.xlu0 0
        %644 = vperm.xlu0 %643, %v617
        %v645 = vpop.permute.xlu0 %644
        %646 = vset.pattern.permute.xlu0 0
        %647 = vperm.xlu0 %646, %v618
        %v648 = vpop.permute.xlu0 %647
        %649 = vset.pattern.permute.xlu0 0
        %650 = vperm.xlu0 %649, %v619
        %v651 = vpop.permute.xlu0 %650
        %652 = vset.pattern.permute.xlu0 0
        %653 = vperm.xlu0 %652, %v620
        %v654 = vpop.permute.xlu0 %653
        %655 = vset.pattern.permute.xlu0 0
        %656 = vperm.xlu0 %655, %v621
        %v657 = vpop.permute.xlu0 %656
        %658 = vset.pattern.permute.xlu0 0
        %659 = vperm.xlu0 %658, %v622
        %v660 = vpop.permute.xlu0 %659
        %661 = vset.pattern.permute.xlu0 0
        %662 = vperm.xlu0 %661, %v623
        %v663 = vpop.permute.xlu0 %662
        %664 = vset.pattern.permute.xlu0 0
        %665 = vperm.xlu0 %664, %v624
        %v666 = vpop.permute.xlu0 %665
        %667 = vset.pattern.permute.xlu0 0
        %668 = vperm.xlu0 %667, %v625
        %v669 = vpop.permute.xlu0 %668
        %670 = vset.pattern.permute.xlu0 0
        %671 = vperm.xlu0 %670, %v626
        %v672 = vpop.permute.xlu0 %671
        %673 = vset.pattern.permute.xlu0 0
        %674 = vperm.xlu0 %673, %v627
        %v675 = vpop.permute.xlu0 %674
        %676 = vset.pattern.permute.xlu0 0
        %677 = vperm.xlu0 %676, %v628
        %v678 = vpop.permute.xlu0 %677
        %679 = vset.pattern.permute.xlu0 0
        %680 = vperm.xlu0 %679, %v629
        %v681 = vpop.permute.xlu0 %680
        %682 = vset.pattern.permute.xlu0 0
        %683 = vperm.xlu0 %682, %v630
        %v684 = vpop.permute.xlu0 %683
        %685 = vset.pattern.permute.xlu0 0
        %686 = vperm.xlu0 %685, %v631
        %v687 = vpop.permute.xlu0 %686
        %688 = vset.pattern.permute.xlu0 0
        %689 = vperm.xlu0 %688, %v632
        %v690 = vpop.permute.xlu0 %689
        %691 = vset.pattern.permute.xlu0 0
        %692 = vperm.xlu0 %691, %v633
        %v693 = vpop.permute.xlu0 %692
        %694 = vset.pattern.permute.xlu0 0
        %695 = vperm.xlu0 %694, %v634
        %v696 = vpop.permute.xlu0 %695
        %697 = vset.pattern.permute.xlu0 0
        %698 = vperm.xlu0 %697, %v635
        %v699 = vpop.permute.xlu0 %698
        %700 = vset.pattern.permute.xlu0 0
        %701 = vperm.xlu0 %700, %v636
        %v702 = vpop.permute.xlu0 %701
        %703 = vset.pattern.permute.xlu0 0
        %704 = vperm.xlu0 %703, %v637
        %v705 = vpop.permute.xlu0 %704
        %706 = vset.pattern.permute.xlu0 0
        %707 = vperm.xlu0 %706, %v638
        %v708 = vpop.permute.xlu0 %707
        %709 = vset.pattern.permute.xlu0 0
        %710 = vperm.xlu0 %709, %v639
        %v711 = vpop.permute.xlu0 %710
        %vm712 = vcmp.eq.s32.totalorder %v642, 1
        %vm713 = vcmp.eq.s32.totalorder %v645, 1
        %vm714 = vcmp.eq.s32.totalorder %v648, 1
        %vm715 = vcmp.eq.s32.totalorder %v651, 1
        %vm716 = vcmp.eq.s32.totalorder %v654, 1
        %vm717 = vcmp.eq.s32.totalorder %v657, 1
        %vm718 = vcmp.eq.s32.totalorder %v660, 1
        %vm719 = vcmp.eq.s32.totalorder %v663, 1
        %vm720 = vcmp.eq.s32.totalorder %v666, 1
        %vm721 = vcmp.eq.s32.totalorder %v669, 1
        %vm722 = vcmp.eq.s32.totalorder %v672, 1
        %vm723 = vcmp.eq.s32.totalorder %v675, 1
        %vm724 = vcmp.eq.s32.totalorder %v678, 1
        %vm725 = vcmp.eq.s32.totalorder %v681, 1
        %vm726 = vcmp.eq.s32.totalorder %v684, 1
        %vm727 = vcmp.eq.s32.totalorder %v687, 1
        %vm728 = vcmp.eq.s32.totalorder %v690, 1
        %vm729 = vcmp.eq.s32.totalorder %v693, 1
        %vm730 = vcmp.eq.s32.totalorder %v696, 1
        %vm731 = vcmp.eq.s32.totalorder %v699, 1
        %vm732 = vcmp.eq.s32.totalorder %v702, 1
        %vm733 = vcmp.eq.s32.totalorder %v705, 1
        %vm734 = vcmp.eq.s32.totalorder %v708, 1
        %vm735 = vcmp.eq.s32.totalorder %v711, 1
        %v736 = vsel %vm712, %v519, 0.0
        %v737 = vsel %vm713, %v450, 0.0
        %v738 = vsel %vm714, %v452, 0.0
        %v739 = vsel %vm715, %v454, 0.0
        %v740 = vsel %vm716, %v456, 0.0
        %v741 = vsel %vm717, %v458, 0.0
        %v742 = vsel %vm718, %v460, 0.0
        %v743 = vsel %vm719, %v462, 0.0
        %v744 = vsel %vm720, %v464, 0.0
        %v745 = vsel %vm721, %v466, 0.0
        %v746 = vsel %vm722, %v468, 0.0
        %v747 = vsel %vm723, %v470, 0.0
        %v748 = vsel %vm724, %v472, 0.0
        %v749 = vsel %vm725, %v474, 0.0
        %v750 = vsel %vm726, %v476, 0.0
        %v751 = vsel %vm727, %v478, 0.0
        %v752 = vsel %vm728, %v480, 0.0
        %v753 = vsel %vm729, %v482, 0.0
        %v754 = vsel %vm730, %v484, 0.0
        %v755 = vsel %vm731, %v486, 0.0
        %v756 = vsel %vm732, %v488, 0.0
        %v757 = vsel %vm733, %v490, 0.0
        %v758 = vsel %vm734, %v492, 0.0
        %v759 = vsel %vm735, %v494, 0.0
        %v760 = vpack.c.bf16 %v736, %v736
        %v761 = vpack.c.bf16 %v737, %v737
        %v762 = vpack.c.bf16 %v738, %v738
        %v763 = vpack.c.bf16 %v739, %v739
        %v764 = vpack.c.bf16 %v740, %v740
        %v765 = vpack.c.bf16 %v741, %v741
        %v766 = vpack.c.bf16 %v742, %v742
        %v767 = vpack.c.bf16 %v743, %v743
        %v768 = vpack.c.bf16 %v744, %v744
        %v769 = vpack.c.bf16 %v745, %v745
        %v770 = vpack.c.bf16 %v746, %v746
        %v771 = vpack.c.bf16 %v747, %v747
        %v772 = vpack.c.bf16 %v748, %v748
        %v773 = vpack.c.bf16 %v749, %v749
        %v774 = vpack.c.bf16 %v750, %v750
        %v775 = vpack.c.bf16 %v751, %v751
        %v776 = vpack.c.bf16 %v752, %v752
        %v777 = vpack.c.bf16 %v753, %v753
        %v778 = vpack.c.bf16 %v754, %v754
        %v779 = vpack.c.bf16 %v755, %v755
        %v780 = vpack.c.bf16 %v756, %v756
        %v781 = vpack.c.bf16 %v757, %v757
        %v782 = vpack.c.bf16 %v758, %v758
        %v783 = vpack.c.bf16 %v759, %v759
        %v784 = vpack.c.bf16 %v355, %v355
        %v785 = vpack.c.bf16 %v356, %v356
        %v786 = vpack.c.bf16 %v357, %v357
        %v787 = vpack.c.bf16 %v358, %v358
        %v788 = vpack.c.bf16 %v359, %v359
        %v789 = vpack.c.bf16 %v360, %v360
        %v790 = vpack.c.bf16 %v361, %v361
        %v791 = vpack.c.bf16 %v362, %v362
        %v792 = vpack.c.bf16 %v363, %v363
        %v793 = vpack.c.bf16 %v364, %v364
        %v794 = vpack.c.bf16 %v365, %v365
        %v795 = vpack.c.bf16 %v366, %v366
        %v796 = vpack.c.bf16 %v367, %v367
        %v797 = vpack.c.bf16 %v368, %v368
        %v798 = vpack.c.bf16 %v369, %v369
        %v799 = vpack.c.bf16 %v370, %v370
        %v800 = vpack.c.bf16 %v371, %v371
        %v801 = vpack.c.bf16 %v372, %v372
        %v802 = vpack.c.bf16 %v373, %v373
        %v803 = vpack.c.bf16 %v374, %v374
        %v804 = vpack.c.bf16 %v375, %v375
        %v805 = vpack.c.bf16 %v376, %v376
        %v806 = vpack.c.bf16 %v377, %v377
        %v807 = vpack.c.bf16 %v378, %v378
        %vm808 = vcmask 1046528
        %v809 = vrot.slane %v355, 1
        %v810 = vrot.slane %v356, 1
        %v811 = vsel %vm808, %v809, %v810
        %v812 = vrot.slane %v357, 1
        %v813 = vsel %vm808, %v810, %v812
        %v814 = vrot.slane %v358, 1
        %v815 = vsel %vm808, %v812, %v814
        %v816 = vrot.slane %v359, 1
        %v817 = vsel %vm808, %v814, %v816
        %v818 = vrot.slane %v360, 1
        %v819 = vsel %vm808, %v816, %v818
        %v820 = vrot.slane %v361, 1
        %v821 = vsel %vm808, %v818, %v820
        %v822 = vrot.slane %v362, 1
        %v823 = vsel %vm808, %v820, %v822
        %v824 = vrot.slane %v363, 1
        %v825 = vsel %vm808, %v822, %v824
        %v826 = vrot.slane %v364, 1
        %v827 = vsel %vm808, %v824, %v826
        %v828 = vrot.slane %v365, 1
        %v829 = vsel %vm808, %v826, %v828
        %v830 = vrot.slane %v366, 1
        %v831 = vsel %vm808, %v828, %v830
        %v832 = vrot.slane %v367, 1
        %v833 = vsel %vm808, %v830, %v832
        %v834 = vrot.slane %v368, 1
        %v835 = vsel %vm808, %v832, %v834
        %v836 = vrot.slane %v369, 1
        %v837 = vsel %vm808, %v834, %v836
        %v838 = vrot.slane %v370, 1
        %v839 = vsel %vm808, %v836, %v838
        %v840 = vrot.slane %v371, 1
        %v841 = vsel %vm808, %v838, %v840
        %v842 = vrot.slane %v372, 1
        %v843 = vsel %vm808, %v840, %v842
        %v844 = vrot.slane %v373, 1
        %v845 = vsel %vm808, %v842, %v844
        %v846 = vrot.slane %v374, 1
        %v847 = vsel %vm808, %v844, %v846
        %v848 = vrot.slane %v375, 1
        %v849 = vsel %vm808, %v846, %v848
        %v850 = vrot.slane %v376, 1
        %v851 = vsel %vm808, %v848, %v850
        %v852 = vrot.slane %v377, 1
        %v853 = vsel %vm808, %v850, %v852
        %v854 = vrot.slane %v378, 1
        %v855 = vsel %vm808, %v852, %v854
        %v880 = vsel %vm808, %v854, 0.0
        %v881 = vadd.s32 %v379, 1
        %v882 = vadd.s32 %v380, 1
        %v883 = vadd.s32 %v381, 1
        %v884 = vadd.s32 %v382, 1
        %v885 = vadd.s32 %v383, 1
        %v886 = vadd.s32 %v384, 1
        %v887 = vadd.s32 %v385, 1
        %v888 = vadd.s32 %v386, 1
        %v889 = vadd.s32 %v387, 1
        %v890 = vadd.s32 %v388, 1
        %v891 = vadd.s32 %v389, 1
        %v892 = vadd.s32 %v390, 1
        %v893 = vadd.s32 %v391, 1
        %v894 = vadd.s32 %v392, 1
        %v895 = vadd.s32 %v393, 1
        %v896 = vadd.s32 %v394, 1
        %v897 = vadd.s32 %v395, 1
        %v898 = vadd.s32 %v396, 1
        %v899 = vadd.s32 %v397, 1
        %v900 = vadd.s32 %v398, 1
        %v901 = vadd.s32 %v399, 1
        %v902 = vadd.s32 %v400, 1
        %v903 = vadd.s32 %v401, 1
        %v904 = vadd.s32 %v402, 1
        %vm905 = vcmp.ge.s32.totalorder %v881, 0
        %vm906 = vcmp.ge.s32.totalorder %v882, 0
        %vm907 = vcmp.ge.s32.totalorder %v883, 0
        %vm908 = vcmp.ge.s32.totalorder %v884, 0
        %vm909 = vcmp.ge.s32.totalorder %v885, 0
        %vm910 = vcmp.ge.s32.totalorder %v886, 0
        %vm911 = vcmp.ge.s32.totalorder %v887, 0
        %vm912 = vcmp.ge.s32.totalorder %v888, 0
        %vm913 = vcmp.ge.s32.totalorder %v889, 0
        %vm914 = vcmp.ge.s32.totalorder %v890, 0
        %vm915 = vcmp.ge.s32.totalorder %v891, 0
        %vm916 = vcmp.ge.s32.totalorder %v892, 0
        %vm917 = vcmp.ge.s32.totalorder %v893, 0
        %vm918 = vcmp.ge.s32.totalorder %v894, 0
        %vm919 = vcmp.ge.s32.totalorder %v895, 0
        %vm920 = vcmp.ge.s32.totalorder %v896, 0
        %vm921 = vcmp.ge.s32.totalorder %v897, 0
        %vm922 = vcmp.ge.s32.totalorder %v898, 0
        %vm923 = vcmp.ge.s32.totalorder %v899, 0
        %vm924 = vcmp.ge.s32.totalorder %v900, 0
        %vm925 = vcmp.ge.s32.totalorder %v901, 0
        %vm926 = vcmp.ge.s32.totalorder %v902, 0
        %vm927 = vcmp.ge.s32.totalorder %v903, 0
        %vm928 = vcmp.ge.s32.totalorder %v904, 0
        %vm929 = vcmp.le.s32.totalorder %v881, 15
        %vm930 = vcmp.le.s32.totalorder %v882, 15
        %vm931 = vcmp.le.s32.totalorder %v883, 15
        %vm932 = vcmp.le.s32.totalorder %v884, 15
        %vm933 = vcmp.le.s32.totalorder %v885, 15
        %vm934 = vcmp.le.s32.totalorder %v886, 15
        %vm935 = vcmp.le.s32.totalorder %v887, 15
        %vm936 = vcmp.le.s32.totalorder %v888, 15
        %vm937 = vcmp.le.s32.totalorder %v889, 15
        %vm938 = vcmp.le.s32.totalorder %v890, 15
        %vm939 = vcmp.le.s32.totalorder %v891, 15
        %vm940 = vcmp.le.s32.totalorder %v892, 15
        %vm941 = vcmp.le.s32.totalorder %v893, 15
        %vm942 = vcmp.le.s32.totalorder %v894, 15
        %vm943 = vcmp.le.s32.totalorder %v895, 15
        %vm944 = vcmp.le.s32.totalorder %v896, 15
        %vm945 = vcmp.le.s32.totalorder %v897, 15
        %vm946 = vcmp.le.s32.totalorder %v898, 15
        %vm947 = vcmp.le.s32.totalorder %v899, 15
        %vm948 = vcmp.le.s32.totalorder %v900, 15
        %vm949 = vcmp.le.s32.totalorder %v901, 15
        %vm950 = vcmp.le.s32.totalorder %v902, 15
        %vm951 = vcmp.le.s32.totalorder %v903, 15
        %vm952 = vcmp.le.s32.totalorder %v904, 15
        %vm953 = vmand %vm905, %vm929
        %vm954 = vmand %vm906, %vm930
        %vm955 = vmand %vm907, %vm931
        %vm956 = vmand %vm908, %vm932
        %vm957 = vmand %vm909, %vm933
        %vm958 = vmand %vm910, %vm934
        %vm959 = vmand %vm911, %vm935
        %vm960 = vmand %vm912, %vm936
        %vm961 = vmand %vm913, %vm937
        %vm962 = vmand %vm914, %vm938
        %vm963 = vmand %vm915, %vm939
        %vm964 = vmand %vm916, %vm940
        %vm965 = vmand %vm917, %vm941
        %vm966 = vmand %vm918, %vm942
        %vm967 = vmand %vm919, %vm943
        %vm968 = vmand %vm920, %vm944
        %vm969 = vmand %vm921, %vm945
        %vm970 = vmand %vm922, %vm946
        %vm971 = vmand %vm923, %vm947
        %vm972 = vmand %vm924, %vm948
        %vm973 = vmand %vm925, %vm949
        %vm974 = vmand %vm926, %vm950
        %vm975 = vmand %vm927, %vm951
        %vm976 = vmand %vm928, %vm952
        %v977 = vsel %vm953, 1, 0
        %v978 = vsel %vm954, 1, 0
        %v979 = vsel %vm955, 1, 0
        %v980 = vsel %vm956, 1, 0
        %v981 = vsel %vm957, 1, 0
        %v982 = vsel %vm958, 1, 0
        %v983 = vsel %vm959, 1, 0
        %v984 = vsel %vm960, 1, 0
        %v985 = vsel %vm961, 1, 0
        %v986 = vsel %vm962, 1, 0
        %v987 = vsel %vm963, 1, 0
        %v988 = vsel %vm964, 1, 0
        %v989 = vsel %vm965, 1, 0
        %v990 = vsel %vm966, 1, 0
        %v991 = vsel %vm967, 1, 0
        %v992 = vsel %vm968, 1, 0
        %v993 = vsel %vm969, 1, 0
        %v994 = vsel %vm970, 1, 0
        %v995 = vsel %vm971, 1, 0
        %v996 = vsel %vm972, 1, 0
        %v997 = vsel %vm973, 1, 0
        %v998 = vsel %vm974, 1, 0
        %v999 = vsel %vm975, 1, 0
        %v1000 = vsel %vm976, 1, 0
        %1001 = vset.pattern.permute.xlu0 0
        %1002 = vperm.xlu0 %1001, %v977
        %v1003 = vpop.permute.xlu0 %1002
        %1004 = vset.pattern.permute.xlu0 0
        %1005 = vperm.xlu0 %1004, %v978
        %v1006 = vpop.permute.xlu0 %1005
        %1007 = vset.pattern.permute.xlu0 0
        %1008 = vperm.xlu0 %1007, %v979
        %v1009 = vpop.permute.xlu0 %1008
        %1010 = vset.pattern.permute.xlu0 0
        %1011 = vperm.xlu0 %1010, %v980
        %v1012 = vpop.permute.xlu0 %1011
        %1013 = vset.pattern.permute.xlu0 0
        %1014 = vperm.xlu0 %1013, %v981
        %v1015 = vpop.permute.xlu0 %1014
        %1016 = vset.pattern.permute.xlu0 0
        %1017 = vperm.xlu0 %1016, %v982
        %v1018 = vpop.permute.xlu0 %1017
        %1019 = vset.pattern.permute.xlu0 0
        %1020 = vperm.xlu0 %1019, %v983
        %v1021 = vpop.permute.xlu0 %1020
        %1022 = vset.pattern.permute.xlu0 0
        %1023 = vperm.xlu0 %1022, %v984
        %v1024 = vpop.permute.xlu0 %1023
        %1025 = vset.pattern.permute.xlu0 0
        %1026 = vperm.xlu0 %1025, %v985
        %v1027 = vpop.permute.xlu0 %1026
        %1028 = vset.pattern.permute.xlu0 0
        %1029 = vperm.xlu0 %1028, %v986
        %v1030 = vpop.permute.xlu0 %1029
        %1031 = vset.pattern.permute.xlu0 0
        %1032 = vperm.xlu0 %1031, %v987
        %v1033 = vpop.permute.xlu0 %1032
        %1034 = vset.pattern.permute.xlu0 0
        %1035 = vperm.xlu0 %1034, %v988
        %v1036 = vpop.permute.xlu0 %1035
        %1037 = vset.pattern.permute.xlu0 0
        %1038 = vperm.xlu0 %1037, %v989
        %v1039 = vpop.permute.xlu0 %1038
        %1040 = vset.pattern.permute.xlu0 0
        %1041 = vperm.xlu0 %1040, %v990
        %v1042 = vpop.permute.xlu0 %1041
        %1043 = vset.pattern.permute.xlu0 0
        %1044 = vperm.xlu0 %1043, %v991
        %v1045 = vpop.permute.xlu0 %1044
        %1046 = vset.pattern.permute.xlu0 0
        %1047 = vperm.xlu0 %1046, %v992
        %v1048 = vpop.permute.xlu0 %1047
        %1049 = vset.pattern.permute.xlu0 0
        %1050 = vperm.xlu0 %1049, %v993
        %v1051 = vpop.permute.xlu0 %1050
        %1052 = vset.pattern.permute.xlu0 0
        %1053 = vperm.xlu0 %1052, %v994
        %v1054 = vpop.permute.xlu0 %1053
        %1055 = vset.pattern.permute.xlu0 0
        %1056 = vperm.xlu0 %1055, %v995
        %v1057 = vpop.permute.xlu0 %1056
        %1058 = vset.pattern.permute.xlu0 0
        %1059 = vperm.xlu0 %1058, %v996
        %v1060 = vpop.permute.xlu0 %1059
        %1061 = vset.pattern.permute.xlu0 0
        %1062 = vperm.xlu0 %1061, %v997
        %v1063 = vpop.permute.xlu0 %1062
        %1064 = vset.pattern.permute.xlu0 0
        %1065 = vperm.xlu0 %1064, %v998
        %v1066 = vpop.permute.xlu0 %1065
        %1067 = vset.pattern.permute.xlu0 0
        %1068 = vperm.xlu0 %1067, %v999
        %v1069 = vpop.permute.xlu0 %1068
        %1070 = vset.pattern.permute.xlu0 0
        %1071 = vperm.xlu0 %1070, %v1000
        %v1072 = vpop.permute.xlu0 %1071
        %vm1073 = vcmp.eq.s32.totalorder %v1003, 1
        %vm1074 = vcmp.eq.s32.totalorder %v1006, 1
        %vm1075 = vcmp.eq.s32.totalorder %v1009, 1
        %vm1076 = vcmp.eq.s32.totalorder %v1012, 1
        %vm1077 = vcmp.eq.s32.totalorder %v1015, 1
        %vm1078 = vcmp.eq.s32.totalorder %v1018, 1
        %vm1079 = vcmp.eq.s32.totalorder %v1021, 1
        %vm1080 = vcmp.eq.s32.totalorder %v1024, 1
        %vm1081 = vcmp.eq.s32.totalorder %v1027, 1
        %vm1082 = vcmp.eq.s32.totalorder %v1030, 1
        %vm1083 = vcmp.eq.s32.totalorder %v1033, 1
        %vm1084 = vcmp.eq.s32.totalorder %v1036, 1
        %vm1085 = vcmp.eq.s32.totalorder %v1039, 1
        %vm1086 = vcmp.eq.s32.totalorder %v1042, 1
        %vm1087 = vcmp.eq.s32.totalorder %v1045, 1
        %vm1088 = vcmp.eq.s32.totalorder %v1048, 1
        %vm1089 = vcmp.eq.s32.totalorder %v1051, 1
        %vm1090 = vcmp.eq.s32.totalorder %v1054, 1
        %vm1091 = vcmp.eq.s32.totalorder %v1057, 1
        %vm1092 = vcmp.eq.s32.totalorder %v1060, 1
        %vm1093 = vcmp.eq.s32.totalorder %v1063, 1
        %vm1094 = vcmp.eq.s32.totalorder %v1066, 1
        %vm1095 = vcmp.eq.s32.totalorder %v1069, 1
        %vm1096 = vcmp.eq.s32.totalorder %v1072, 1
        %v1097 = vsel %vm1073, %v811, 0.0
        %v1098 = vsel %vm1074, %v813, 0.0
        %v1099 = vsel %vm1075, %v815, 0.0
        %v1100 = vsel %vm1076, %v817, 0.0
        %v1101 = vsel %vm1077, %v819, 0.0
        %v1102 = vsel %vm1078, %v821, 0.0
        %v1103 = vsel %vm1079, %v823, 0.0
        %v1104 = vsel %vm1080, %v825, 0.0
        %v1105 = vsel %vm1081, %v827, 0.0
        %v1106 = vsel %vm1082, %v829, 0.0
        %v1107 = vsel %vm1083, %v831, 0.0
        %v1108 = vsel %vm1084, %v833, 0.0
        %v1109 = vsel %vm1085, %v835, 0.0
        %v1110 = vsel %vm1086, %v837, 0.0
        %v1111 = vsel %vm1087, %v839, 0.0
        %v1112 = vsel %vm1088, %v841, 0.0
        %v1113 = vsel %vm1089, %v843, 0.0
        %v1114 = vsel %vm1090, %v845, 0.0
        %v1115 = vsel %vm1091, %v847, 0.0
        %v1116 = vsel %vm1092, %v849, 0.0
        %v1117 = vsel %vm1093, %v851, 0.0
        %v1118 = vsel %vm1094, %v853, 0.0
        %v1119 = vsel %vm1095, %v855, 0.0
        %v1120 = vsel %vm1096, %v880, 0.0
        %v1121 = vpack.c.bf16 %v1097, %v1097
        %v1122 = vpack.c.bf16 %v1098, %v1098
        %v1123 = vpack.c.bf16 %v1099, %v1099
        %v1124 = vpack.c.bf16 %v1100, %v1100
        %v1125 = vpack.c.bf16 %v1101, %v1101
        %v1126 = vpack.c.bf16 %v1102, %v1102
        %v1127 = vpack.c.bf16 %v1103, %v1103
        %v1128 = vpack.c.bf16 %v1104, %v1104
        %v1129 = vpack.c.bf16 %v1105, %v1105
        %v1130 = vpack.c.bf16 %v1106, %v1106
        %v1131 = vpack.c.bf16 %v1107, %v1107
        %v1132 = vpack.c.bf16 %v1108, %v1108
        %v1133 = vpack.c.bf16 %v1109, %v1109
        %v1134 = vpack.c.bf16 %v1110, %v1110
        %v1135 = vpack.c.bf16 %v1111, %v1111
        %v1136 = vpack.c.bf16 %v1112, %v1112
        %v1137 = vpack.c.bf16 %v1113, %v1113
        %v1138 = vpack.c.bf16 %v1114, %v1114
        %v1139 = vpack.c.bf16 %v1115, %v1115
        %v1140 = vpack.c.bf16 %v1116, %v1116
        %v1141 = vpack.c.bf16 %v1117, %v1117
        %v1142 = vpack.c.bf16 %v1118, %v1118
        %v1143 = vpack.c.bf16 %v1119, %v1119
        %v1144 = vpack.c.bf16 %v1120, %v1120
        %v1165 = vunpack.c.l.b16 %v760
        %v1166 = vunpack.c.l.b16 %v761
        %v1167 = vunpack.c.l.b16 %v762
        %v1168 = vunpack.c.l.b16 %v763
        %v1169 = vunpack.c.l.b16 %v764
        %v1170 = vunpack.c.l.b16 %v765
        %v1171 = vunpack.c.l.b16 %v766
        %v1172 = vunpack.c.l.b16 %v767
        %v1173 = vunpack.c.l.b16 %v768
        %v1174 = vunpack.c.l.b16 %v769
        %v1175 = vunpack.c.l.b16 %v770
        %v1176 = vunpack.c.l.b16 %v771
        %v1177 = vunpack.c.l.b16 %v772
        %v1178 = vunpack.c.l.b16 %v773
        %v1179 = vunpack.c.l.b16 %v774
        %v1180 = vunpack.c.l.b16 %v775
        %v1181 = vunpack.c.l.b16 %v776
        %v1182 = vunpack.c.l.b16 %v777
        %v1183 = vunpack.c.l.b16 %v778
        %v1184 = vunpack.c.l.b16 %v779
        %v1185 = vpack.c.b16 %v1166, %v1165
        %v1186 = vpack.c.b16 %v1168, %v1167
        %v1187 = vpack.c.b16 %v1170, %v1169
        %v1188 = vpack.c.b16 %v1172, %v1171
        %v1189 = vpack.c.b16 %v1174, %v1173
        %v1190 = vpack.c.b16 %v1176, %v1175
        %v1191 = vpack.c.b16 %v1178, %v1177
        %v1192 = vpack.c.b16 %v1180, %v1179
        %v1193 = vpack.c.b16 %v1182, %v1181
        %v1194 = vpack.c.b16 %v1184, %v1183
        %v1225 = vunpack.c.l.b16 %v784
        %v1226 = vunpack.c.l.b16 %v785
        %v1227 = vunpack.c.l.b16 %v786
        %v1228 = vunpack.c.l.b16 %v787
        %v1229 = vunpack.c.l.b16 %v788
        %v1230 = vunpack.c.l.b16 %v789
        %v1231 = vunpack.c.l.b16 %v790
        %v1232 = vunpack.c.l.b16 %v791
        %v1233 = vunpack.c.l.b16 %v792
        %v1234 = vunpack.c.l.b16 %v793
        %v1235 = vunpack.c.l.b16 %v794
        %v1236 = vunpack.c.l.b16 %v795
        %v1237 = vunpack.c.l.b16 %v796
        %v1238 = vunpack.c.l.b16 %v797
        %v1239 = vunpack.c.l.b16 %v798
        %v1240 = vunpack.c.l.b16 %v799
        %v1241 = vunpack.c.l.b16 %v800
        %v1242 = vunpack.c.l.b16 %v801
        %v1243 = vunpack.c.l.b16 %v802
        %v1244 = vunpack.c.l.b16 %v803
        %v1245 = vpack.c.b16 %v1226, %v1225
        %v1246 = vpack.c.b16 %v1228, %v1227
        %v1247 = vpack.c.b16 %v1230, %v1229
        %v1248 = vpack.c.b16 %v1232, %v1231
        %v1249 = vpack.c.b16 %v1234, %v1233
        %v1250 = vpack.c.b16 %v1236, %v1235
        %v1251 = vpack.c.b16 %v1238, %v1237
        %v1252 = vpack.c.b16 %v1240, %v1239
        %v1253 = vpack.c.b16 %v1242, %v1241
        %v1254 = vpack.c.b16 %v1244, %v1243
        %v1285 = vunpack.c.l.b16 %v1121
        %v1286 = vunpack.c.l.b16 %v1122
        %v1287 = vunpack.c.l.b16 %v1123
        %v1288 = vunpack.c.l.b16 %v1124
        %v1289 = vunpack.c.l.b16 %v1125
        %v1290 = vunpack.c.l.b16 %v1126
        %v1291 = vunpack.c.l.b16 %v1127
        %v1292 = vunpack.c.l.b16 %v1128
        %v1293 = vunpack.c.l.b16 %v1129
        %v1294 = vunpack.c.l.b16 %v1130
        %v1295 = vunpack.c.l.b16 %v1131
        %v1296 = vunpack.c.l.b16 %v1132
        %v1297 = vunpack.c.l.b16 %v1133
        %v1298 = vunpack.c.l.b16 %v1134
        %v1299 = vunpack.c.l.b16 %v1135
        %v1300 = vunpack.c.l.b16 %v1136
        %v1301 = vunpack.c.l.b16 %v1137
        %v1302 = vunpack.c.l.b16 %v1138
        %v1303 = vunpack.c.l.b16 %v1139
        %v1304 = vunpack.c.l.b16 %v1140
        %v1305 = vpack.c.b16 %v1286, %v1285
        %v1306 = vpack.c.b16 %v1288, %v1287
        %v1307 = vpack.c.b16 %v1290, %v1289
        %v1308 = vpack.c.b16 %v1292, %v1291
        %v1309 = vpack.c.b16 %v1294, %v1293
        %v1310 = vpack.c.b16 %v1296, %v1295
        %v1311 = vpack.c.b16 %v1298, %v1297
        %v1312 = vpack.c.b16 %v1300, %v1299
        %v1313 = vpack.c.b16 %v1302, %v1301
        %v1314 = vpack.c.b16 %v1304, %v1303
        %v1327 = vunpack.c.l.b16 %v780
        %v1328 = vunpack.c.l.b16 %v781
        %v1329 = vpack.c.b16 %v1328, %v1327
        %v1333 = vunpack.c.l.b16 %v804
        %v1334 = vunpack.c.l.b16 %v805
        %v1335 = vpack.c.b16 %v1334, %v1333
        %v1339 = vunpack.c.l.b16 %v1141
        %v1340 = vunpack.c.l.b16 %v1142
        %v1341 = vpack.c.b16 %v1340, %v1339
        %v1345 = vunpack.c.l.b16 %v782
        %v1346 = vunpack.c.l.b16 %v783
        %v1347 = vpack.c.b16 %v1346, %v1345
        %v1351 = vunpack.c.l.b16 %v806
        %v1352 = vunpack.c.l.b16 %v807
        %v1353 = vpack.c.b16 %v1352, %v1351
        %v1357 = vunpack.c.l.b16 %v1143
        %v1358 = vunpack.c.l.b16 %v1144
        %v1359 = vpack.c.b16 %v1358, %v1357
        %v1361 = vld [vmem:[#allocation5] sm:$0xf]
        %v1362 = vld [vmem:[#allocation5 + $0x4] sm:$0xf]
        %v1363 = vld [vmem:[#allocation5 + $0x8] sm:$0xf]
        %v1364 = vld [vmem:[#allocation5 + $0xc] sm:$0xf]
        %v1365 = vld [vmem:[#allocation5 + $0x10] sm:$0xf]
        %v1366 = vld [vmem:[#allocation5 + $0x14] sm:$0xf]
        %v1367 = vld [vmem:[#allocation5 + $0x18] sm:$0xf]
        %v1368 = vld [vmem:[#allocation5 + $0x1c] sm:$0xf]
        %v1369 = vld [vmem:[#allocation5 + $0x20] sm:$0xf]
        %v1370 = vld [vmem:[#allocation5 + $0x24] sm:$0xf]
        %v1371 = vld [vmem:[#allocation5 + $0x28] sm:$0xf]
        %v1372 = vld [vmem:[#allocation5 + $0x2c] sm:$0xf]
        %v1373 = vld [vmem:[#allocation5 + $0x30] sm:$0xf]
        %v1374 = vld [vmem:[#allocation5 + $0x34] sm:$0xf]
        %v1375 = vld [vmem:[#allocation5 + $0x38] sm:$0xf]
        %v1376 = vld [vmem:[#allocation5 + $0x3c] sm:$0xf]
        %v1377 = vld [vmem:[#allocation5 + $0x40] sm:$0xf]
        %v1378 = vld [vmem:[#allocation5 + $0x44] sm:$0xf]
        %v1379 = vld [vmem:[#allocation5 + $0x48] sm:$0xf]
        %v1380 = vld [vmem:[#allocation5 + $0x4c] sm:$0xf]
        %v1381 = vld [vmem:[#allocation5 + $0x50] sm:$0xf]
        %v1382 = vld [vmem:[#allocation5 + $0x54] sm:$0xf]
        %v1383 = vld [vmem:[#allocation5 + $0x58] sm:$0xf]
        %v1384 = vld [vmem:[#allocation5 + $0x5c] sm:$0xf]
        %v1385 = vld [vmem:[#allocation5 + $0x60] sm:$0xf]
        %v1386 = vld [vmem:[#allocation5 + $0x64] sm:$0xf]
        %v1387 = vld [vmem:[#allocation5 + $0x68] sm:$0xf]
        %v1388 = vld [vmem:[#allocation5 + $0x6c] sm:$0xf]
        %v1389 = vld [vmem:[#allocation5 + $0x70] sm:$0xf]
        %v1390 = vld [vmem:[#allocation5 + $0x74] sm:$0xf]
        %v1391 = vld [vmem:[#allocation5 + $0x78] sm:$0xf]
        %v1392 = vld [vmem:[#allocation5 + $0x7c] sm:$0xf]
        %v1393 = vld [vmem:[#allocation5 + $0x80] sm:$0xf]
        %v1394 = vld [vmem:[#allocation5 + $0x84] sm:$0xf]
        %v1395 = vld [vmem:[#allocation5 + $0x88] sm:$0xf]
        %v1396 = vld [vmem:[#allocation5 + $0x8c] sm:$0xf]
        %v1397 = vld [vmem:[#allocation5 + $0x90] sm:$0xf]
        %v1398 = vld [vmem:[#allocation5 + $0x94] sm:$0xf]
        %v1399 = vld [vmem:[#allocation5 + $0x98] sm:$0xf]
        %v1400 = vld [vmem:[#allocation5 + $0x9c] sm:$0xf]
        %v1401 = vld [vmem:[#allocation5 + $0xa0] sm:$0xf]
        %v1402 = vld [vmem:[#allocation5 + $0xa4] sm:$0xf]
        %v1403 = vld [vmem:[#allocation5 + $0xa8] sm:$0xf]
        %v1404 = vld [vmem:[#allocation5 + $0xac] sm:$0xf]
        %v1405 = vld [vmem:[#allocation5 + $0xb0] sm:$0xf]
        %v1406 = vld [vmem:[#allocation5 + $0xb4] sm:$0xf]
        %v1407 = vld [vmem:[#allocation5 + $0xb8] sm:$0xf]
        %v1408 = vld [vmem:[#allocation5 + $0xbc] sm:$0xf]
        %v1409 = vld [vmem:[#allocation5 + $0xc0] sm:$0xf]
        %v1410 = vld [vmem:[#allocation5 + $0xc4] sm:$0xf]
        %v1411 = vld [vmem:[#allocation5 + $0xc8] sm:$0xf]
        %v1412 = vld [vmem:[#allocation5 + $0xcc] sm:$0xf]
        %v1413 = vld [vmem:[#allocation5 + $0xd0] sm:$0xf]
        %v1414 = vld [vmem:[#allocation5 + $0xd4] sm:$0xf]
        %v1415 = vld [vmem:[#allocation5 + $0xd8] sm:$0xf]
        %v1416 = vld [vmem:[#allocation5 + $0xdc] sm:$0xf]
        %v1417 = vld [vmem:[#allocation5 + $0xe0] sm:$0xf]
        %v1418 = vld [vmem:[#allocation5 + $0xe4] sm:$0xf]
        %v1419 = vld [vmem:[#allocation5 + $0xe8] sm:$0xf]
        %v1420 = vld [vmem:[#allocation5 + $0xec] sm:$0xf]
        %v1421 = vld [vmem:[#allocation5 + $0xf0] sm:$0xf]
        %v1422 = vld [vmem:[#allocation5 + $0xf4] sm:$0xf]
        %v1423 = vld [vmem:[#allocation5 + $0xf8] sm:$0xf]
        %v1424 = vld [vmem:[#allocation5 + $0xfc] sm:$0xf]
        %v1425 = vld [vmem:[#allocation5 + $0x100] sm:$0xf]
        %v1426 = vld [vmem:[#allocation5 + $0x104] sm:$0xf]
        %v1427 = vld [vmem:[#allocation5 + $0x108] sm:$0xf]
        %v1428 = vld [vmem:[#allocation5 + $0x10c] sm:$0xf]
        %v1429 = vld [vmem:[#allocation5 + $0x110] sm:$0xf]
        %v1430 = vld [vmem:[#allocation5 + $0x114] sm:$0xf]
        %v1431 = vld [vmem:[#allocation5 + $0x118] sm:$0xf]
        %v1432 = vld [vmem:[#allocation5 + $0x11c] sm:$0xf]
        %v1433 = vld [vmem:[#allocation5 + $0x120] sm:$0xf]
        %v1434 = vld [vmem:[#allocation5 + $0x124] sm:$0xf]
        %v1435 = vld [vmem:[#allocation5 + $0x128] sm:$0xf]
        %v1436 = vld [vmem:[#allocation5 + $0x12c] sm:$0xf]
        %v1437 = vld [vmem:[#allocation5 + $0x130] sm:$0xf]
        %v1438 = vld [vmem:[#allocation5 + $0x134] sm:$0xf]
        %v1439 = vld [vmem:[#allocation5 + $0x138] sm:$0xf]
        %v1440 = vld [vmem:[#allocation5 + $0x13c] sm:$0xf]
        %v1441 = vld [vmem:[#allocation5 + $0x140] sm:$0xf]
        %v1442 = vld [vmem:[#allocation5 + $0x144] sm:$0xf]
        %v1443 = vld [vmem:[#allocation5 + $0x148] sm:$0xf]
        %v1444 = vld [vmem:[#allocation5 + $0x14c] sm:$0xf]
        %v1445 = vld [vmem:[#allocation5 + $0x150] sm:$0xf]
        %v1446 = vld [vmem:[#allocation5 + $0x154] sm:$0xf]
        %v1447 = vld [vmem:[#allocation5 + $0x158] sm:$0xf]
        %v1448 = vld [vmem:[#allocation5 + $0x15c] sm:$0xf]
        %v1449 = vld [vmem:[#allocation5 + $0x160] sm:$0xf]
        %v1450 = vld [vmem:[#allocation5 + $0x164] sm:$0xf]
        %v1451 = vld [vmem:[#allocation5 + $0x168] sm:$0xf]
        %v1452 = vld [vmem:[#allocation5 + $0x16c] sm:$0xf]
        %v1453 = vld [vmem:[#allocation5 + $0x170] sm:$0xf]
        %v1454 = vld [vmem:[#allocation5 + $0x174] sm:$0xf]
        %v1455 = vld [vmem:[#allocation5 + $0x178] sm:$0xf]
        %v1456 = vld [vmem:[#allocation5 + $0x17c] sm:$0xf]
        %v1457 = vld [vmem:[#allocation5 + $0x180] sm:$0xf]
        %v1458 = vld [vmem:[#allocation5 + $0x184] sm:$0xf]
        %v1459 = vld [vmem:[#allocation5 + $0x188] sm:$0xf]
        %v1460 = vld [vmem:[#allocation5 + $0x18c] sm:$0xf]
        %v1461 = vld [vmem:[#allocation5 + $0x190] sm:$0xf]
        %v1462 = vld [vmem:[#allocation5 + $0x194] sm:$0xf]
        %v1463 = vld [vmem:[#allocation5 + $0x198] sm:$0xf]
        %v1464 = vld [vmem:[#allocation5 + $0x19c] sm:$0xf]
        %v1465 = vld [vmem:[#allocation5 + $0x1a0] sm:$0xf]
        %v1466 = vld [vmem:[#allocation5 + $0x1a4] sm:$0xf]
        %v1467 = vld [vmem:[#allocation5 + $0x1a8] sm:$0xf]
        %v1468 = vld [vmem:[#allocation5 + $0x1ac] sm:$0xf]
        %v1469 = vld [vmem:[#allocation5 + $0x1b0] sm:$0xf]
        %v1470 = vld [vmem:[#allocation5 + $0x1b4] sm:$0xf]
        %v1471 = vld [vmem:[#allocation5 + $0x1b8] sm:$0xf]
        %v1472 = vld [vmem:[#allocation5 + $0x1bc] sm:$0xf]
        %v1473 = vld [vmem:[#allocation5 + $0x1c0] sm:$0xf]
        %v1474 = vld [vmem:[#allocation5 + $0x1c4] sm:$0xf]
        %v1475 = vld [vmem:[#allocation5 + $0x1c8] sm:$0xf]
        %v1476 = vld [vmem:[#allocation5 + $0x1cc] sm:$0xf]
        %v1477 = vld [vmem:[#allocation5 + $0x1d0] sm:$0xf]
        %v1478 = vld [vmem:[#allocation5 + $0x1d4] sm:$0xf]
        %v1479 = vld [vmem:[#allocation5 + $0x1d8] sm:$0xf]
        %v1480 = vld [vmem:[#allocation5 + $0x1dc] sm:$0xf]
        %v1481 = vld [vmem:[#allocation5 + $0x1e0] sm:$0xf]
        %v1482 = vld [vmem:[#allocation5 + $0x1e4] sm:$0xf]
        %v1483 = vld [vmem:[#allocation5 + $0x1e8] sm:$0xf]
        %v1484 = vld [vmem:[#allocation5 + $0x1ec] sm:$0xf]
        %v1485 = vld [vmem:[#allocation5 + $0x1f0] sm:$0xf]
        %v1486 = vld [vmem:[#allocation5 + $0x1f4] sm:$0xf]
        %v1487 = vld [vmem:[#allocation5 + $0x1f8] sm:$0xf]
        %v1488 = vld [vmem:[#allocation5 + $0x1fc] sm:$0xf]
        %v1489 = vld [vmem:[#allocation5 + $0x200] sm:$0xf]
        %v1490 = vld [vmem:[#allocation5 + $0x204] sm:$0xf]
        %v1491 = vld [vmem:[#allocation5 + $0x208] sm:$0xf]
        %v1492 = vld [vmem:[#allocation5 + $0x20c] sm:$0xf]
        %v1493 = vld [vmem:[#allocation5 + $0x210] sm:$0xf]
        %v1494 = vld [vmem:[#allocation5 + $0x214] sm:$0xf]
        %v1495 = vld [vmem:[#allocation5 + $0x218] sm:$0xf]
        %v1496 = vld [vmem:[#allocation5 + $0x21c] sm:$0xf]
        %v1497 = vld [vmem:[#allocation5 + $0x220] sm:$0xf]
        %v1498 = vld [vmem:[#allocation5 + $0x224] sm:$0xf]
        %v1499 = vld [vmem:[#allocation5 + $0x228] sm:$0xf]
        %v1500 = vld [vmem:[#allocation5 + $0x22c] sm:$0xf]
        %v1501 = vld [vmem:[#allocation5 + $0x230] sm:$0xf]
        %v1502 = vld [vmem:[#allocation5 + $0x234] sm:$0xf]
        %v1503 = vld [vmem:[#allocation5 + $0x238] sm:$0xf]
        %v1504 = vld [vmem:[#allocation5 + $0x23c] sm:$0xf]
        %v1505 = vld [vmem:[%s2] sm:$0x1]
        %v1507 = vperm.slane %v1505, 0
        %v1653 = vunpack.c.l.b16 %v1361
        %v1654 = vunpack.c.l.b16 %v1362
        %v1655 = vunpack.c.l.b16 %v1363
        %v1656 = vunpack.c.l.b16 %v1364
        %v1657 = vunpack.c.l.b16 %v1365
        %v1658 = vunpack.c.l.b16 %v1366
        %v1659 = vunpack.c.l.b16 %v1367
        %v1660 = vunpack.c.l.b16 %v1368
        %v1661 = vunpack.c.l.b16 %v1369
        %v1662 = vunpack.c.l.b16 %v1370
        %v1663 = vunpack.c.l.b16 %v1371
        %v1664 = vunpack.c.l.b16 %v1372
        %v1665 = vunpack.c.l.b16 %v1373
        %v1666 = vunpack.c.l.b16 %v1374
        %v1667 = vunpack.c.l.b16 %v1375
        %v1668 = vunpack.c.l.b16 %v1376
        %v1669 = vunpack.c.l.b16 %v1377
        %v1670 = vunpack.c.l.b16 %v1378
        %v1671 = vunpack.c.l.b16 %v1379
        %v1672 = vunpack.c.l.b16 %v1380
        %v1673 = vunpack.c.l.b16 %v1381
        %v1674 = vunpack.c.l.b16 %v1382
        %v1675 = vunpack.c.l.b16 %v1383
        %v1676 = vunpack.c.l.b16 %v1384
        %v1677 = vunpack.c.l.b16 %v1385
        %v1678 = vunpack.c.l.b16 %v1386
        %v1679 = vunpack.c.l.b16 %v1387
        %v1680 = vunpack.c.l.b16 %v1388
        %v1681 = vunpack.c.l.b16 %v1389
        %v1682 = vunpack.c.l.b16 %v1390
        %v1683 = vunpack.c.l.b16 %v1391
        %v1684 = vunpack.c.l.b16 %v1392
        %v1685 = vunpack.c.l.b16 %v1393
        %v1686 = vunpack.c.l.b16 %v1394
        %v1687 = vunpack.c.l.b16 %v1395
        %v1688 = vunpack.c.l.b16 %v1396
        %v1689 = vunpack.c.l.b16 %v1397
        %v1690 = vunpack.c.l.b16 %v1398
        %v1691 = vunpack.c.l.b16 %v1399
        %v1692 = vunpack.c.l.b16 %v1400
        %v1693 = vunpack.c.l.b16 %v1401
        %v1694 = vunpack.c.l.b16 %v1402
        %v1695 = vunpack.c.l.b16 %v1403
        %v1696 = vunpack.c.l.b16 %v1404
        %v1697 = vunpack.c.l.b16 %v1405
        %v1698 = vunpack.c.l.b16 %v1406
        %v1699 = vunpack.c.l.b16 %v1407
        %v1700 = vunpack.c.l.b16 %v1408
        %v1701 = vunpack.c.l.b16 %v1409
        %v1702 = vunpack.c.l.b16 %v1410
        %v1703 = vunpack.c.l.b16 %v1411
        %v1704 = vunpack.c.l.b16 %v1412
        %v1705 = vunpack.c.l.b16 %v1413
        %v1706 = vunpack.c.l.b16 %v1414
        %v1707 = vunpack.c.l.b16 %v1415
        %v1708 = vunpack.c.l.b16 %v1416
        %v1709 = vunpack.c.l.b16 %v1417
        %v1710 = vunpack.c.l.b16 %v1418
        %v1711 = vunpack.c.l.b16 %v1419
        %v1712 = vunpack.c.l.b16 %v1420
        %v1713 = vunpack.c.l.b16 %v1421
        %v1714 = vunpack.c.l.b16 %v1422
        %v1715 = vunpack.c.l.b16 %v1423
        %v1716 = vunpack.c.l.b16 %v1424
        %v1717 = vunpack.c.l.b16 %v1425
        %v1718 = vunpack.c.l.b16 %v1426
        %v1719 = vunpack.c.l.b16 %v1427
        %v1720 = vunpack.c.l.b16 %v1428
        %v1721 = vunpack.c.l.b16 %v1429
        %v1722 = vunpack.c.l.b16 %v1430
        %v1723 = vunpack.c.l.b16 %v1431
        %v1724 = vunpack.c.l.b16 %v1432
        %v1725 = vunpack.c.l.b16 %v1433
        %v1726 = vunpack.c.l.b16 %v1434
        %v1727 = vunpack.c.l.b16 %v1435
        %v1728 = vunpack.c.l.b16 %v1436
        %v1729 = vunpack.c.l.b16 %v1437
        %v1730 = vunpack.c.l.b16 %v1438
        %v1731 = vunpack.c.l.b16 %v1439
        %v1732 = vunpack.c.l.b16 %v1440
        %v1733 = vunpack.c.l.b16 %v1441
        %v1734 = vunpack.c.l.b16 %v1442
        %v1735 = vunpack.c.l.b16 %v1443
        %v1736 = vunpack.c.l.b16 %v1444
        %v1737 = vunpack.c.l.b16 %v1445
        %v1738 = vunpack.c.l.b16 %v1446
        %v1739 = vunpack.c.l.b16 %v1447
        %v1740 = vunpack.c.l.b16 %v1448
        %v1741 = vunpack.c.l.b16 %v1449
        %v1742 = vunpack.c.l.b16 %v1450
        %v1743 = vunpack.c.l.b16 %v1451
        %v1744 = vunpack.c.l.b16 %v1452
        %v1745 = vunpack.c.l.b16 %v1453
        %v1746 = vunpack.c.l.b16 %v1454
        %v1747 = vunpack.c.l.b16 %v1455
        %v1748 = vunpack.c.l.b16 %v1456
        %v1749 = vunpack.c.l.b16 %v1457
        %v1750 = vunpack.c.l.b16 %v1458
        %v1751 = vunpack.c.l.b16 %v1459
        %v1752 = vunpack.c.l.b16 %v1460
        %v1753 = vunpack.c.l.b16 %v1461
        %v1754 = vunpack.c.l.b16 %v1462
        %v1755 = vunpack.c.l.b16 %v1463
        %v1756 = vunpack.c.l.b16 %v1464
        %v1757 = vunpack.c.l.b16 %v1465
        %v1758 = vunpack.c.l.b16 %v1466
        %v1759 = vunpack.c.l.b16 %v1467
        %v1760 = vunpack.c.l.b16 %v1468
        %v1761 = vunpack.c.l.b16 %v1469
        %v1762 = vunpack.c.l.b16 %v1470
        %v1763 = vunpack.c.l.b16 %v1471
        %v1764 = vunpack.c.l.b16 %v1472
        %v1765 = vunpack.c.l.b16 %v1473
        %v1766 = vunpack.c.l.b16 %v1474
        %v1767 = vunpack.c.l.b16 %v1475
        %v1768 = vunpack.c.l.b16 %v1476
        %v1769 = vunpack.c.l.b16 %v1477
        %v1770 = vunpack.c.l.b16 %v1478
        %v1771 = vunpack.c.l.b16 %v1479
        %v1772 = vunpack.c.l.b16 %v1480
        %v1773 = vunpack.c.l.b16 %v1481
        %v1774 = vunpack.c.l.b16 %v1482
        %v1775 = vunpack.c.l.b16 %v1483
        %v1776 = vunpack.c.l.b16 %v1484
        %v1777 = vunpack.c.l.b16 %v1485
        %v1778 = vunpack.c.l.b16 %v1486
        %v1779 = vunpack.c.l.b16 %v1487
        %v1780 = vunpack.c.l.b16 %v1488
        %v1781 = vunpack.c.l.b16 %v1489
        %v1782 = vunpack.c.l.b16 %v1490
        %v1783 = vunpack.c.l.b16 %v1491
        %v1784 = vunpack.c.l.b16 %v1492
        %v1785 = vunpack.c.l.b16 %v1493
        %v1786 = vunpack.c.l.b16 %v1494
        %v1787 = vunpack.c.l.b16 %v1495
        %v1788 = vunpack.c.l.b16 %v1496
        %v1789 = vunpack.c.l.b16 %v1497
        %v1790 = vunpack.c.l.b16 %v1498
        %v1791 = vunpack.c.l.b16 %v1499
        %v1792 = vunpack.c.l.b16 %v1500
        %v1793 = vunpack.c.l.b16 %v1501
        %v1794 = vunpack.c.l.b16 %v1502
        %v1795 = vunpack.c.l.b16 %v1503
        %v1796 = vunpack.c.l.b16 %v1504
        %v1797 = vpack.c.b16 %v1654, %v1653
        %v1798 = vpack.c.b16 %v1656, %v1655
        %v1799 = vpack.c.b16 %v1658, %v1657
        %v1800 = vpack.c.b16 %v1660, %v1659
        %v1801 = vpack.c.b16 %v1662, %v1661
        %v1802 = vpack.c.b16 %v1664, %v1663
        %v1803 = vpack.c.b16 %v1666, %v1665
        %v1804 = vpack.c.b16 %v1668, %v1667
        %v1805 = vpack.c.b16 %v1670, %v1669
        %v1806 = vpack.c.b16 %v1672, %v1671
        %v1807 = vpack.c.b16 %v1674, %v1673
        %v1808 = vpack.c.b16 %v1676, %v1675
        %v1809 = vpack.c.b16 %v1678, %v1677
        %v1810 = vpack.c.b16 %v1680, %v1679
        %v1811 = vpack.c.b16 %v1682, %v1681
        %v1812 = vpack.c.b16 %v1684, %v1683
        %v1813 = vpack.c.b16 %v1686, %v1685
        %v1814 = vpack.c.b16 %v1688, %v1687
        %v1815 = vpack.c.b16 %v1690, %v1689
        %v1816 = vpack.c.b16 %v1692, %v1691
        %v1817 = vpack.c.b16 %v1694, %v1693
        %v1818 = vpack.c.b16 %v1696, %v1695
        %v1819 = vpack.c.b16 %v1698, %v1697
        %v1820 = vpack.c.b16 %v1700, %v1699
        %v1821 = vpack.c.b16 %v1702, %v1701
        %v1822 = vpack.c.b16 %v1704, %v1703
        %v1823 = vpack.c.b16 %v1706, %v1705
        %v1824 = vpack.c.b16 %v1708, %v1707
        %v1825 = vpack.c.b16 %v1710, %v1709
        %v1826 = vpack.c.b16 %v1712, %v1711
        %v1827 = vpack.c.b16 %v1714, %v1713
        %v1828 = vpack.c.b16 %v1716, %v1715
        %v1829 = vpack.c.b16 %v1718, %v1717
        %v1830 = vpack.c.b16 %v1720, %v1719
        %v1831 = vpack.c.b16 %v1722, %v1721
        %v1832 = vpack.c.b16 %v1724, %v1723
        %v1833 = vpack.c.b16 %v1726, %v1725
        %v1834 = vpack.c.b16 %v1728, %v1727
        %v1835 = vpack.c.b16 %v1730, %v1729
        %v1836 = vpack.c.b16 %v1732, %v1731
        %v1837 = vpack.c.b16 %v1734, %v1733
        %v1838 = vpack.c.b16 %v1736, %v1735
        %v1839 = vpack.c.b16 %v1738, %v1737
        %v1840 = vpack.c.b16 %v1740, %v1739
        %v1841 = vpack.c.b16 %v1742, %v1741
        %v1842 = vpack.c.b16 %v1744, %v1743
        %v1843 = vpack.c.b16 %v1746, %v1745
        %v1844 = vpack.c.b16 %v1748, %v1747
        %v1845 = vpack.c.b16 %v1750, %v1749
        %v1846 = vpack.c.b16 %v1752, %v1751
        %v1847 = vpack.c.b16 %v1754, %v1753
        %v1848 = vpack.c.b16 %v1756, %v1755
        %v1849 = vpack.c.b16 %v1758, %v1757
        %v1850 = vpack.c.b16 %v1760, %v1759
        %v1851 = vpack.c.b16 %v1762, %v1761
        %v1852 = vpack.c.b16 %v1764, %v1763
        %v1853 = vpack.c.b16 %v1766, %v1765
        %v1854 = vpack.c.b16 %v1768, %v1767
        %v1855 = vpack.c.b16 %v1770, %v1769
        %v1856 = vpack.c.b16 %v1772, %v1771
        %v1857 = vpack.c.b16 %v1774, %v1773
        %v1858 = vpack.c.b16 %v1776, %v1775
        %v1859 = vpack.c.b16 %v1778, %v1777
        %v1860 = vpack.c.b16 %v1780, %v1779
        %v1861 = vpack.c.b16 %v1782, %v1781
        %v1862 = vpack.c.b16 %v1784, %v1783
        %v1863 = vpack.c.b16 %v1786, %v1785
        %v1864 = vpack.c.b16 %v1788, %v1787
        %v1865 = vpack.c.b16 %v1790, %v1789
        %v1866 = vpack.c.b16 %v1792, %v1791
        %v1867 = vpack.c.b16 %v1794, %v1793
        %v1868 = vpack.c.b16 %v1796, %v1795
        %1941 = vmatpush.bf16.msra.mxu0 %v1804
        %1942 = vmatpush.bf16.msra.mxu0 %v1803
        %1943 = vmatpush.bf16.msra.mxu0 %v1802
        %1944 = vmatpush.bf16.msra.mxu0 %v1801
        %1945 = vmatpush.bf16.msra.mxu0 %v1800
        %1946 = vmatpush.bf16.msra.mxu0 %v1799
        %1947 = vmatpush.bf16.msra.mxu0 %v1798
        %1948 = vmatpush.bf16.msra.mxu0 %v1797
        %1949 = vmatmul.bf16.gmra.mxu0 %v1185
        %v1950 = vpop.f32.mrf.mxu0
        %v1951 = vadd.f32 %v1507, %v1950
        %v1952 = vpop.f32.mrf.mxu0
        %v1953 = vadd.f32 %v1507, %v1952
        %1954 = vmatmul.bf16.gmra.mxu0 %v1186
        %v1955 = vpop.f32.mrf.mxu0
        %v1956 = vadd.f32 %v1507, %v1955
        %v1957 = vpop.f32.mrf.mxu0
        %v1958 = vadd.f32 %v1507, %v1957
        %1959 = vmatmul.bf16.gmra.mxu0 %v1187
        %v1960 = vpop.f32.mrf.mxu0
        %v1961 = vadd.f32 %v1507, %v1960
        %v1962 = vpop.f32.mrf.mxu0
        %v1963 = vadd.f32 %v1507, %v1962
        %1964 = vmatmul.bf16.gmra.mxu0 %v1188
        %v1965 = vpop.f32.mrf.mxu0
        %v1966 = vadd.f32 %v1507, %v1965
        %v1967 = vpop.f32.mrf.mxu0
        %v1968 = vadd.f32 %v1507, %v1967
        %1969 = vmatmul.bf16.gmra.mxu0 %v1189
        %v1970 = vpop.f32.mrf.mxu0
        %v1971 = vadd.f32 %v1507, %v1970
        %v1972 = vpop.f32.mrf.mxu0
        %v1973 = vadd.f32 %v1507, %v1972
        %1974 = vmatmul.bf16.gmra.mxu0 %v1190
        %v1975 = vpop.f32.mrf.mxu0
        %v1976 = vadd.f32 %v1507, %v1975
        %v1977 = vpop.f32.mrf.mxu0
        %v1978 = vadd.f32 %v1507, %v1977
        %1979 = vmatmul.bf16.gmra.mxu0 %v1191
        %v1980 = vpop.f32.mrf.mxu0
        %v1981 = vadd.f32 %v1507, %v1980
        %v1982 = vpop.f32.mrf.mxu0
        %v1983 = vadd.f32 %v1507, %v1982
        %1984 = vmatmul.bf16.gmra.mxu0 %v1192
        %v1985 = vpop.f32.mrf.mxu0
        %v1986 = vadd.f32 %v1507, %v1985
        %v1987 = vpop.f32.mrf.mxu0
        %v1988 = vadd.f32 %v1507, %v1987
        %1989 = vmatmul.bf16.gmra.mxu0 %v1193
        %v1990 = vpop.f32.mrf.mxu0
        %v1991 = vadd.f32 %v1507, %v1990
        %v1992 = vpop.f32.mrf.mxu0
        %v1993 = vadd.f32 %v1507, %v1992
        %1994 = vmatmul.bf16.gmra.mxu0 %v1194
        %v1995 = vpop.f32.mrf.mxu0
        %v1996 = vadd.f32 %v1507, %v1995
        %v1997 = vpop.f32.mrf.mxu0
        %v1998 = vadd.f32 %v1507, %v1997
        %1999 = vdwg.mxu0
        %2000 = vmatpush.bf16.msra.mxu0 %v1812
        %2001 = vmatpush.bf16.msra.mxu0 %v1811
        %2002 = vmatpush.bf16.msra.mxu0 %v1810
        %2003 = vmatpush.bf16.msra.mxu0 %v1809
        %2004 = vmatpush.bf16.msra.mxu0 %v1808
        %2005 = vmatpush.bf16.msra.mxu0 %v1807
        %2006 = vmatpush.bf16.msra.mxu0 %v1806
        %2007 = vmatpush.bf16.msra.mxu0 %v1805
        %2008 = vmatmul.bf16.gmra.mxu0 %v1245
        %v2009 = vpop.f32.mrf.mxu0
        %v2010 = vadd.f32 %v1951, %v2009
        %v2011 = vpop.f32.mrf.mxu0
        %v2012 = vadd.f32 %v1953, %v2011
        %2013 = vmatmul.bf16.gmra.mxu0 %v1246
        %v2014 = vpop.f32.mrf.mxu0
        %v2015 = vadd.f32 %v1956, %v2014
        %v2016 = vpop.f32.mrf.mxu0
        %v2017 = vadd.f32 %v1958, %v2016
        %2018 = vmatmul.bf16.gmra.mxu0 %v1247
        %v2019 = vpop.f32.mrf.mxu0
        %v2020 = vadd.f32 %v1961, %v2019
        %v2021 = vpop.f32.mrf.mxu0
        %v2022 = vadd.f32 %v1963, %v2021
        %2023 = vmatmul.bf16.gmra.mxu0 %v1248
        %v2024 = vpop.f32.mrf.mxu0
        %v2025 = vadd.f32 %v1966, %v2024
        %v2026 = vpop.f32.mrf.mxu0
        %v2027 = vadd.f32 %v1968, %v2026
        %2028 = vmatmul.bf16.gmra.mxu0 %v1249
        %v2029 = vpop.f32.mrf.mxu0
        %v2030 = vadd.f32 %v1971, %v2029
        %v2031 = vpop.f32.mrf.mxu0
        %v2032 = vadd.f32 %v1973, %v2031
        %2033 = vmatmul.bf16.gmra.mxu0 %v1250
        %v2034 = vpop.f32.mrf.mxu0
        %v2035 = vadd.f32 %v1976, %v2034
        %v2036 = vpop.f32.mrf.mxu0
        %v2037 = vadd.f32 %v1978, %v2036
        %2038 = vmatmul.bf16.gmra.mxu0 %v1251
        %v2039 = vpop.f32.mrf.mxu0
        %v2040 = vadd.f32 %v1981, %v2039
        %v2041 = vpop.f32.mrf.mxu0
        %v2042 = vadd.f32 %v1983, %v2041
        %2043 = vmatmul.bf16.gmra.mxu0 %v1252
        %v2044 = vpop.f32.mrf.mxu0
        %v2045 = vadd.f32 %v1986, %v2044
        %v2046 = vpop.f32.mrf.mxu0
        %v2047 = vadd.f32 %v1988, %v2046
        %2048 = vmatmul.bf16.gmra.mxu0 %v1253
        %v2049 = vpop.f32.mrf.mxu0
        %v2050 = vadd.f32 %v1991, %v2049
        %v2051 = vpop.f32.mrf.mxu0
        %v2052 = vadd.f32 %v1993, %v2051
        %2053 = vmatmul.bf16.gmra.mxu0 %v1254
        %v2054 = vpop.f32.mrf.mxu0
        %v2055 = vadd.f32 %v1996, %v2054
        %v2056 = vpop.f32.mrf.mxu0
        %v2057 = vadd.f32 %v1998, %v2056
        %2058 = vdwg.mxu0
        %2059 = vmatpush.bf16.msra.mxu0 %v1820
        %2060 = vmatpush.bf16.msra.mxu0 %v1819
        %2061 = vmatpush.bf16.msra.mxu0 %v1818
        %2062 = vmatpush.bf16.msra.mxu0 %v1817
        %2063 = vmatpush.bf16.msra.mxu0 %v1816
        %2064 = vmatpush.bf16.msra.mxu0 %v1815
        %2065 = vmatpush.bf16.msra.mxu0 %v1814
        %2066 = vmatpush.bf16.msra.mxu0 %v1813
        %2067 = vmatmul.bf16.gmra.mxu0 %v1305
        %v2068 = vpop.f32.mrf.mxu0
        %v2069 = vadd.f32 %v2010, %v2068
        %v2070 = vpop.f32.mrf.mxu0
        %v2071 = vadd.f32 %v2012, %v2070
        %2072 = vmatmul.bf16.gmra.mxu0 %v1306
        %v2073 = vpop.f32.mrf.mxu0
        %v2074 = vadd.f32 %v2015, %v2073
        %v2075 = vpop.f32.mrf.mxu0
        %v2076 = vadd.f32 %v2017, %v2075
        %2077 = vmatmul.bf16.gmra.mxu0 %v1307
        %v2078 = vpop.f32.mrf.mxu0
        %v2079 = vadd.f32 %v2020, %v2078
        %v2080 = vpop.f32.mrf.mxu0
        %v2081 = vadd.f32 %v2022, %v2080
        %2082 = vmatmul.bf16.gmra.mxu0 %v1308
        %v2083 = vpop.f32.mrf.mxu0
        %v2084 = vadd.f32 %v2025, %v2083
        %v2085 = vpop.f32.mrf.mxu0
        %v2086 = vadd.f32 %v2027, %v2085
        %2087 = vmatmul.bf16.gmra.mxu0 %v1309
        %v2088 = vpop.f32.mrf.mxu0
        %v2089 = vadd.f32 %v2030, %v2088
        %v2090 = vpop.f32.mrf.mxu0
        %v2091 = vadd.f32 %v2032, %v2090
        %2092 = vmatmul.bf16.gmra.mxu0 %v1310
        %v2093 = vpop.f32.mrf.mxu0
        %v2094 = vadd.f32 %v2035, %v2093
        %v2095 = vpop.f32.mrf.mxu0
        %v2096 = vadd.f32 %v2037, %v2095
        %2097 = vmatmul.bf16.gmra.mxu0 %v1311
        %v2098 = vpop.f32.mrf.mxu0
        %v2099 = vadd.f32 %v2040, %v2098
        %v2100 = vpop.f32.mrf.mxu0
        %v2101 = vadd.f32 %v2042, %v2100
        %2102 = vmatmul.bf16.gmra.mxu0 %v1312
        %v2103 = vpop.f32.mrf.mxu0
        %v2104 = vadd.f32 %v2045, %v2103
        %v2105 = vpop.f32.mrf.mxu0
        %v2106 = vadd.f32 %v2047, %v2105
        %2107 = vmatmul.bf16.gmra.mxu0 %v1313
        %v2108 = vpop.f32.mrf.mxu0
        %v2109 = vadd.f32 %v2050, %v2108
        %v2110 = vpop.f32.mrf.mxu0
        %v2111 = vadd.f32 %v2052, %v2110
        %2112 = vmatmul.bf16.gmra.mxu0 %v1314
        %v2113 = vpop.f32.mrf.mxu0
        %v2114 = vadd.f32 %v2055, %v2113
        %v2115 = vpop.f32.mrf.mxu0
        %v2116 = vadd.f32 %v2057, %v2115
        %2117 = vdwg.mxu0
        %2118 = vmatpush.bf16.msra.mxu0 %v1828
        %2119 = vmatpush.bf16.msra.mxu0 %v1827
        %2120 = vmatpush.bf16.msra.mxu0 %v1826
        %2121 = vmatpush.bf16.msra.mxu0 %v1825
        %2122 = vmatpush.bf16.msra.mxu0 %v1824
        %2123 = vmatpush.bf16.msra.mxu0 %v1823
        %2124 = vmatpush.bf16.msra.mxu0 %v1822
        %2125 = vmatpush.bf16.msra.mxu0 %v1821
        %2126 = vmatmul.bf16.gmra.mxu0 %v1186
        %v2127 = vpop.f32.mrf.mxu0
        %v2128 = vadd.f32 %v2069, %v2127
        %v2129 = vpop.f32.mrf.mxu0
        %v2130 = vadd.f32 %v2071, %v2129
        %2131 = vmatmul.bf16.gmra.mxu0 %v1187
        %v2132 = vpop.f32.mrf.mxu0
        %v2133 = vadd.f32 %v2074, %v2132
        %v2134 = vpop.f32.mrf.mxu0
        %v2135 = vadd.f32 %v2076, %v2134
        %2136 = vmatmul.bf16.gmra.mxu0 %v1188
        %v2137 = vpop.f32.mrf.mxu0
        %v2138 = vadd.f32 %v2079, %v2137
        %v2139 = vpop.f32.mrf.mxu0
        %v2140 = vadd.f32 %v2081, %v2139
        %2141 = vmatmul.bf16.gmra.mxu0 %v1189
        %v2142 = vpop.f32.mrf.mxu0
        %v2143 = vadd.f32 %v2084, %v2142
        %v2144 = vpop.f32.mrf.mxu0
        %v2145 = vadd.f32 %v2086, %v2144
        %2146 = vmatmul.bf16.gmra.mxu0 %v1190
        %v2147 = vpop.f32.mrf.mxu0
        %v2148 = vadd.f32 %v2089, %v2147
        %v2149 = vpop.f32.mrf.mxu0
        %v2150 = vadd.f32 %v2091, %v2149
        %2151 = vmatmul.bf16.gmra.mxu0 %v1191
        %v2152 = vpop.f32.mrf.mxu0
        %v2153 = vadd.f32 %v2094, %v2152
        %v2154 = vpop.f32.mrf.mxu0
        %v2155 = vadd.f32 %v2096, %v2154
        %2156 = vmatmul.bf16.gmra.mxu0 %v1192
        %v2157 = vpop.f32.mrf.mxu0
        %v2158 = vadd.f32 %v2099, %v2157
        %v2159 = vpop.f32.mrf.mxu0
        %v2160 = vadd.f32 %v2101, %v2159
        %2161 = vmatmul.bf16.gmra.mxu0 %v1193
        %v2162 = vpop.f32.mrf.mxu0
        %v2163 = vadd.f32 %v2104, %v2162
        %v2164 = vpop.f32.mrf.mxu0
        %v2165 = vadd.f32 %v2106, %v2164
        %2166 = vmatmul.bf16.gmra.mxu0 %v1194
        %v2167 = vpop.f32.mrf.mxu0
        %v2168 = vadd.f32 %v2109, %v2167
        %v2169 = vpop.f32.mrf.mxu0
        %v2170 = vadd.f32 %v2111, %v2169
        %2171 = vmatmul.bf16.gmra.mxu0 %v1329
        %v2172 = vpop.f32.mrf.mxu0
        %v2173 = vadd.f32 %v2114, %v2172
        %v2174 = vpop.f32.mrf.mxu0
        %v2175 = vadd.f32 %v2116, %v2174
        %2176 = vdwg.mxu0
        %2177 = vmatpush.bf16.msra.mxu0 %v1836
        %2178 = vmatpush.bf16.msra.mxu0 %v1835
        %2179 = vmatpush.bf16.msra.mxu0 %v1834
        %2180 = vmatpush.bf16.msra.mxu0 %v1833
        %2181 = vmatpush.bf16.msra.mxu0 %v1832
        %2182 = vmatpush.bf16.msra.mxu0 %v1831
        %2183 = vmatpush.bf16.msra.mxu0 %v1830
        %2184 = vmatpush.bf16.msra.mxu0 %v1829
        %2185 = vmatmul.bf16.gmra.mxu0 %v1246
        %v2186 = vpop.f32.mrf.mxu0
        %v2187 = vadd.f32 %v2128, %v2186
        %v2188 = vpop.f32.mrf.mxu0
        %v2189 = vadd.f32 %v2130, %v2188
        %2190 = vmatmul.bf16.gmra.mxu0 %v1247
        %v2191 = vpop.f32.mrf.mxu0
        %v2192 = vadd.f32 %v2133, %v2191
        %v2193 = vpop.f32.mrf.mxu0
        %v2194 = vadd.f32 %v2135, %v2193
        %2195 = vmatmul.bf16.gmra.mxu0 %v1248
        %v2196 = vpop.f32.mrf.mxu0
        %v2197 = vadd.f32 %v2138, %v2196
        %v2198 = vpop.f32.mrf.mxu0
        %v2199 = vadd.f32 %v2140, %v2198
        %2200 = vmatmul.bf16.gmra.mxu0 %v1249
        %v2201 = vpop.f32.mrf.mxu0
        %v2202 = vadd.f32 %v2143, %v2201
        %v2203 = vpop.f32.mrf.mxu0
        %v2204 = vadd.f32 %v2145, %v2203
        %2205 = vmatmul.bf16.gmra.mxu0 %v1250
        %v2206 = vpop.f32.mrf.mxu0
        %v2207 = vadd.f32 %v2148, %v2206
        %v2208 = vpop.f32.mrf.mxu0
        %v2209 = vadd.f32 %v2150, %v2208
        %2210 = vmatmul.bf16.gmra.mxu0 %v1251
        %v2211 = vpop.f32.mrf.mxu0
        %v2212 = vadd.f32 %v2153, %v2211
        %v2213 = vpop.f32.mrf.mxu0
        %v2214 = vadd.f32 %v2155, %v2213
        %2215 = vmatmul.bf16.gmra.mxu0 %v1252
        %v2216 = vpop.f32.mrf.mxu0
        %v2217 = vadd.f32 %v2158, %v2216
        %v2218 = vpop.f32.mrf.mxu0
        %v2219 = vadd.f32 %v2160, %v2218
        %2220 = vmatmul.bf16.gmra.mxu0 %v1253
        %v2221 = vpop.f32.mrf.mxu0
        %v2222 = vadd.f32 %v2163, %v2221
        %v2223 = vpop.f32.mrf.mxu0
        %v2224 = vadd.f32 %v2165, %v2223
        %2225 = vmatmul.bf16.gmra.mxu0 %v1254
        %v2226 = vpop.f32.mrf.mxu0
        %v2227 = vadd.f32 %v2168, %v2226
        %v2228 = vpop.f32.mrf.mxu0
        %v2229 = vadd.f32 %v2170, %v2228
        %2230 = vmatmul.bf16.gmra.mxu0 %v1335
        %v2231 = vpop.f32.mrf.mxu0
        %v2232 = vadd.f32 %v2173, %v2231
        %v2233 = vpop.f32.mrf.mxu0
        %v2234 = vadd.f32 %v2175, %v2233
        %2235 = vdwg.mxu0
        %2236 = vmatpush.bf16.msra.mxu0 %v1844
        %2237 = vmatpush.bf16.msra.mxu0 %v1843
        %2238 = vmatpush.bf16.msra.mxu0 %v1842
        %2239 = vmatpush.bf16.msra.mxu0 %v1841
        %2240 = vmatpush.bf16.msra.mxu0 %v1840
        %2241 = vmatpush.bf16.msra.mxu0 %v1839
        %2242 = vmatpush.bf16.msra.mxu0 %v1838
        %2243 = vmatpush.bf16.msra.mxu0 %v1837
        %2244 = vmatmul.bf16.gmra.mxu0 %v1306
        %v2245 = vpop.f32.mrf.mxu0
        %v2246 = vadd.f32 %v2187, %v2245
        %v2247 = vpop.f32.mrf.mxu0
        %v2248 = vadd.f32 %v2189, %v2247
        %2249 = vmatmul.bf16.gmra.mxu0 %v1307
        %v2250 = vpop.f32.mrf.mxu0
        %v2251 = vadd.f32 %v2192, %v2250
        %v2252 = vpop.f32.mrf.mxu0
        %v2253 = vadd.f32 %v2194, %v2252
        %2254 = vmatmul.bf16.gmra.mxu0 %v1308
        %v2255 = vpop.f32.mrf.mxu0
        %v2256 = vadd.f32 %v2197, %v2255
        %v2257 = vpop.f32.mrf.mxu0
        %v2258 = vadd.f32 %v2199, %v2257
        %2259 = vmatmul.bf16.gmra.mxu0 %v1309
        %v2260 = vpop.f32.mrf.mxu0
        %v2261 = vadd.f32 %v2202, %v2260
        %v2262 = vpop.f32.mrf.mxu0
        %v2263 = vadd.f32 %v2204, %v2262
        %2264 = vmatmul.bf16.gmra.mxu0 %v1310
        %v2265 = vpop.f32.mrf.mxu0
        %v2266 = vadd.f32 %v2207, %v2265
        %v2267 = vpop.f32.mrf.mxu0
        %v2268 = vadd.f32 %v2209, %v2267
        %2269 = vmatmul.bf16.gmra.mxu0 %v1311
        %v2270 = vpop.f32.mrf.mxu0
        %v2271 = vadd.f32 %v2212, %v2270
        %v2272 = vpop.f32.mrf.mxu0
        %v2273 = vadd.f32 %v2214, %v2272
        %2274 = vmatmul.bf16.gmra.mxu0 %v1312
        %v2275 = vpop.f32.mrf.mxu0
        %v2276 = vadd.f32 %v2217, %v2275
        %v2277 = vpop.f32.mrf.mxu0
        %v2278 = vadd.f32 %v2219, %v2277
        %2279 = vmatmul.bf16.gmra.mxu0 %v1313
        %v2280 = vpop.f32.mrf.mxu0
        %v2281 = vadd.f32 %v2222, %v2280
        %v2282 = vpop.f32.mrf.mxu0
        %v2283 = vadd.f32 %v2224, %v2282
        %2284 = vmatmul.bf16.gmra.mxu0 %v1314
        %v2285 = vpop.f32.mrf.mxu0
        %v2286 = vadd.f32 %v2227, %v2285
        %v2287 = vpop.f32.mrf.mxu0
        %v2288 = vadd.f32 %v2229, %v2287
        %2289 = vmatmul.bf16.gmra.mxu0 %v1341
        %v2290 = vpop.f32.mrf.mxu0
        %v2291 = vadd.f32 %v2232, %v2290
        %v2292 = vpop.f32.mrf.mxu0
        %v2293 = vadd.f32 %v2234, %v2292
        %2294 = vdwg.mxu0
        %2295 = vmatpush.bf16.msra.mxu0 %v1852
        %2296 = vmatpush.bf16.msra.mxu0 %v1851
        %2297 = vmatpush.bf16.msra.mxu0 %v1850
        %2298 = vmatpush.bf16.msra.mxu0 %v1849
        %2299 = vmatpush.bf16.msra.mxu0 %v1848
        %2300 = vmatpush.bf16.msra.mxu0 %v1847
        %2301 = vmatpush.bf16.msra.mxu0 %v1846
        %2302 = vmatpush.bf16.msra.mxu0 %v1845
        %2303 = vmatmul.bf16.gmra.mxu0 %v1187
        %v2304 = vpop.f32.mrf.mxu0
        %v2305 = vadd.f32 %v2246, %v2304
        %v2306 = vpop.f32.mrf.mxu0
        %v2307 = vadd.f32 %v2248, %v2306
        %2308 = vmatmul.bf16.gmra.mxu0 %v1188
        %v2309 = vpop.f32.mrf.mxu0
        %v2310 = vadd.f32 %v2251, %v2309
        %v2311 = vpop.f32.mrf.mxu0
        %v2312 = vadd.f32 %v2253, %v2311
        %2313 = vmatmul.bf16.gmra.mxu0 %v1189
        %v2314 = vpop.f32.mrf.mxu0
        %v2315 = vadd.f32 %v2256, %v2314
        %v2316 = vpop.f32.mrf.mxu0
        %v2317 = vadd.f32 %v2258, %v2316
        %2318 = vmatmul.bf16.gmra.mxu0 %v1190
        %v2319 = vpop.f32.mrf.mxu0
        %v2320 = vadd.f32 %v2261, %v2319
        %v2321 = vpop.f32.mrf.mxu0
        %v2322 = vadd.f32 %v2263, %v2321
        %2323 = vmatmul.bf16.gmra.mxu0 %v1191
        %v2324 = vpop.f32.mrf.mxu0
        %v2325 = vadd.f32 %v2266, %v2324
        %v2326 = vpop.f32.mrf.mxu0
        %v2327 = vadd.f32 %v2268, %v2326
        %2328 = vmatmul.bf16.gmra.mxu0 %v1192
        %v2329 = vpop.f32.mrf.mxu0
        %v2330 = vadd.f32 %v2271, %v2329
        %v2331 = vpop.f32.mrf.mxu0
        %v2332 = vadd.f32 %v2273, %v2331
        %2333 = vmatmul.bf16.gmra.mxu0 %v1193
        %v2334 = vpop.f32.mrf.mxu0
        %v2335 = vadd.f32 %v2276, %v2334
        %v2336 = vpop.f32.mrf.mxu0
        %v2337 = vadd.f32 %v2278, %v2336
        %2338 = vmatmul.bf16.gmra.mxu0 %v1194
        %v2339 = vpop.f32.mrf.mxu0
        %v2340 = vadd.f32 %v2281, %v2339
        %v2341 = vpop.f32.mrf.mxu0
        %v2342 = vadd.f32 %v2283, %v2341
        %2343 = vmatmul.bf16.gmra.mxu0 %v1329
        %v2344 = vpop.f32.mrf.mxu0
        %v2345 = vadd.f32 %v2286, %v2344
        %v2346 = vpop.f32.mrf.mxu0
        %v2347 = vadd.f32 %v2288, %v2346
        %2348 = vmatmul.bf16.gmra.mxu0 %v1347
        %v2349 = vpop.f32.mrf.mxu0
        %v2350 = vadd.f32 %v2291, %v2349
        %v2351 = vpop.f32.mrf.mxu0
        %v2352 = vadd.f32 %v2293, %v2351
        %2353 = vdwg.mxu0
        %2354 = vmatpush.bf16.msra.mxu0 %v1860
        %2355 = vmatpush.bf16.msra.mxu0 %v1859
        %2356 = vmatpush.bf16.msra.mxu0 %v1858
        %2357 = vmatpush.bf16.msra.mxu0 %v1857
        %2358 = vmatpush.bf16.msra.mxu0 %v1856
        %2359 = vmatpush.bf16.msra.mxu0 %v1855
        %2360 = vmatpush.bf16.msra.mxu0 %v1854
        %2361 = vmatpush.bf16.msra.mxu0 %v1853
        %2362 = vmatmul.bf16.gmra.mxu0 %v1247
        %v2363 = vpop.f32.mrf.mxu0
        %v2364 = vadd.f32 %v2305, %v2363
        %v2365 = vpop.f32.mrf.mxu0
        %v2366 = vadd.f32 %v2307, %v2365
        %2367 = vmatmul.bf16.gmra.mxu0 %v1248
        %v2368 = vpop.f32.mrf.mxu0
        %v2369 = vadd.f32 %v2310, %v2368
        %v2370 = vpop.f32.mrf.mxu0
        %v2371 = vadd.f32 %v2312, %v2370
        %2372 = vmatmul.bf16.gmra.mxu0 %v1249
        %v2373 = vpop.f32.mrf.mxu0
        %v2374 = vadd.f32 %v2315, %v2373
        %v2375 = vpop.f32.mrf.mxu0
        %v2376 = vadd.f32 %v2317, %v2375
        %2377 = vmatmul.bf16.gmra.mxu0 %v1250
        %v2378 = vpop.f32.mrf.mxu0
        %v2379 = vadd.f32 %v2320, %v2378
        %v2380 = vpop.f32.mrf.mxu0
        %v2381 = vadd.f32 %v2322, %v2380
        %2382 = vmatmul.bf16.gmra.mxu0 %v1251
        %v2383 = vpop.f32.mrf.mxu0
        %v2384 = vadd.f32 %v2325, %v2383
        %v2385 = vpop.f32.mrf.mxu0
        %v2386 = vadd.f32 %v2327, %v2385
        %2387 = vmatmul.bf16.gmra.mxu0 %v1252
        %v2388 = vpop.f32.mrf.mxu0
        %v2389 = vadd.f32 %v2330, %v2388
        %v2390 = vpop.f32.mrf.mxu0
        %v2391 = vadd.f32 %v2332, %v2390
        %2392 = vmatmul.bf16.gmra.mxu0 %v1253
        %v2393 = vpop.f32.mrf.mxu0
        %v2394 = vadd.f32 %v2335, %v2393
        %v2395 = vpop.f32.mrf.mxu0
        %v2396 = vadd.f32 %v2337, %v2395
        %2397 = vmatmul.bf16.gmra.mxu0 %v1254
        %v2398 = vpop.f32.mrf.mxu0
        %v2399 = vadd.f32 %v2340, %v2398
        %v2400 = vpop.f32.mrf.mxu0
        %v2401 = vadd.f32 %v2342, %v2400
        %2402 = vmatmul.bf16.gmra.mxu0 %v1335
        %v2403 = vpop.f32.mrf.mxu0
        %v2404 = vadd.f32 %v2345, %v2403
        %v2405 = vpop.f32.mrf.mxu0
        %v2406 = vadd.f32 %v2347, %v2405
        %2407 = vmatmul.bf16.gmra.mxu0 %v1353
        %v2408 = vpop.f32.mrf.mxu0
        %v2409 = vadd.f32 %v2350, %v2408
        %v2410 = vpop.f32.mrf.mxu0
        %v2411 = vadd.f32 %v2352, %v2410
        %2412 = vdwg.mxu0
        %2413 = vmatpush.bf16.msra.mxu0 %v1868
        %2414 = vmatpush.bf16.msra.mxu0 %v1867
        %2415 = vmatpush.bf16.msra.mxu0 %v1866
        %2416 = vmatpush.bf16.msra.mxu0 %v1865
        %2417 = vmatpush.bf16.msra.mxu0 %v1864
        %2418 = vmatpush.bf16.msra.mxu0 %v1863
        %2419 = vmatpush.bf16.msra.mxu0 %v1862
        %2420 = vmatpush.bf16.msra.mxu0 %v1861
        %2421 = vmatmul.bf16.gmra.mxu0 %v1307
        %v2422 = vpop.f32.mrf.mxu0
        %v2423 = vadd.f32 %v2364, %v2422
        %v2424 = vpop.f32.mrf.mxu0
        %v2425 = vadd.f32 %v2366, %v2424
        %2426 = vmatmul.bf16.gmra.mxu0 %v1308
        %v2427 = vpop.f32.mrf.mxu0
        %v2428 = vadd.f32 %v2369, %v2427
        %v2429 = vpop.f32.mrf.mxu0
        %v2430 = vadd.f32 %v2371, %v2429
        %2431 = vmatmul.bf16.gmra.mxu0 %v1309
        %v2432 = vpop.f32.mrf.mxu0
        %v2433 = vadd.f32 %v2374, %v2432
        %v2434 = vpop.f32.mrf.mxu0
        %v2435 = vadd.f32 %v2376, %v2434
        %2436 = vmatmul.bf16.gmra.mxu0 %v1310
        %v2437 = vpop.f32.mrf.mxu0
        %v2438 = vadd.f32 %v2379, %v2437
        %v2439 = vpop.f32.mrf.mxu0
        %v2440 = vadd.f32 %v2381, %v2439
        %2441 = vmatmul.bf16.gmra.mxu0 %v1311
        %v2442 = vpop.f32.mrf.mxu0
        %v2443 = vadd.f32 %v2384, %v2442
        %v2444 = vpop.f32.mrf.mxu0
        %v2445 = vadd.f32 %v2386, %v2444
        %2446 = vmatmul.bf16.gmra.mxu0 %v1312
        %v2447 = vpop.f32.mrf.mxu0
        %v2448 = vadd.f32 %v2389, %v2447
        %v2449 = vpop.f32.mrf.mxu0
        %v2450 = vadd.f32 %v2391, %v2449
        %2451 = vmatmul.bf16.gmra.mxu0 %v1313
        %v2452 = vpop.f32.mrf.mxu0
        %v2453 = vadd.f32 %v2394, %v2452
        %v2454 = vpop.f32.mrf.mxu0
        %v2455 = vadd.f32 %v2396, %v2454
        %2456 = vmatmul.bf16.gmra.mxu0 %v1314
        %v2457 = vpop.f32.mrf.mxu0
        %v2458 = vadd.f32 %v2399, %v2457
        %v2459 = vpop.f32.mrf.mxu0
        %v2460 = vadd.f32 %v2401, %v2459
        %2461 = vmatmul.bf16.gmra.mxu0 %v1341
        %v2462 = vpop.f32.mrf.mxu0
        %v2463 = vadd.f32 %v2404, %v2462
        %v2464 = vpop.f32.mrf.mxu0
        %v2465 = vadd.f32 %v2406, %v2464
        %2466 = vmatmul.bf16.gmra.mxu0 %v1359
        %v2467 = vpop.f32.mrf.mxu0
        %v2468 = vadd.f32 %v2409, %v2467
        %v2469 = vpop.f32.mrf.mxu0
        %v2470 = vadd.f32 %v2411, %v2469
        %2471 = vdwg.mxu0
        %v2472 = vmax.f32 %v2423, 0.0
        %v2473 = vmax.f32 %v2425, 0.0
        %v2474 = vmax.f32 %v2428, 0.0
        %v2475 = vmax.f32 %v2430, 0.0
        %v2476 = vmax.f32 %v2433, 0.0
        %v2477 = vmax.f32 %v2435, 0.0
        %v2478 = vmax.f32 %v2438, 0.0
        %v2479 = vmax.f32 %v2440, 0.0
        %v2480 = vmax.f32 %v2443, 0.0
        %v2481 = vmax.f32 %v2445, 0.0
        %v2482 = vmax.f32 %v2448, 0.0
        %v2483 = vmax.f32 %v2450, 0.0
        %v2484 = vmax.f32 %v2453, 0.0
        %v2485 = vmax.f32 %v2455, 0.0
        %v2486 = vmax.f32 %v2458, 0.0
        %v2487 = vmax.f32 %v2460, 0.0
        %v2488 = vmax.f32 %v2463, 0.0
        %v2489 = vmax.f32 %v2465, 0.0
        %v2490 = vmax.f32 %v2468, 0.0
        %v2491 = vmax.f32 %v2470, 0.0
        %s2492 = smul.u32 %s30, 8
        %s2493 = ssub.s32 %s2492, 1
        %v2494 = vstv %s2493
        %v2495 = vadd.s32 %v403, %v2494
        %v2496 = vadd.s32 %v404, %v2494
        %v2497 = vadd.s32 %v405, %v2494
        %v2498 = vadd.s32 %v406, %v2494
        %v2499 = vadd.s32 %v407, %v2494
        %v2500 = vadd.s32 %v408, %v2494
        %v2501 = vadd.s32 %v409, %v2494
        %v2502 = vadd.s32 %v410, %v2494
        %v2503 = vadd.s32 %v411, %v2494
        %v2504 = vadd.s32 %v412, %v2494
        %v2505 = vadd.s32 %v413, %v2494
        %v2506 = vadd.s32 %v414, %v2494
        %v2507 = vadd.s32 %v415, %v2494
        %v2508 = vadd.s32 %v416, %v2494
        %v2509 = vadd.s32 %v417, %v2494
        %v2510 = vadd.s32 %v418, %v2494
        %v2511 = vadd.s32 %v419, %v2494
        %v2512 = vadd.s32 %v420, %v2494
        %v2513 = vadd.s32 %v421, %v2494
        %v2514 = vadd.s32 %v422, %v2494
        %vm2515 = vcmp.ge.s32.totalorder %v2495, 0
        %vm2516 = vcmp.ge.s32.totalorder %v2496, 0
        %vm2517 = vcmp.ge.s32.totalorder %v2497, 0
        %vm2518 = vcmp.ge.s32.totalorder %v2498, 0
        %vm2519 = vcmp.ge.s32.totalorder %v2499, 0
        %vm2520 = vcmp.ge.s32.totalorder %v2500, 0
        %vm2521 = vcmp.ge.s32.totalorder %v2501, 0
        %vm2522 = vcmp.ge.s32.totalorder %v2502, 0
        %vm2523 = vcmp.ge.s32.totalorder %v2503, 0
        %vm2524 = vcmp.ge.s32.totalorder %v2504, 0
        %vm2525 = vcmp.ge.s32.totalorder %v2505, 0
        %vm2526 = vcmp.ge.s32.totalorder %v2506, 0
        %vm2527 = vcmp.ge.s32.totalorder %v2507, 0
        %vm2528 = vcmp.ge.s32.totalorder %v2508, 0
        %vm2529 = vcmp.ge.s32.totalorder %v2509, 0
        %vm2530 = vcmp.ge.s32.totalorder %v2510, 0
        %vm2531 = vcmp.ge.s32.totalorder %v2511, 0
        %vm2532 = vcmp.ge.s32.totalorder %v2512, 0
        %vm2533 = vcmp.ge.s32.totalorder %v2513, 0
        %vm2534 = vcmp.ge.s32.totalorder %v2514, 0
        %vm2535 = vcmp.le.s32.totalorder %v2495, 15
        %vm2536 = vcmp.le.s32.totalorder %v2496, 15
        %vm2537 = vcmp.le.s32.totalorder %v2497, 15
        %vm2538 = vcmp.le.s32.totalorder %v2498, 15
        %vm2539 = vcmp.le.s32.totalorder %v2499, 15
        %vm2540 = vcmp.le.s32.totalorder %v2500, 15
        %vm2541 = vcmp.le.s32.totalorder %v2501, 15
        %vm2542 = vcmp.le.s32.totalorder %v2502, 15
        %vm2543 = vcmp.le.s32.totalorder %v2503, 15
        %vm2544 = vcmp.le.s32.totalorder %v2504, 15
        %vm2545 = vcmp.le.s32.totalorder %v2505, 15
        %vm2546 = vcmp.le.s32.totalorder %v2506, 15
        %vm2547 = vcmp.le.s32.totalorder %v2507, 15
        %vm2548 = vcmp.le.s32.totalorder %v2508, 15
        %vm2549 = vcmp.le.s32.totalorder %v2509, 15
        %vm2550 = vcmp.le.s32.totalorder %v2510, 15
        %vm2551 = vcmp.le.s32.totalorder %v2511, 15
        %vm2552 = vcmp.le.s32.totalorder %v2512, 15
        %vm2553 = vcmp.le.s32.totalorder %v2513, 15
        %vm2554 = vcmp.le.s32.totalorder %v2514, 15
        %vm2555 = vmand %vm2515, %vm2535
        %vm2556 = vmand %vm2516, %vm2536
        %vm2557 = vmand %vm2517, %vm2537
        %vm2558 = vmand %vm2518, %vm2538
        %vm2559 = vmand %vm2519, %vm2539
        %vm2560 = vmand %vm2520, %vm2540
        %vm2561 = vmand %vm2521, %vm2541
        %vm2562 = vmand %vm2522, %vm2542
        %vm2563 = vmand %vm2523, %vm2543
        %vm2564 = vmand %vm2524, %vm2544
        %vm2565 = vmand %vm2525, %vm2545
        %vm2566 = vmand %vm2526, %vm2546
        %vm2567 = vmand %vm2527, %vm2547
        %vm2568 = vmand %vm2528, %vm2548
        %vm2569 = vmand %vm2529, %vm2549
        %vm2570 = vmand %vm2530, %vm2550
        %vm2571 = vmand %vm2531, %vm2551
        %vm2572 = vmand %vm2532, %vm2552
        %vm2573 = vmand %vm2533, %vm2553
        %vm2574 = vmand %vm2534, %vm2554
        %v2575 = vsel %vm2555, 1, 0
        %v2576 = vsel %vm2556, 1, 0
        %v2577 = vsel %vm2557, 1, 0
        %v2578 = vsel %vm2558, 1, 0
        %v2579 = vsel %vm2559, 1, 0
        %v2580 = vsel %vm2560, 1, 0
        %v2581 = vsel %vm2561, 1, 0
        %v2582 = vsel %vm2562, 1, 0
        %v2583 = vsel %vm2563, 1, 0
        %v2584 = vsel %vm2564, 1, 0
        %v2585 = vsel %vm2565, 1, 0
        %v2586 = vsel %vm2566, 1, 0
        %v2587 = vsel %vm2567, 1, 0
        %v2588 = vsel %vm2568, 1, 0
        %v2589 = vsel %vm2569, 1, 0
        %v2590 = vsel %vm2570, 1, 0
        %v2591 = vsel %vm2571, 1, 0
        %v2592 = vsel %vm2572, 1, 0
        %v2593 = vsel %vm2573, 1, 0
        %v2594 = vsel %vm2574, 1, 0
        %2595 = vset.pattern.permute.xlu0 0
        %2596 = vperm.xlu0 %2595, %v2575
        %v2597 = vpop.permute.xlu0 %2596
        %2598 = vset.pattern.permute.xlu0 0
        %2599 = vperm.xlu0 %2598, %v2576
        %v2600 = vpop.permute.xlu0 %2599
        %2601 = vset.pattern.permute.xlu0 0
        %2602 = vperm.xlu0 %2601, %v2577
        %v2603 = vpop.permute.xlu0 %2602
        %2604 = vset.pattern.permute.xlu0 0
        %2605 = vperm.xlu0 %2604, %v2578
        %v2606 = vpop.permute.xlu0 %2605
        %2607 = vset.pattern.permute.xlu0 0
        %2608 = vperm.xlu0 %2607, %v2579
        %v2609 = vpop.permute.xlu0 %2608
        %2610 = vset.pattern.permute.xlu0 0
        %2611 = vperm.xlu0 %2610, %v2580
        %v2612 = vpop.permute.xlu0 %2611
        %2613 = vset.pattern.permute.xlu0 0
        %2614 = vperm.xlu0 %2613, %v2581
        %v2615 = vpop.permute.xlu0 %2614
        %2616 = vset.pattern.permute.xlu0 0
        %2617 = vperm.xlu0 %2616, %v2582
        %v2618 = vpop.permute.xlu0 %2617
        %2619 = vset.pattern.permute.xlu0 0
        %2620 = vperm.xlu0 %2619, %v2583
        %v2621 = vpop.permute.xlu0 %2620
        %2622 = vset.pattern.permute.xlu0 0
        %2623 = vperm.xlu0 %2622, %v2584
        %v2624 = vpop.permute.xlu0 %2623
        %2625 = vset.pattern.permute.xlu0 0
        %2626 = vperm.xlu0 %2625, %v2585
        %v2627 = vpop.permute.xlu0 %2626
        %2628 = vset.pattern.permute.xlu0 0
        %2629 = vperm.xlu0 %2628, %v2586
        %v2630 = vpop.permute.xlu0 %2629
        %2631 = vset.pattern.permute.xlu0 0
        %2632 = vperm.xlu0 %2631, %v2587
        %v2633 = vpop.permute.xlu0 %2632
        %2634 = vset.pattern.permute.xlu0 0
        %2635 = vperm.xlu0 %2634, %v2588
        %v2636 = vpop.permute.xlu0 %2635
        %2637 = vset.pattern.permute.xlu0 0
        %2638 = vperm.xlu0 %2637, %v2589
        %v2639 = vpop.permute.xlu0 %2638
        %2640 = vset.pattern.permute.xlu0 0
        %2641 = vperm.xlu0 %2640, %v2590
        %v2642 = vpop.permute.xlu0 %2641
        %2643 = vset.pattern.permute.xlu0 0
        %2644 = vperm.xlu0 %2643, %v2591
        %v2645 = vpop.permute.xlu0 %2644
        %2646 = vset.pattern.permute.xlu0 0
        %2647 = vperm.xlu0 %2646, %v2592
        %v2648 = vpop.permute.xlu0 %2647
        %2649 = vset.pattern.permute.xlu0 0
        %2650 = vperm.xlu0 %2649, %v2593
        %v2651 = vpop.permute.xlu0 %2650
        %2652 = vset.pattern.permute.xlu0 0
        %2653 = vperm.xlu0 %2652, %v2594
        %v2654 = vpop.permute.xlu0 %2653
        %vm2655 = vcmp.eq.s32.totalorder %v2597, 1
        %vm2656 = vcmp.eq.s32.totalorder %v2600, 1
        %vm2657 = vcmp.eq.s32.totalorder %v2603, 1
        %vm2658 = vcmp.eq.s32.totalorder %v2606, 1
        %vm2659 = vcmp.eq.s32.totalorder %v2609, 1
        %vm2660 = vcmp.eq.s32.totalorder %v2612, 1
        %vm2661 = vcmp.eq.s32.totalorder %v2615, 1
        %vm2662 = vcmp.eq.s32.totalorder %v2618, 1
        %vm2663 = vcmp.eq.s32.totalorder %v2621, 1
        %vm2664 = vcmp.eq.s32.totalorder %v2624, 1
        %vm2665 = vcmp.eq.s32.totalorder %v2627, 1
        %vm2666 = vcmp.eq.s32.totalorder %v2630, 1
        %vm2667 = vcmp.eq.s32.totalorder %v2633, 1
        %vm2668 = vcmp.eq.s32.totalorder %v2636, 1
        %vm2669 = vcmp.eq.s32.totalorder %v2639, 1
        %vm2670 = vcmp.eq.s32.totalorder %v2642, 1
        %vm2671 = vcmp.eq.s32.totalorder %v2645, 1
        %vm2672 = vcmp.eq.s32.totalorder %v2648, 1
        %vm2673 = vcmp.eq.s32.totalorder %v2651, 1
        %vm2674 = vcmp.eq.s32.totalorder %v2654, 1
        %v2675 = vsel %vm2655, %v2472, 0.0
        %v2676 = vsel %vm2656, %v2473, 0.0
        %v2677 = vsel %vm2657, %v2474, 0.0
        %v2678 = vsel %vm2658, %v2475, 0.0
        %v2679 = vsel %vm2659, %v2476, 0.0
        %v2680 = vsel %vm2660, %v2477, 0.0
        %v2681 = vsel %vm2661, %v2478, 0.0
        %v2682 = vsel %vm2662, %v2479, 0.0
        %v2683 = vsel %vm2663, %v2480, 0.0
        %v2684 = vsel %vm2664, %v2481, 0.0
        %v2685 = vsel %vm2665, %v2482, 0.0
        %v2686 = vsel %vm2666, %v2483, 0.0
        %v2687 = vsel %vm2667, %v2484, 0.0
        %v2688 = vsel %vm2668, %v2485, 0.0
        %v2689 = vsel %vm2669, %v2486, 0.0
        %v2690 = vsel %vm2670, %v2487, 0.0
        %v2691 = vsel %vm2671, %v2488, 0.0
        %v2692 = vsel %vm2672, %v2489, 0.0
        %v2693 = vsel %vm2673, %v2490, 0.0
        %v2694 = vsel %vm2674, %v2491, 0.0
        %v2715 = vrot.slane %v2675, 7
        %v2716 = vrot.slane %v2676, 7
        %v2717 = vsel %vm447, %v2715, %v2716
        %v2718 = vrot.slane %v2677, 7
        %v2719 = vsel %vm447, %v2716, %v2718
        %v2720 = vrot.slane %v2678, 7
        %v2721 = vsel %vm447, %v2718, %v2720
        %v2722 = vrot.slane %v2679, 7
        %v2723 = vsel %vm447, %v2720, %v2722
        %v2724 = vrot.slane %v2680, 7
        %v2725 = vsel %vm447, %v2722, %v2724
        %v2726 = vrot.slane %v2681, 7
        %v2727 = vsel %vm447, %v2724, %v2726
        %v2728 = vrot.slane %v2682, 7
        %v2729 = vsel %vm447, %v2726, %v2728
        %v2730 = vrot.slane %v2683, 7
        %v2731 = vsel %vm447, %v2728, %v2730
        %v2732 = vrot.slane %v2684, 7
        %v2733 = vsel %vm447, %v2730, %v2732
        %v2734 = vrot.slane %v2685, 7
        %v2735 = vsel %vm447, %v2732, %v2734
        %v2736 = vrot.slane %v2686, 7
        %v2737 = vsel %vm447, %v2734, %v2736
        %v2738 = vrot.slane %v2687, 7
        %v2739 = vsel %vm447, %v2736, %v2738
        %v2740 = vrot.slane %v2688, 7
        %v2741 = vsel %vm447, %v2738, %v2740
        %v2742 = vrot.slane %v2689, 7
        %v2743 = vsel %vm447, %v2740, %v2742
        %v2744 = vrot.slane %v2690, 7
        %v2745 = vsel %vm447, %v2742, %v2744
        %v2746 = vrot.slane %v2691, 7
        %v2747 = vsel %vm447, %v2744, %v2746
        %v2748 = vrot.slane %v2692, 7
        %v2749 = vsel %vm447, %v2746, %v2748
        %v2750 = vrot.slane %v2693, 7
        %v2751 = vsel %vm447, %v2748, %v2750
        %v2752 = vrot.slane %v2694, 7
        %v2753 = vsel %vm447, %v2750, %v2752
        %v2774 = vsel %vm447, 0.0, %v2715
        %v2775 = vsel %vm712, %v2774, 0.0
        %v2776 = vsel %vm713, %v2717, 0.0
        %v2777 = vsel %vm714, %v2719, 0.0
        %v2778 = vsel %vm715, %v2721, 0.0
        %v2779 = vsel %vm716, %v2723, 0.0
        %v2780 = vsel %vm717, %v2725, 0.0
        %v2781 = vsel %vm718, %v2727, 0.0
        %v2782 = vsel %vm719, %v2729, 0.0
        %v2783 = vsel %vm720, %v2731, 0.0
        %v2784 = vsel %vm721, %v2733, 0.0
        %v2785 = vsel %vm722, %v2735, 0.0
        %v2786 = vsel %vm723, %v2737, 0.0
        %v2787 = vsel %vm724, %v2739, 0.0
        %v2788 = vsel %vm725, %v2741, 0.0
        %v2789 = vsel %vm726, %v2743, 0.0
        %v2790 = vsel %vm727, %v2745, 0.0
        %v2791 = vsel %vm728, %v2747, 0.0
        %v2792 = vsel %vm729, %v2749, 0.0
        %v2793 = vsel %vm730, %v2751, 0.0
        %v2794 = vsel %vm731, %v2753, 0.0
        %v2795 = vpack.c.bf16 %v2775, %v2775
        %v2796 = vpack.c.bf16 %v2776, %v2776
        %v2797 = vpack.c.bf16 %v2777, %v2777
        %v2798 = vpack.c.bf16 %v2778, %v2778
        %v2799 = vpack.c.bf16 %v2779, %v2779
        %v2800 = vpack.c.bf16 %v2780, %v2780
        %v2801 = vpack.c.bf16 %v2781, %v2781
        %v2802 = vpack.c.bf16 %v2782, %v2782
        %v2803 = vpack.c.bf16 %v2783, %v2783
        %v2804 = vpack.c.bf16 %v2784, %v2784
        %v2805 = vpack.c.bf16 %v2785, %v2785
        %v2806 = vpack.c.bf16 %v2786, %v2786
        %v2807 = vpack.c.bf16 %v2787, %v2787
        %v2808 = vpack.c.bf16 %v2788, %v2788
        %v2809 = vpack.c.bf16 %v2789, %v2789
        %v2810 = vpack.c.bf16 %v2790, %v2790
        %v2811 = vpack.c.bf16 %v2791, %v2791
        %v2812 = vpack.c.bf16 %v2792, %v2792
        %v2813 = vpack.c.bf16 %v2793, %v2793
        %v2814 = vpack.c.bf16 %v2794, %v2794
        %v2815 = vpack.c.bf16 %v2675, %v2675
        %v2816 = vpack.c.bf16 %v2676, %v2676
        %v2817 = vpack.c.bf16 %v2677, %v2677
        %v2818 = vpack.c.bf16 %v2678, %v2678
        %v2819 = vpack.c.bf16 %v2679, %v2679
        %v2820 = vpack.c.bf16 %v2680, %v2680
        %v2821 = vpack.c.bf16 %v2681, %v2681
        %v2822 = vpack.c.bf16 %v2682, %v2682
        %v2823 = vpack.c.bf16 %v2683, %v2683
        %v2824 = vpack.c.bf16 %v2684, %v2684
        %v2825 = vpack.c.bf16 %v2685, %v2685
        %v2826 = vpack.c.bf16 %v2686, %v2686
        %v2827 = vpack.c.bf16 %v2687, %v2687
        %v2828 = vpack.c.bf16 %v2688, %v2688
        %v2829 = vpack.c.bf16 %v2689, %v2689
        %v2830 = vpack.c.bf16 %v2690, %v2690
        %v2831 = vpack.c.bf16 %v2691, %v2691
        %v2832 = vpack.c.bf16 %v2692, %v2692
        %v2833 = vpack.c.bf16 %v2693, %v2693
        %v2834 = vpack.c.bf16 %v2694, %v2694
        %v2835 = vrot.slane %v2675, 1
        %v2836 = vrot.slane %v2676, 1
        %v2837 = vsel %vm808, %v2835, %v2836
        %v2838 = vrot.slane %v2677, 1
        %v2839 = vsel %vm808, %v2836, %v2838
        %v2840 = vrot.slane %v2678, 1
        %v2841 = vsel %vm808, %v2838, %v2840
        %v2842 = vrot.slane %v2679, 1
        %v2843 = vsel %vm808, %v2840, %v2842
        %v2844 = vrot.slane %v2680, 1
        %v2845 = vsel %vm808, %v2842, %v2844
        %v2846 = vrot.slane %v2681, 1
        %v2847 = vsel %vm808, %v2844, %v2846
        %v2848 = vrot.slane %v2682, 1
        %v2849 = vsel %vm808, %v2846, %v2848
        %v2850 = vrot.slane %v2683, 1
        %v2851 = vsel %vm808, %v2848, %v2850
        %v2852 = vrot.slane %v2684, 1
        %v2853 = vsel %vm808, %v2850, %v2852
        %v2854 = vrot.slane %v2685, 1
        %v2855 = vsel %vm808, %v2852, %v2854
        %v2856 = vrot.slane %v2686, 1
        %v2857 = vsel %vm808, %v2854, %v2856
        %v2858 = vrot.slane %v2687, 1
        %v2859 = vsel %vm808, %v2856, %v2858
        %v2860 = vrot.slane %v2688, 1
        %v2861 = vsel %vm808, %v2858, %v2860
        %v2862 = vrot.slane %v2689, 1
        %v2863 = vsel %vm808, %v2860, %v2862
        %v2864 = vrot.slane %v2690, 1
        %v2865 = vsel %vm808, %v2862, %v2864
        %v2866 = vrot.slane %v2691, 1
        %v2867 = vsel %vm808, %v2864, %v2866
        %v2868 = vrot.slane %v2692, 1
        %v2869 = vsel %vm808, %v2866, %v2868
        %v2870 = vrot.slane %v2693, 1
        %v2871 = vsel %vm808, %v2868, %v2870
        %v2872 = vrot.slane %v2694, 1
        %v2873 = vsel %vm808, %v2870, %v2872
        %v2894 = vsel %vm808, %v2872, 0.0
        %v2895 = vsel %vm1073, %v2837, 0.0
        %v2896 = vsel %vm1074, %v2839, 0.0
        %v2897 = vsel %vm1075, %v2841, 0.0
        %v2898 = vsel %vm1076, %v2843, 0.0
        %v2899 = vsel %vm1077, %v2845, 0.0
        %v2900 = vsel %vm1078, %v2847, 0.0
        %v2901 = vsel %vm1079, %v2849, 0.0
        %v2902 = vsel %vm1080, %v2851, 0.0
        %v2903 = vsel %vm1081, %v2853, 0.0
        %v2904 = vsel %vm1082, %v2855, 0.0
        %v2905 = vsel %vm1083, %v2857, 0.0
        %v2906 = vsel %vm1084, %v2859, 0.0
        %v2907 = vsel %vm1085, %v2861, 0.0
        %v2908 = vsel %vm1086, %v2863, 0.0
        %v2909 = vsel %vm1087, %v2865, 0.0
        %v2910 = vsel %vm1088, %v2867, 0.0
        %v2911 = vsel %vm1089, %v2869, 0.0
        %v2912 = vsel %vm1090, %v2871, 0.0
        %v2913 = vsel %vm1091, %v2873, 0.0
        %v2914 = vsel %vm1092, %v2894, 0.0
        %v2915 = vpack.c.bf16 %v2895, %v2895
        %v2916 = vpack.c.bf16 %v2896, %v2896
        %v2917 = vpack.c.bf16 %v2897, %v2897
        %v2918 = vpack.c.bf16 %v2898, %v2898
        %v2919 = vpack.c.bf16 %v2899, %v2899
        %v2920 = vpack.c.bf16 %v2900, %v2900
        %v2921 = vpack.c.bf16 %v2901, %v2901
        %v2922 = vpack.c.bf16 %v2902, %v2902
        %v2923 = vpack.c.bf16 %v2903, %v2903
        %v2924 = vpack.c.bf16 %v2904, %v2904
        %v2925 = vpack.c.bf16 %v2905, %v2905
        %v2926 = vpack.c.bf16 %v2906, %v2906
        %v2927 = vpack.c.bf16 %v2907, %v2907
        %v2928 = vpack.c.bf16 %v2908, %v2908
        %v2929 = vpack.c.bf16 %v2909, %v2909
        %v2930 = vpack.c.bf16 %v2910, %v2910
        %v2931 = vpack.c.bf16 %v2911, %v2911
        %v2932 = vpack.c.bf16 %v2912, %v2912
        %v2933 = vpack.c.bf16 %v2913, %v2913
        %v2934 = vpack.c.bf16 %v2914, %v2914
        %v2951 = vunpack.c.l.b16 %v2795
        %v2952 = vunpack.c.l.b16 %v2796
        %v2953 = vunpack.c.l.b16 %v2797
        %v2954 = vunpack.c.l.b16 %v2798
        %v2955 = vunpack.c.l.b16 %v2799
        %v2956 = vunpack.c.l.b16 %v2800
        %v2957 = vunpack.c.l.b16 %v2801
        %v2958 = vunpack.c.l.b16 %v2802
        %v2959 = vunpack.c.l.b16 %v2803
        %v2960 = vunpack.c.l.b16 %v2804
        %v2961 = vunpack.c.l.b16 %v2805
        %v2962 = vunpack.c.l.b16 %v2806
        %v2963 = vunpack.c.l.b16 %v2807
        %v2964 = vunpack.c.l.b16 %v2808
        %v2965 = vunpack.c.l.b16 %v2809
        %v2966 = vunpack.c.l.b16 %v2810
        %v2967 = vpack.c.b16 %v2952, %v2951
        %v2968 = vpack.c.b16 %v2954, %v2953
        %v2969 = vpack.c.b16 %v2956, %v2955
        %v2970 = vpack.c.b16 %v2958, %v2957
        %v2971 = vpack.c.b16 %v2960, %v2959
        %v2972 = vpack.c.b16 %v2962, %v2961
        %v2973 = vpack.c.b16 %v2964, %v2963
        %v2974 = vpack.c.b16 %v2966, %v2965
        %v2999 = vunpack.c.l.b16 %v2815
        %v3000 = vunpack.c.l.b16 %v2816
        %v3001 = vunpack.c.l.b16 %v2817
        %v3002 = vunpack.c.l.b16 %v2818
        %v3003 = vunpack.c.l.b16 %v2819
        %v3004 = vunpack.c.l.b16 %v2820
        %v3005 = vunpack.c.l.b16 %v2821
        %v3006 = vunpack.c.l.b16 %v2822
        %v3007 = vunpack.c.l.b16 %v2823
        %v3008 = vunpack.c.l.b16 %v2824
        %v3009 = vunpack.c.l.b16 %v2825
        %v3010 = vunpack.c.l.b16 %v2826
        %v3011 = vunpack.c.l.b16 %v2827
        %v3012 = vunpack.c.l.b16 %v2828
        %v3013 = vunpack.c.l.b16 %v2829
        %v3014 = vunpack.c.l.b16 %v2830
        %v3015 = vpack.c.b16 %v3000, %v2999
        %v3016 = vpack.c.b16 %v3002, %v3001
        %v3017 = vpack.c.b16 %v3004, %v3003
        %v3018 = vpack.c.b16 %v3006, %v3005
        %v3019 = vpack.c.b16 %v3008, %v3007
        %v3020 = vpack.c.b16 %v3010, %v3009
        %v3021 = vpack.c.b16 %v3012, %v3011
        %v3022 = vpack.c.b16 %v3014, %v3013
        %v3047 = vunpack.c.l.b16 %v2915
        %v3048 = vunpack.c.l.b16 %v2916
        %v3049 = vunpack.c.l.b16 %v2917
        %v3050 = vunpack.c.l.b16 %v2918
        %v3051 = vunpack.c.l.b16 %v2919
        %v3052 = vunpack.c.l.b16 %v2920
        %v3053 = vunpack.c.l.b16 %v2921
        %v3054 = vunpack.c.l.b16 %v2922
        %v3055 = vunpack.c.l.b16 %v2923
        %v3056 = vunpack.c.l.b16 %v2924
        %v3057 = vunpack.c.l.b16 %v2925
        %v3058 = vunpack.c.l.b16 %v2926
        %v3059 = vunpack.c.l.b16 %v2927
        %v3060 = vunpack.c.l.b16 %v2928
        %v3061 = vunpack.c.l.b16 %v2929
        %v3062 = vunpack.c.l.b16 %v2930
        %v3063 = vpack.c.b16 %v3048, %v3047
        %v3064 = vpack.c.b16 %v3050, %v3049
        %v3065 = vpack.c.b16 %v3052, %v3051
        %v3066 = vpack.c.b16 %v3054, %v3053
        %v3067 = vpack.c.b16 %v3056, %v3055
        %v3068 = vpack.c.b16 %v3058, %v3057
        %v3069 = vpack.c.b16 %v3060, %v3059
        %v3070 = vpack.c.b16 %v3062, %v3061
        %v3081 = vunpack.c.l.b16 %v2811
        %v3082 = vunpack.c.l.b16 %v2812
        %v3083 = vpack.c.b16 %v3082, %v3081
        %v3087 = vunpack.c.l.b16 %v2831
        %v3088 = vunpack.c.l.b16 %v2832
        %v3089 = vpack.c.b16 %v3088, %v3087
        %v3093 = vunpack.c.l.b16 %v2931
        %v3094 = vunpack.c.l.b16 %v2932
        %v3095 = vpack.c.b16 %v3094, %v3093
        %v3099 = vunpack.c.l.b16 %v2813
        %v3100 = vunpack.c.l.b16 %v2814
        %v3101 = vpack.c.b16 %v3100, %v3099
        %v3105 = vunpack.c.l.b16 %v2833
        %v3106 = vunpack.c.l.b16 %v2834
        %v3107 = vpack.c.b16 %v3106, %v3105
        %v3111 = vunpack.c.l.b16 %v2933
        %v3112 = vunpack.c.l.b16 %v2934
        %v3113 = vpack.c.b16 %v3112, %v3111
        %v3115 = vld [vmem:[#allocation7] sm:$0xf]
        %v3116 = vld [vmem:[#allocation7 + $0x4] sm:$0xf]
        %v3117 = vld [vmem:[#allocation7 + $0x8] sm:$0xf]
        %v3118 = vld [vmem:[#allocation7 + $0xc] sm:$0xf]
        %v3119 = vld [vmem:[#allocation7 + $0x10] sm:$0xf]
        %v3120 = vld [vmem:[#allocation7 + $0x14] sm:$0xf]
        %v3121 = vld [vmem:[#allocation7 + $0x18] sm:$0xf]
        %v3122 = vld [vmem:[#allocation7 + $0x1c] sm:$0xf]
        %v3123 = vld [vmem:[#allocation7 + $0x20] sm:$0xf]
        %v3124 = vld [vmem:[#allocation7 + $0x24] sm:$0xf]
        %v3125 = vld [vmem:[#allocation7 + $0x28] sm:$0xf]
        %v3126 = vld [vmem:[#allocation7 + $0x2c] sm:$0xf]
        %v3127 = vld [vmem:[#allocation7 + $0x30] sm:$0xf]
        %v3128 = vld [vmem:[#allocation7 + $0x34] sm:$0xf]
        %v3129 = vld [vmem:[#allocation7 + $0x38] sm:$0xf]
        %v3130 = vld [vmem:[#allocation7 + $0x3c] sm:$0xf]
        %v3131 = vld [vmem:[#allocation7 + $0x40] sm:$0xf]
        %v3132 = vld [vmem:[#allocation7 + $0x44] sm:$0xf]
        %v3133 = vld [vmem:[#allocation7 + $0x48] sm:$0xf]
        %v3134 = vld [vmem:[#allocation7 + $0x4c] sm:$0xf]
        %v3135 = vld [vmem:[#allocation7 + $0x50] sm:$0xf]
        %v3136 = vld [vmem:[#allocation7 + $0x54] sm:$0xf]
        %v3137 = vld [vmem:[#allocation7 + $0x58] sm:$0xf]
        %v3138 = vld [vmem:[#allocation7 + $0x5c] sm:$0xf]
        %v3139 = vld [vmem:[#allocation7 + $0x60] sm:$0xf]
        %v3140 = vld [vmem:[#allocation7 + $0x64] sm:$0xf]
        %v3141 = vld [vmem:[#allocation7 + $0x68] sm:$0xf]
        %v3142 = vld [vmem:[#allocation7 + $0x6c] sm:$0xf]
        %v3143 = vld [vmem:[#allocation7 + $0x70] sm:$0xf]
        %v3144 = vld [vmem:[#allocation7 + $0x74] sm:$0xf]
        %v3145 = vld [vmem:[#allocation7 + $0x78] sm:$0xf]
        %v3146 = vld [vmem:[#allocation7 + $0x7c] sm:$0xf]
        %v3147 = vld [vmem:[#allocation7 + $0x80] sm:$0xf]
        %v3148 = vld [vmem:[#allocation7 + $0x84] sm:$0xf]
        %v3149 = vld [vmem:[#allocation7 + $0x88] sm:$0xf]
        %v3150 = vld [vmem:[#allocation7 + $0x8c] sm:$0xf]
        %v3151 = vld [vmem:[#allocation7 + $0x90] sm:$0xf]
        %v3152 = vld [vmem:[#allocation7 + $0x94] sm:$0xf]
        %v3153 = vld [vmem:[#allocation7 + $0x98] sm:$0xf]
        %v3154 = vld [vmem:[#allocation7 + $0x9c] sm:$0xf]
        %v3155 = vld [vmem:[#allocation7 + $0xa0] sm:$0xf]
        %v3156 = vld [vmem:[#allocation7 + $0xa4] sm:$0xf]
        %v3157 = vld [vmem:[#allocation7 + $0xa8] sm:$0xf]
        %v3158 = vld [vmem:[#allocation7 + $0xac] sm:$0xf]
        %v3159 = vld [vmem:[#allocation7 + $0xb0] sm:$0xf]
        %v3160 = vld [vmem:[#allocation7 + $0xb4] sm:$0xf]
        %v3161 = vld [vmem:[#allocation7 + $0xb8] sm:$0xf]
        %v3162 = vld [vmem:[#allocation7 + $0xbc] sm:$0xf]
        %v3163 = vld [vmem:[#allocation7 + $0xc0] sm:$0xf]
        %v3164 = vld [vmem:[#allocation7 + $0xc4] sm:$0xf]
        %v3165 = vld [vmem:[#allocation7 + $0xc8] sm:$0xf]
        %v3166 = vld [vmem:[#allocation7 + $0xcc] sm:$0xf]
        %v3167 = vld [vmem:[#allocation7 + $0xd0] sm:$0xf]
        %v3168 = vld [vmem:[#allocation7 + $0xd4] sm:$0xf]
        %v3169 = vld [vmem:[#allocation7 + $0xd8] sm:$0xf]
        %v3170 = vld [vmem:[#allocation7 + $0xdc] sm:$0xf]
        %v3171 = vld [vmem:[#allocation7 + $0xe0] sm:$0xf]
        %v3172 = vld [vmem:[#allocation7 + $0xe4] sm:$0xf]
        %v3173 = vld [vmem:[#allocation7 + $0xe8] sm:$0xf]
        %v3174 = vld [vmem:[#allocation7 + $0xec] sm:$0xf]
        %v3175 = vld [vmem:[#allocation7 + $0xf0] sm:$0xf]
        %v3176 = vld [vmem:[#allocation7 + $0xf4] sm:$0xf]
        %v3177 = vld [vmem:[#allocation7 + $0xf8] sm:$0xf]
        %v3178 = vld [vmem:[#allocation7 + $0xfc] sm:$0xf]
        %v3179 = vld [vmem:[#allocation7 + $0x100] sm:$0xf]
        %v3180 = vld [vmem:[#allocation7 + $0x104] sm:$0xf]
        %v3181 = vld [vmem:[#allocation7 + $0x108] sm:$0xf]
        %v3182 = vld [vmem:[#allocation7 + $0x10c] sm:$0xf]
        %v3183 = vld [vmem:[#allocation7 + $0x110] sm:$0xf]
        %v3184 = vld [vmem:[#allocation7 + $0x114] sm:$0xf]
        %v3185 = vld [vmem:[#allocation7 + $0x118] sm:$0xf]
        %v3186 = vld [vmem:[#allocation7 + $0x11c] sm:$0xf]
        %v3187 = vld [vmem:[#allocation7 + $0x120] sm:$0xf]
        %v3188 = vld [vmem:[#allocation7 + $0x124] sm:$0xf]
        %v3189 = vld [vmem:[#allocation7 + $0x128] sm:$0xf]
        %v3190 = vld [vmem:[#allocation7 + $0x12c] sm:$0xf]
        %v3191 = vld [vmem:[#allocation7 + $0x130] sm:$0xf]
        %v3192 = vld [vmem:[#allocation7 + $0x134] sm:$0xf]
        %v3193 = vld [vmem:[#allocation7 + $0x138] sm:$0xf]
        %v3194 = vld [vmem:[#allocation7 + $0x13c] sm:$0xf]
        %v3195 = vld [vmem:[#allocation7 + $0x140] sm:$0xf]
        %v3196 = vld [vmem:[#allocation7 + $0x144] sm:$0xf]
        %v3197 = vld [vmem:[#allocation7 + $0x148] sm:$0xf]
        %v3198 = vld [vmem:[#allocation7 + $0x14c] sm:$0xf]
        %v3199 = vld [vmem:[#allocation7 + $0x150] sm:$0xf]
        %v3200 = vld [vmem:[#allocation7 + $0x154] sm:$0xf]
        %v3201 = vld [vmem:[#allocation7 + $0x158] sm:$0xf]
        %v3202 = vld [vmem:[#allocation7 + $0x15c] sm:$0xf]
        %v3203 = vld [vmem:[#allocation7 + $0x160] sm:$0xf]
        %v3204 = vld [vmem:[#allocation7 + $0x164] sm:$0xf]
        %v3205 = vld [vmem:[#allocation7 + $0x168] sm:$0xf]
        %v3206 = vld [vmem:[#allocation7 + $0x16c] sm:$0xf]
        %v3207 = vld [vmem:[#allocation7 + $0x170] sm:$0xf]
        %v3208 = vld [vmem:[#allocation7 + $0x174] sm:$0xf]
        %v3209 = vld [vmem:[#allocation7 + $0x178] sm:$0xf]
        %v3210 = vld [vmem:[#allocation7 + $0x17c] sm:$0xf]
        %v3211 = vld [vmem:[#allocation7 + $0x180] sm:$0xf]
        %v3212 = vld [vmem:[#allocation7 + $0x184] sm:$0xf]
        %v3213 = vld [vmem:[#allocation7 + $0x188] sm:$0xf]
        %v3214 = vld [vmem:[#allocation7 + $0x18c] sm:$0xf]
        %v3215 = vld [vmem:[#allocation7 + $0x190] sm:$0xf]
        %v3216 = vld [vmem:[#allocation7 + $0x194] sm:$0xf]
        %v3217 = vld [vmem:[#allocation7 + $0x198] sm:$0xf]
        %v3218 = vld [vmem:[#allocation7 + $0x19c] sm:$0xf]
        %v3219 = vld [vmem:[#allocation7 + $0x1a0] sm:$0xf]
        %v3220 = vld [vmem:[#allocation7 + $0x1a4] sm:$0xf]
        %v3221 = vld [vmem:[#allocation7 + $0x1a8] sm:$0xf]
        %v3222 = vld [vmem:[#allocation7 + $0x1ac] sm:$0xf]
        %v3223 = vld [vmem:[#allocation7 + $0x1b0] sm:$0xf]
        %v3224 = vld [vmem:[#allocation7 + $0x1b4] sm:$0xf]
        %v3225 = vld [vmem:[#allocation7 + $0x1b8] sm:$0xf]
        %v3226 = vld [vmem:[#allocation7 + $0x1bc] sm:$0xf]
        %v3227 = vld [vmem:[#allocation7 + $0x1c0] sm:$0xf]
        %v3228 = vld [vmem:[#allocation7 + $0x1c4] sm:$0xf]
        %v3229 = vld [vmem:[#allocation7 + $0x1c8] sm:$0xf]
        %v3230 = vld [vmem:[#allocation7 + $0x1cc] sm:$0xf]
        %v3231 = vld [vmem:[#allocation7 + $0x1d0] sm:$0xf]
        %v3232 = vld [vmem:[#allocation7 + $0x1d4] sm:$0xf]
        %v3233 = vld [vmem:[#allocation7 + $0x1d8] sm:$0xf]
        %v3234 = vld [vmem:[#allocation7 + $0x1dc] sm:$0xf]
        %v3235 = vld [vmem:[#allocation7 + $0x1e0] sm:$0xf]
        %v3236 = vld [vmem:[#allocation7 + $0x1e4] sm:$0xf]
        %v3237 = vld [vmem:[#allocation7 + $0x1e8] sm:$0xf]
        %v3238 = vld [vmem:[#allocation7 + $0x1ec] sm:$0xf]
        %v3239 = vld [vmem:[#allocation7 + $0x1f0] sm:$0xf]
        %v3240 = vld [vmem:[#allocation7 + $0x1f4] sm:$0xf]
        %v3241 = vld [vmem:[#allocation7 + $0x1f8] sm:$0xf]
        %v3242 = vld [vmem:[#allocation7 + $0x1fc] sm:$0xf]
        %v3243 = vld [vmem:[#allocation7 + $0x200] sm:$0xf]
        %v3244 = vld [vmem:[#allocation7 + $0x204] sm:$0xf]
        %v3245 = vld [vmem:[#allocation7 + $0x208] sm:$0xf]
        %v3246 = vld [vmem:[#allocation7 + $0x20c] sm:$0xf]
        %v3247 = vld [vmem:[#allocation7 + $0x210] sm:$0xf]
        %v3248 = vld [vmem:[#allocation7 + $0x214] sm:$0xf]
        %v3249 = vld [vmem:[#allocation7 + $0x218] sm:$0xf]
        %v3250 = vld [vmem:[#allocation7 + $0x21c] sm:$0xf]
        %v3251 = vld [vmem:[#allocation7 + $0x220] sm:$0xf]
        %v3252 = vld [vmem:[#allocation7 + $0x224] sm:$0xf]
        %v3253 = vld [vmem:[#allocation7 + $0x228] sm:$0xf]
        %v3254 = vld [vmem:[#allocation7 + $0x22c] sm:$0xf]
        %v3255 = vld [vmem:[#allocation7 + $0x230] sm:$0xf]
        %v3256 = vld [vmem:[#allocation7 + $0x234] sm:$0xf]
        %v3257 = vld [vmem:[#allocation7 + $0x238] sm:$0xf]
        %v3258 = vld [vmem:[#allocation7 + $0x23c] sm:$0xf]
        %v3259 = vld [vmem:[%s4] sm:$0x1]
        %v3261 = vperm.slane %v3259, 0
        %v3407 = vunpack.c.l.b16 %v3115
        %v3408 = vunpack.c.l.b16 %v3116
        %v3409 = vunpack.c.l.b16 %v3117
        %v3410 = vunpack.c.l.b16 %v3118
        %v3411 = vunpack.c.l.b16 %v3119
        %v3412 = vunpack.c.l.b16 %v3120
        %v3413 = vunpack.c.l.b16 %v3121
        %v3414 = vunpack.c.l.b16 %v3122
        %v3415 = vunpack.c.l.b16 %v3123
        %v3416 = vunpack.c.l.b16 %v3124
        %v3417 = vunpack.c.l.b16 %v3125
        %v3418 = vunpack.c.l.b16 %v3126
        %v3419 = vunpack.c.l.b16 %v3127
        %v3420 = vunpack.c.l.b16 %v3128
        %v3421 = vunpack.c.l.b16 %v3129
        %v3422 = vunpack.c.l.b16 %v3130
        %v3423 = vunpack.c.l.b16 %v3131
        %v3424 = vunpack.c.l.b16 %v3132
        %v3425 = vunpack.c.l.b16 %v3133
        %v3426 = vunpack.c.l.b16 %v3134
        %v3427 = vunpack.c.l.b16 %v3135
        %v3428 = vunpack.c.l.b16 %v3136
        %v3429 = vunpack.c.l.b16 %v3137
        %v3430 = vunpack.c.l.b16 %v3138
        %v3431 = vunpack.c.l.b16 %v3139
        %v3432 = vunpack.c.l.b16 %v3140
        %v3433 = vunpack.c.l.b16 %v3141
        %v3434 = vunpack.c.l.b16 %v3142
        %v3435 = vunpack.c.l.b16 %v3143
        %v3436 = vunpack.c.l.b16 %v3144
        %v3437 = vunpack.c.l.b16 %v3145
        %v3438 = vunpack.c.l.b16 %v3146
        %v3439 = vunpack.c.l.b16 %v3147
        %v3440 = vunpack.c.l.b16 %v3148
        %v3441 = vunpack.c.l.b16 %v3149
        %v3442 = vunpack.c.l.b16 %v3150
        %v3443 = vunpack.c.l.b16 %v3151
        %v3444 = vunpack.c.l.b16 %v3152
        %v3445 = vunpack.c.l.b16 %v3153
        %v3446 = vunpack.c.l.b16 %v3154
        %v3447 = vunpack.c.l.b16 %v3155
        %v3448 = vunpack.c.l.b16 %v3156
        %v3449 = vunpack.c.l.b16 %v3157
        %v3450 = vunpack.c.l.b16 %v3158
        %v3451 = vunpack.c.l.b16 %v3159
        %v3452 = vunpack.c.l.b16 %v3160
        %v3453 = vunpack.c.l.b16 %v3161
        %v3454 = vunpack.c.l.b16 %v3162
        %v3455 = vunpack.c.l.b16 %v3163
        %v3456 = vunpack.c.l.b16 %v3164
        %v3457 = vunpack.c.l.b16 %v3165
        %v3458 = vunpack.c.l.b16 %v3166
        %v3459 = vunpack.c.l.b16 %v3167
        %v3460 = vunpack.c.l.b16 %v3168
        %v3461 = vunpack.c.l.b16 %v3169
        %v3462 = vunpack.c.l.b16 %v3170
        %v3463 = vunpack.c.l.b16 %v3171
        %v3464 = vunpack.c.l.b16 %v3172
        %v3465 = vunpack.c.l.b16 %v3173
        %v3466 = vunpack.c.l.b16 %v3174
        %v3467 = vunpack.c.l.b16 %v3175
        %v3468 = vunpack.c.l.b16 %v3176
        %v3469 = vunpack.c.l.b16 %v3177
        %v3470 = vunpack.c.l.b16 %v3178
        %v3471 = vunpack.c.l.b16 %v3179
        %v3472 = vunpack.c.l.b16 %v3180
        %v3473 = vunpack.c.l.b16 %v3181
        %v3474 = vunpack.c.l.b16 %v3182
        %v3475 = vunpack.c.l.b16 %v3183
        %v3476 = vunpack.c.l.b16 %v3184
        %v3477 = vunpack.c.l.b16 %v3185
        %v3478 = vunpack.c.l.b16 %v3186
        %v3479 = vunpack.c.l.b16 %v3187
        %v3480 = vunpack.c.l.b16 %v3188
        %v3481 = vunpack.c.l.b16 %v3189
        %v3482 = vunpack.c.l.b16 %v3190
        %v3483 = vunpack.c.l.b16 %v3191
        %v3484 = vunpack.c.l.b16 %v3192
        %v3485 = vunpack.c.l.b16 %v3193
        %v3486 = vunpack.c.l.b16 %v3194
        %v3487 = vunpack.c.l.b16 %v3195
        %v3488 = vunpack.c.l.b16 %v3196
        %v3489 = vunpack.c.l.b16 %v3197
        %v3490 = vunpack.c.l.b16 %v3198
        %v3491 = vunpack.c.l.b16 %v3199
        %v3492 = vunpack.c.l.b16 %v3200
        %v3493 = vunpack.c.l.b16 %v3201
        %v3494 = vunpack.c.l.b16 %v3202
        %v3495 = vunpack.c.l.b16 %v3203
        %v3496 = vunpack.c.l.b16 %v3204
        %v3497 = vunpack.c.l.b16 %v3205
        %v3498 = vunpack.c.l.b16 %v3206
        %v3499 = vunpack.c.l.b16 %v3207
        %v3500 = vunpack.c.l.b16 %v3208
        %v3501 = vunpack.c.l.b16 %v3209
        %v3502 = vunpack.c.l.b16 %v3210
        %v3503 = vunpack.c.l.b16 %v3211
        %v3504 = vunpack.c.l.b16 %v3212
        %v3505 = vunpack.c.l.b16 %v3213
        %v3506 = vunpack.c.l.b16 %v3214
        %v3507 = vunpack.c.l.b16 %v3215
        %v3508 = vunpack.c.l.b16 %v3216
        %v3509 = vunpack.c.l.b16 %v3217
        %v3510 = vunpack.c.l.b16 %v3218
        %v3511 = vunpack.c.l.b16 %v3219
        %v3512 = vunpack.c.l.b16 %v3220
        %v3513 = vunpack.c.l.b16 %v3221
        %v3514 = vunpack.c.l.b16 %v3222
        %v3515 = vunpack.c.l.b16 %v3223
        %v3516 = vunpack.c.l.b16 %v3224
        %v3517 = vunpack.c.l.b16 %v3225
        %v3518 = vunpack.c.l.b16 %v3226
        %v3519 = vunpack.c.l.b16 %v3227
        %v3520 = vunpack.c.l.b16 %v3228
        %v3521 = vunpack.c.l.b16 %v3229
        %v3522 = vunpack.c.l.b16 %v3230
        %v3523 = vunpack.c.l.b16 %v3231
        %v3524 = vunpack.c.l.b16 %v3232
        %v3525 = vunpack.c.l.b16 %v3233
        %v3526 = vunpack.c.l.b16 %v3234
        %v3527 = vunpack.c.l.b16 %v3235
        %v3528 = vunpack.c.l.b16 %v3236
        %v3529 = vunpack.c.l.b16 %v3237
        %v3530 = vunpack.c.l.b16 %v3238
        %v3531 = vunpack.c.l.b16 %v3239
        %v3532 = vunpack.c.l.b16 %v3240
        %v3533 = vunpack.c.l.b16 %v3241
        %v3534 = vunpack.c.l.b16 %v3242
        %v3535 = vunpack.c.l.b16 %v3243
        %v3536 = vunpack.c.l.b16 %v3244
        %v3537 = vunpack.c.l.b16 %v3245
        %v3538 = vunpack.c.l.b16 %v3246
        %v3539 = vunpack.c.l.b16 %v3247
        %v3540 = vunpack.c.l.b16 %v3248
        %v3541 = vunpack.c.l.b16 %v3249
        %v3542 = vunpack.c.l.b16 %v3250
        %v3543 = vunpack.c.l.b16 %v3251
        %v3544 = vunpack.c.l.b16 %v3252
        %v3545 = vunpack.c.l.b16 %v3253
        %v3546 = vunpack.c.l.b16 %v3254
        %v3547 = vunpack.c.l.b16 %v3255
        %v3548 = vunpack.c.l.b16 %v3256
        %v3549 = vunpack.c.l.b16 %v3257
        %v3550 = vunpack.c.l.b16 %v3258
        %v3551 = vpack.c.b16 %v3408, %v3407
        %v3552 = vpack.c.b16 %v3410, %v3409
        %v3553 = vpack.c.b16 %v3412, %v3411
        %v3554 = vpack.c.b16 %v3414, %v3413
        %v3555 = vpack.c.b16 %v3416, %v3415
        %v3556 = vpack.c.b16 %v3418, %v3417
        %v3557 = vpack.c.b16 %v3420, %v3419
        %v3558 = vpack.c.b16 %v3422, %v3421
        %v3559 = vpack.c.b16 %v3424, %v3423
        %v3560 = vpack.c.b16 %v3426, %v3425
        %v3561 = vpack.c.b16 %v3428, %v3427
        %v3562 = vpack.c.b16 %v3430, %v3429
        %v3563 = vpack.c.b16 %v3432, %v3431
        %v3564 = vpack.c.b16 %v3434, %v3433
        %v3565 = vpack.c.b16 %v3436, %v3435
        %v3566 = vpack.c.b16 %v3438, %v3437
        %v3567 = vpack.c.b16 %v3440, %v3439
        %v3568 = vpack.c.b16 %v3442, %v3441
        %v3569 = vpack.c.b16 %v3444, %v3443
        %v3570 = vpack.c.b16 %v3446, %v3445
        %v3571 = vpack.c.b16 %v3448, %v3447
        %v3572 = vpack.c.b16 %v3450, %v3449
        %v3573 = vpack.c.b16 %v3452, %v3451
        %v3574 = vpack.c.b16 %v3454, %v3453
        %v3575 = vpack.c.b16 %v3456, %v3455
        %v3576 = vpack.c.b16 %v3458, %v3457
        %v3577 = vpack.c.b16 %v3460, %v3459
        %v3578 = vpack.c.b16 %v3462, %v3461
        %v3579 = vpack.c.b16 %v3464, %v3463
        %v3580 = vpack.c.b16 %v3466, %v3465
        %v3581 = vpack.c.b16 %v3468, %v3467
        %v3582 = vpack.c.b16 %v3470, %v3469
        %v3583 = vpack.c.b16 %v3472, %v3471
        %v3584 = vpack.c.b16 %v3474, %v3473
        %v3585 = vpack.c.b16 %v3476, %v3475
        %v3586 = vpack.c.b16 %v3478, %v3477
        %v3587 = vpack.c.b16 %v3480, %v3479
        %v3588 = vpack.c.b16 %v3482, %v3481
        %v3589 = vpack.c.b16 %v3484, %v3483
        %v3590 = vpack.c.b16 %v3486, %v3485
        %v3591 = vpack.c.b16 %v3488, %v3487
        %v3592 = vpack.c.b16 %v3490, %v3489
        %v3593 = vpack.c.b16 %v3492, %v3491
        %v3594 = vpack.c.b16 %v3494, %v3493
        %v3595 = vpack.c.b16 %v3496, %v3495
        %v3596 = vpack.c.b16 %v3498, %v3497
        %v3597 = vpack.c.b16 %v3500, %v3499
        %v3598 = vpack.c.b16 %v3502, %v3501
        %v3599 = vpack.c.b16 %v3504, %v3503
        %v3600 = vpack.c.b16 %v3506, %v3505
        %v3601 = vpack.c.b16 %v3508, %v3507
        %v3602 = vpack.c.b16 %v3510, %v3509
        %v3603 = vpack.c.b16 %v3512, %v3511
        %v3604 = vpack.c.b16 %v3514, %v3513
        %v3605 = vpack.c.b16 %v3516, %v3515
        %v3606 = vpack.c.b16 %v3518, %v3517
        %v3607 = vpack.c.b16 %v3520, %v3519
        %v3608 = vpack.c.b16 %v3522, %v3521
        %v3609 = vpack.c.b16 %v3524, %v3523
        %v3610 = vpack.c.b16 %v3526, %v3525
        %v3611 = vpack.c.b16 %v3528, %v3527
        %v3612 = vpack.c.b16 %v3530, %v3529
        %v3613 = vpack.c.b16 %v3532, %v3531
        %v3614 = vpack.c.b16 %v3534, %v3533
        %v3615 = vpack.c.b16 %v3536, %v3535
        %v3616 = vpack.c.b16 %v3538, %v3537
        %v3617 = vpack.c.b16 %v3540, %v3539
        %v3618 = vpack.c.b16 %v3542, %v3541
        %v3619 = vpack.c.b16 %v3544, %v3543
        %v3620 = vpack.c.b16 %v3546, %v3545
        %v3621 = vpack.c.b16 %v3548, %v3547
        %v3622 = vpack.c.b16 %v3550, %v3549
        %3695 = vmatpush.bf16.msra.mxu0 %v3558
        %3696 = vmatpush.bf16.msra.mxu0 %v3557
        %3697 = vmatpush.bf16.msra.mxu0 %v3556
        %3698 = vmatpush.bf16.msra.mxu0 %v3555
        %3699 = vmatpush.bf16.msra.mxu0 %v3554
        %3700 = vmatpush.bf16.msra.mxu0 %v3553
        %3701 = vmatpush.bf16.msra.mxu0 %v3552
        %3702 = vmatpush.bf16.msra.mxu0 %v3551
        %3703 = vmatmul.bf16.gmra.mxu0 %v2967
        %v3704 = vpop.f32.mrf.mxu0
        %v3705 = vadd.f32 %v3261, %v3704
        %v3706 = vpop.f32.mrf.mxu0
        %v3707 = vadd.f32 %v3261, %v3706
        %3708 = vmatmul.bf16.gmra.mxu0 %v2968
        %v3709 = vpop.f32.mrf.mxu0
        %v3710 = vadd.f32 %v3261, %v3709
        %v3711 = vpop.f32.mrf.mxu0
        %v3712 = vadd.f32 %v3261, %v3711
        %3713 = vmatmul.bf16.gmra.mxu0 %v2969
        %v3714 = vpop.f32.mrf.mxu0
        %v3715 = vadd.f32 %v3261, %v3714
        %v3716 = vpop.f32.mrf.mxu0
        %v3717 = vadd.f32 %v3261, %v3716
        %3718 = vmatmul.bf16.gmra.mxu0 %v2970
        %v3719 = vpop.f32.mrf.mxu0
        %v3720 = vadd.f32 %v3261, %v3719
        %v3721 = vpop.f32.mrf.mxu0
        %v3722 = vadd.f32 %v3261, %v3721
        %3723 = vmatmul.bf16.gmra.mxu0 %v2971
        %v3724 = vpop.f32.mrf.mxu0
        %v3725 = vadd.f32 %v3261, %v3724
        %v3726 = vpop.f32.mrf.mxu0
        %v3727 = vadd.f32 %v3261, %v3726
        %3728 = vmatmul.bf16.gmra.mxu0 %v2972
        %v3729 = vpop.f32.mrf.mxu0
        %v3730 = vadd.f32 %v3261, %v3729
        %v3731 = vpop.f32.mrf.mxu0
        %v3732 = vadd.f32 %v3261, %v3731
        %3733 = vmatmul.bf16.gmra.mxu0 %v2973
        %v3734 = vpop.f32.mrf.mxu0
        %v3735 = vadd.f32 %v3261, %v3734
        %v3736 = vpop.f32.mrf.mxu0
        %v3737 = vadd.f32 %v3261, %v3736
        %3738 = vmatmul.bf16.gmra.mxu0 %v2974
        %v3739 = vpop.f32.mrf.mxu0
        %v3740 = vadd.f32 %v3261, %v3739
        %v3741 = vpop.f32.mrf.mxu0
        %v3742 = vadd.f32 %v3261, %v3741
        %3743 = vdwg.mxu0
        %3744 = vmatpush.bf16.msra.mxu0 %v3566
        %3745 = vmatpush.bf16.msra.mxu0 %v3565
        %3746 = vmatpush.bf16.msra.mxu0 %v3564
        %3747 = vmatpush.bf16.msra.mxu0 %v3563
        %3748 = vmatpush.bf16.msra.mxu0 %v3562
        %3749 = vmatpush.bf16.msra.mxu0 %v3561
        %3750 = vmatpush.bf16.msra.mxu0 %v3560
        %3751 = vmatpush.bf16.msra.mxu0 %v3559
        %3752 = vmatmul.bf16.gmra.mxu0 %v3015
        %v3753 = vpop.f32.mrf.mxu0
        %v3754 = vadd.f32 %v3705, %v3753
        %v3755 = vpop.f32.mrf.mxu0
        %v3756 = vadd.f32 %v3707, %v3755
        %3757 = vmatmul.bf16.gmra.mxu0 %v3016
        %v3758 = vpop.f32.mrf.mxu0
        %v3759 = vadd.f32 %v3710, %v3758
        %v3760 = vpop.f32.mrf.mxu0
        %v3761 = vadd.f32 %v3712, %v3760
        %3762 = vmatmul.bf16.gmra.mxu0 %v3017
        %v3763 = vpop.f32.mrf.mxu0
        %v3764 = vadd.f32 %v3715, %v3763
        %v3765 = vpop.f32.mrf.mxu0
        %v3766 = vadd.f32 %v3717, %v3765
        %3767 = vmatmul.bf16.gmra.mxu0 %v3018
        %v3768 = vpop.f32.mrf.mxu0
        %v3769 = vadd.f32 %v3720, %v3768
        %v3770 = vpop.f32.mrf.mxu0
        %v3771 = vadd.f32 %v3722, %v3770
        %3772 = vmatmul.bf16.gmra.mxu0 %v3019
        %v3773 = vpop.f32.mrf.mxu0
        %v3774 = vadd.f32 %v3725, %v3773
        %v3775 = vpop.f32.mrf.mxu0
        %v3776 = vadd.f32 %v3727, %v3775
        %3777 = vmatmul.bf16.gmra.mxu0 %v3020
        %v3778 = vpop.f32.mrf.mxu0
        %v3779 = vadd.f32 %v3730, %v3778
        %v3780 = vpop.f32.mrf.mxu0
        %v3781 = vadd.f32 %v3732, %v3780
        %3782 = vmatmul.bf16.gmra.mxu0 %v3021
        %v3783 = vpop.f32.mrf.mxu0
        %v3784 = vadd.f32 %v3735, %v3783
        %v3785 = vpop.f32.mrf.mxu0
        %v3786 = vadd.f32 %v3737, %v3785
        %3787 = vmatmul.bf16.gmra.mxu0 %v3022
        %v3788 = vpop.f32.mrf.mxu0
        %v3789 = vadd.f32 %v3740, %v3788
        %v3790 = vpop.f32.mrf.mxu0
        %v3791 = vadd.f32 %v3742, %v3790
        %3792 = vdwg.mxu0
        %3793 = vmatpush.bf16.msra.mxu0 %v3574
        %3794 = vmatpush.bf16.msra.mxu0 %v3573
        %3795 = vmatpush.bf16.msra.mxu0 %v3572
        %3796 = vmatpush.bf16.msra.mxu0 %v3571
        %3797 = vmatpush.bf16.msra.mxu0 %v3570
        %3798 = vmatpush.bf16.msra.mxu0 %v3569
        %3799 = vmatpush.bf16.msra.mxu0 %v3568
        %3800 = vmatpush.bf16.msra.mxu0 %v3567
        %3801 = vmatmul.bf16.gmra.mxu0 %v3063
        %v3802 = vpop.f32.mrf.mxu0
        %v3803 = vadd.f32 %v3754, %v3802
        %v3804 = vpop.f32.mrf.mxu0
        %v3805 = vadd.f32 %v3756, %v3804
        %3806 = vmatmul.bf16.gmra.mxu0 %v3064
        %v3807 = vpop.f32.mrf.mxu0
        %v3808 = vadd.f32 %v3759, %v3807
        %v3809 = vpop.f32.mrf.mxu0
        %v3810 = vadd.f32 %v3761, %v3809
        %3811 = vmatmul.bf16.gmra.mxu0 %v3065
        %v3812 = vpop.f32.mrf.mxu0
        %v3813 = vadd.f32 %v3764, %v3812
        %v3814 = vpop.f32.mrf.mxu0
        %v3815 = vadd.f32 %v3766, %v3814
        %3816 = vmatmul.bf16.gmra.mxu0 %v3066
        %v3817 = vpop.f32.mrf.mxu0
        %v3818 = vadd.f32 %v3769, %v3817
        %v3819 = vpop.f32.mrf.mxu0
        %v3820 = vadd.f32 %v3771, %v3819
        %3821 = vmatmul.bf16.gmra.mxu0 %v3067
        %v3822 = vpop.f32.mrf.mxu0
        %v3823 = vadd.f32 %v3774, %v3822
        %v3824 = vpop.f32.mrf.mxu0
        %v3825 = vadd.f32 %v3776, %v3824
        %3826 = vmatmul.bf16.gmra.mxu0 %v3068
        %v3827 = vpop.f32.mrf.mxu0
        %v3828 = vadd.f32 %v3779, %v3827
        %v3829 = vpop.f32.mrf.mxu0
        %v3830 = vadd.f32 %v3781, %v3829
        %3831 = vmatmul.bf16.gmra.mxu0 %v3069
        %v3832 = vpop.f32.mrf.mxu0
        %v3833 = vadd.f32 %v3784, %v3832
        %v3834 = vpop.f32.mrf.mxu0
        %v3835 = vadd.f32 %v3786, %v3834
        %3836 = vmatmul.bf16.gmra.mxu0 %v3070
        %v3837 = vpop.f32.mrf.mxu0
        %v3838 = vadd.f32 %v3789, %v3837
        %v3839 = vpop.f32.mrf.mxu0
        %v3840 = vadd.f32 %v3791, %v3839
        %3841 = vdwg.mxu0
        %3842 = vmatpush.bf16.msra.mxu0 %v3582
        %3843 = vmatpush.bf16.msra.mxu0 %v3581
        %3844 = vmatpush.bf16.msra.mxu0 %v3580
        %3845 = vmatpush.bf16.msra.mxu0 %v3579
        %3846 = vmatpush.bf16.msra.mxu0 %v3578
        %3847 = vmatpush.bf16.msra.mxu0 %v3577
        %3848 = vmatpush.bf16.msra.mxu0 %v3576
        %3849 = vmatpush.bf16.msra.mxu0 %v3575
        %3850 = vmatmul.bf16.gmra.mxu0 %v2968
        %v3851 = vpop.f32.mrf.mxu0
        %v3852 = vadd.f32 %v3803, %v3851
        %v3853 = vpop.f32.mrf.mxu0
        %v3854 = vadd.f32 %v3805, %v3853
        %3855 = vmatmul.bf16.gmra.mxu0 %v2969
        %v3856 = vpop.f32.mrf.mxu0
        %v3857 = vadd.f32 %v3808, %v3856
        %v3858 = vpop.f32.mrf.mxu0
        %v3859 = vadd.f32 %v3810, %v3858
        %3860 = vmatmul.bf16.gmra.mxu0 %v2970
        %v3861 = vpop.f32.mrf.mxu0
        %v3862 = vadd.f32 %v3813, %v3861
        %v3863 = vpop.f32.mrf.mxu0
        %v3864 = vadd.f32 %v3815, %v3863
        %3865 = vmatmul.bf16.gmra.mxu0 %v2971
        %v3866 = vpop.f32.mrf.mxu0
        %v3867 = vadd.f32 %v3818, %v3866
        %v3868 = vpop.f32.mrf.mxu0
        %v3869 = vadd.f32 %v3820, %v3868
        %3870 = vmatmul.bf16.gmra.mxu0 %v2972
        %v3871 = vpop.f32.mrf.mxu0
        %v3872 = vadd.f32 %v3823, %v3871
        %v3873 = vpop.f32.mrf.mxu0
        %v3874 = vadd.f32 %v3825, %v3873
        %3875 = vmatmul.bf16.gmra.mxu0 %v2973
        %v3876 = vpop.f32.mrf.mxu0
        %v3877 = vadd.f32 %v3828, %v3876
        %v3878 = vpop.f32.mrf.mxu0
        %v3879 = vadd.f32 %v3830, %v3878
        %3880 = vmatmul.bf16.gmra.mxu0 %v2974
        %v3881 = vpop.f32.mrf.mxu0
        %v3882 = vadd.f32 %v3833, %v3881
        %v3883 = vpop.f32.mrf.mxu0
        %v3884 = vadd.f32 %v3835, %v3883
        %3885 = vmatmul.bf16.gmra.mxu0 %v3083
        %v3886 = vpop.f32.mrf.mxu0
        %v3887 = vadd.f32 %v3838, %v3886
        %v3888 = vpop.f32.mrf.mxu0
        %v3889 = vadd.f32 %v3840, %v3888
        %3890 = vdwg.mxu0
        %3891 = vmatpush.bf16.msra.mxu0 %v3590
        %3892 = vmatpush.bf16.msra.mxu0 %v3589
        %3893 = vmatpush.bf16.msra.mxu0 %v3588
        %3894 = vmatpush.bf16.msra.mxu0 %v3587
        %3895 = vmatpush.bf16.msra.mxu0 %v3586
        %3896 = vmatpush.bf16.msra.mxu0 %v3585
        %3897 = vmatpush.bf16.msra.mxu0 %v3584
        %3898 = vmatpush.bf16.msra.mxu0 %v3583
        %3899 = vmatmul.bf16.gmra.mxu0 %v3016
        %v3900 = vpop.f32.mrf.mxu0
        %v3901 = vadd.f32 %v3852, %v3900
        %v3902 = vpop.f32.mrf.mxu0
        %v3903 = vadd.f32 %v3854, %v3902
        %3904 = vmatmul.bf16.gmra.mxu0 %v3017
        %v3905 = vpop.f32.mrf.mxu0
        %v3906 = vadd.f32 %v3857, %v3905
        %v3907 = vpop.f32.mrf.mxu0
        %v3908 = vadd.f32 %v3859, %v3907
        %3909 = vmatmul.bf16.gmra.mxu0 %v3018
        %v3910 = vpop.f32.mrf.mxu0
        %v3911 = vadd.f32 %v3862, %v3910
        %v3912 = vpop.f32.mrf.mxu0
        %v3913 = vadd.f32 %v3864, %v3912
        %3914 = vmatmul.bf16.gmra.mxu0 %v3019
        %v3915 = vpop.f32.mrf.mxu0
        %v3916 = vadd.f32 %v3867, %v3915
        %v3917 = vpop.f32.mrf.mxu0
        %v3918 = vadd.f32 %v3869, %v3917
        %3919 = vmatmul.bf16.gmra.mxu0 %v3020
        %v3920 = vpop.f32.mrf.mxu0
        %v3921 = vadd.f32 %v3872, %v3920
        %v3922 = vpop.f32.mrf.mxu0
        %v3923 = vadd.f32 %v3874, %v3922
        %3924 = vmatmul.bf16.gmra.mxu0 %v3021
        %v3925 = vpop.f32.mrf.mxu0
        %v3926 = vadd.f32 %v3877, %v3925
        %v3927 = vpop.f32.mrf.mxu0
        %v3928 = vadd.f32 %v3879, %v3927
        %3929 = vmatmul.bf16.gmra.mxu0 %v3022
        %v3930 = vpop.f32.mrf.mxu0
        %v3931 = vadd.f32 %v3882, %v3930
        %v3932 = vpop.f32.mrf.mxu0
        %v3933 = vadd.f32 %v3884, %v3932
        %3934 = vmatmul.bf16.gmra.mxu0 %v3089
        %v3935 = vpop.f32.mrf.mxu0
        %v3936 = vadd.f32 %v3887, %v3935
        %v3937 = vpop.f32.mrf.mxu0
        %v3938 = vadd.f32 %v3889, %v3937
        %3939 = vdwg.mxu0
        %3940 = vmatpush.bf16.msra.mxu0 %v3598
        %3941 = vmatpush.bf16.msra.mxu0 %v3597
        %3942 = vmatpush.bf16.msra.mxu0 %v3596
        %3943 = vmatpush.bf16.msra.mxu0 %v3595
        %3944 = vmatpush.bf16.msra.mxu0 %v3594
        %3945 = vmatpush.bf16.msra.mxu0 %v3593
        %3946 = vmatpush.bf16.msra.mxu0 %v3592
        %3947 = vmatpush.bf16.msra.mxu0 %v3591
        %3948 = vmatmul.bf16.gmra.mxu0 %v3064
        %v3949 = vpop.f32.mrf.mxu0
        %v3950 = vadd.f32 %v3901, %v3949
        %v3951 = vpop.f32.mrf.mxu0
        %v3952 = vadd.f32 %v3903, %v3951
        %3953 = vmatmul.bf16.gmra.mxu0 %v3065
        %v3954 = vpop.f32.mrf.mxu0
        %v3955 = vadd.f32 %v3906, %v3954
        %v3956 = vpop.f32.mrf.mxu0
        %v3957 = vadd.f32 %v3908, %v3956
        %3958 = vmatmul.bf16.gmra.mxu0 %v3066
        %v3959 = vpop.f32.mrf.mxu0
        %v3960 = vadd.f32 %v3911, %v3959
        %v3961 = vpop.f32.mrf.mxu0
        %v3962 = vadd.f32 %v3913, %v3961
        %3963 = vmatmul.bf16.gmra.mxu0 %v3067
        %v3964 = vpop.f32.mrf.mxu0
        %v3965 = vadd.f32 %v3916, %v3964
        %v3966 = vpop.f32.mrf.mxu0
        %v3967 = vadd.f32 %v3918, %v3966
        %3968 = vmatmul.bf16.gmra.mxu0 %v3068
        %v3969 = vpop.f32.mrf.mxu0
        %v3970 = vadd.f32 %v3921, %v3969
        %v3971 = vpop.f32.mrf.mxu0
        %v3972 = vadd.f32 %v3923, %v3971
        %3973 = vmatmul.bf16.gmra.mxu0 %v3069
        %v3974 = vpop.f32.mrf.mxu0
        %v3975 = vadd.f32 %v3926, %v3974
        %v3976 = vpop.f32.mrf.mxu0
        %v3977 = vadd.f32 %v3928, %v3976
        %3978 = vmatmul.bf16.gmra.mxu0 %v3070
        %v3979 = vpop.f32.mrf.mxu0
        %v3980 = vadd.f32 %v3931, %v3979
        %v3981 = vpop.f32.mrf.mxu0
        %v3982 = vadd.f32 %v3933, %v3981
        %3983 = vmatmul.bf16.gmra.mxu0 %v3095
        %v3984 = vpop.f32.mrf.mxu0
        %v3985 = vadd.f32 %v3936, %v3984
        %v3986 = vpop.f32.mrf.mxu0
        %v3987 = vadd.f32 %v3938, %v3986
        %3988 = vdwg.mxu0
        %3989 = vmatpush.bf16.msra.mxu0 %v3606
        %3990 = vmatpush.bf16.msra.mxu0 %v3605
        %3991 = vmatpush.bf16.msra.mxu0 %v3604
        %3992 = vmatpush.bf16.msra.mxu0 %v3603
        %3993 = vmatpush.bf16.msra.mxu0 %v3602
        %3994 = vmatpush.bf16.msra.mxu0 %v3601
        %3995 = vmatpush.bf16.msra.mxu0 %v3600
        %3996 = vmatpush.bf16.msra.mxu0 %v3599
        %3997 = vmatmul.bf16.gmra.mxu0 %v2969
        %v3998 = vpop.f32.mrf.mxu0
        %v3999 = vadd.f32 %v3950, %v3998
        %v4000 = vpop.f32.mrf.mxu0
        %v4001 = vadd.f32 %v3952, %v4000
        %4002 = vmatmul.bf16.gmra.mxu0 %v2970
        %v4003 = vpop.f32.mrf.mxu0
        %v4004 = vadd.f32 %v3955, %v4003
        %v4005 = vpop.f32.mrf.mxu0
        %v4006 = vadd.f32 %v3957, %v4005
        %4007 = vmatmul.bf16.gmra.mxu0 %v2971
        %v4008 = vpop.f32.mrf.mxu0
        %v4009 = vadd.f32 %v3960, %v4008
        %v4010 = vpop.f32.mrf.mxu0
        %v4011 = vadd.f32 %v3962, %v4010
        %4012 = vmatmul.bf16.gmra.mxu0 %v2972
        %v4013 = vpop.f32.mrf.mxu0
        %v4014 = vadd.f32 %v3965, %v4013
        %v4015 = vpop.f32.mrf.mxu0
        %v4016 = vadd.f32 %v3967, %v4015
        %4017 = vmatmul.bf16.gmra.mxu0 %v2973
        %v4018 = vpop.f32.mrf.mxu0
        %v4019 = vadd.f32 %v3970, %v4018
        %v4020 = vpop.f32.mrf.mxu0
        %v4021 = vadd.f32 %v3972, %v4020
        %4022 = vmatmul.bf16.gmra.mxu0 %v2974
        %v4023 = vpop.f32.mrf.mxu0
        %v4024 = vadd.f32 %v3975, %v4023
        %v4025 = vpop.f32.mrf.mxu0
        %v4026 = vadd.f32 %v3977, %v4025
        %4027 = vmatmul.bf16.gmra.mxu0 %v3083
        %v4028 = vpop.f32.mrf.mxu0
        %v4029 = vadd.f32 %v3980, %v4028
        %v4030 = vpop.f32.mrf.mxu0
        %v4031 = vadd.f32 %v3982, %v4030
        %4032 = vmatmul.bf16.gmra.mxu0 %v3101
        %v4033 = vpop.f32.mrf.mxu0
        %v4034 = vadd.f32 %v3985, %v4033
        %v4035 = vpop.f32.mrf.mxu0
        %v4036 = vadd.f32 %v3987, %v4035
        %4037 = vdwg.mxu0
        %4038 = vmatpush.bf16.msra.mxu0 %v3614
        %4039 = vmatpush.bf16.msra.mxu0 %v3613
        %4040 = vmatpush.bf16.msra.mxu0 %v3612
        %4041 = vmatpush.bf16.msra.mxu0 %v3611
        %4042 = vmatpush.bf16.msra.mxu0 %v3610
        %4043 = vmatpush.bf16.msra.mxu0 %v3609
        %4044 = vmatpush.bf16.msra.mxu0 %v3608
        %4045 = vmatpush.bf16.msra.mxu0 %v3607
        %4046 = vmatmul.bf16.gmra.mxu0 %v3017
        %v4047 = vpop.f32.mrf.mxu0
        %v4048 = vadd.f32 %v3999, %v4047
        %v4049 = vpop.f32.mrf.mxu0
        %v4050 = vadd.f32 %v4001, %v4049
        %4051 = vmatmul.bf16.gmra.mxu0 %v3018
        %v4052 = vpop.f32.mrf.mxu0
        %v4053 = vadd.f32 %v4004, %v4052
        %v4054 = vpop.f32.mrf.mxu0
        %v4055 = vadd.f32 %v4006, %v4054
        %4056 = vmatmul.bf16.gmra.mxu0 %v3019
        %v4057 = vpop.f32.mrf.mxu0
        %v4058 = vadd.f32 %v4009, %v4057
        %v4059 = vpop.f32.mrf.mxu0
        %v4060 = vadd.f32 %v4011, %v4059
        %4061 = vmatmul.bf16.gmra.mxu0 %v3020
        %v4062 = vpop.f32.mrf.mxu0
        %v4063 = vadd.f32 %v4014, %v4062
        %v4064 = vpop.f32.mrf.mxu0
        %v4065 = vadd.f32 %v4016, %v4064
        %4066 = vmatmul.bf16.gmra.mxu0 %v3021
        %v4067 = vpop.f32.mrf.mxu0
        %v4068 = vadd.f32 %v4019, %v4067
        %v4069 = vpop.f32.mrf.mxu0
        %v4070 = vadd.f32 %v4021, %v4069
        %4071 = vmatmul.bf16.gmra.mxu0 %v3022
        %v4072 = vpop.f32.mrf.mxu0
        %v4073 = vadd.f32 %v4024, %v4072
        %v4074 = vpop.f32.mrf.mxu0
        %v4075 = vadd.f32 %v4026, %v4074
        %4076 = vmatmul.bf16.gmra.mxu0 %v3089
        %v4077 = vpop.f32.mrf.mxu0
        %v4078 = vadd.f32 %v4029, %v4077
        %v4079 = vpop.f32.mrf.mxu0
        %v4080 = vadd.f32 %v4031, %v4079
        %4081 = vmatmul.bf16.gmra.mxu0 %v3107
        %v4082 = vpop.f32.mrf.mxu0
        %v4083 = vadd.f32 %v4034, %v4082
        %v4084 = vpop.f32.mrf.mxu0
        %v4085 = vadd.f32 %v4036, %v4084
        %4086 = vdwg.mxu0
        %4087 = vmatpush.bf16.msra.mxu0 %v3622
        %4088 = vmatpush.bf16.msra.mxu0 %v3621
        %4089 = vmatpush.bf16.msra.mxu0 %v3620
        %4090 = vmatpush.bf16.msra.mxu0 %v3619
        %4091 = vmatpush.bf16.msra.mxu0 %v3618
        %4092 = vmatpush.bf16.msra.mxu0 %v3617
        %4093 = vmatpush.bf16.msra.mxu0 %v3616
        %4094 = vmatpush.bf16.msra.mxu0 %v3615
        %4095 = vmatmul.bf16.gmra.mxu0 %v3065
        %v4096 = vpop.f32.mrf.mxu0
        %v4097 = vadd.f32 %v4048, %v4096
        %v4098 = vpop.f32.mrf.mxu0
        %v4099 = vadd.f32 %v4050, %v4098
        %4100 = vmatmul.bf16.gmra.mxu0 %v3066
        %v4101 = vpop.f32.mrf.mxu0
        %v4102 = vadd.f32 %v4053, %v4101
        %v4103 = vpop.f32.mrf.mxu0
        %v4104 = vadd.f32 %v4055, %v4103
        %4105 = vmatmul.bf16.gmra.mxu0 %v3067
        %v4106 = vpop.f32.mrf.mxu0
        %v4107 = vadd.f32 %v4058, %v4106
        %v4108 = vpop.f32.mrf.mxu0
        %v4109 = vadd.f32 %v4060, %v4108
        %4110 = vmatmul.bf16.gmra.mxu0 %v3068
        %v4111 = vpop.f32.mrf.mxu0
        %v4112 = vadd.f32 %v4063, %v4111
        %v4113 = vpop.f32.mrf.mxu0
        %v4114 = vadd.f32 %v4065, %v4113
        %4115 = vmatmul.bf16.gmra.mxu0 %v3069
        %v4116 = vpop.f32.mrf.mxu0
        %v4117 = vadd.f32 %v4068, %v4116
        %v4118 = vpop.f32.mrf.mxu0
        %v4119 = vadd.f32 %v4070, %v4118
        %4120 = vmatmul.bf16.gmra.mxu0 %v3070
        %v4121 = vpop.f32.mrf.mxu0
        %v4122 = vadd.f32 %v4073, %v4121
        %v4123 = vpop.f32.mrf.mxu0
        %v4124 = vadd.f32 %v4075, %v4123
        %4125 = vmatmul.bf16.gmra.mxu0 %v3095
        %v4126 = vpop.f32.mrf.mxu0
        %v4127 = vadd.f32 %v4078, %v4126
        %v4128 = vpop.f32.mrf.mxu0
        %v4129 = vadd.f32 %v4080, %v4128
        %4130 = vmatmul.bf16.gmra.mxu0 %v3113
        %v4131 = vpop.f32.mrf.mxu0
        %v4132 = vadd.f32 %v4083, %v4131
        %v4133 = vpop.f32.mrf.mxu0
        %v4134 = vadd.f32 %v4085, %v4133
        %4135 = vdwg.mxu0
        %v4136 = vadd.f32 %v4097, %v359
        %v4137 = vadd.f32 %v4099, %v360
        %v4138 = vadd.f32 %v4102, %v361
        %v4139 = vadd.f32 %v4104, %v362
        %v4140 = vadd.f32 %v4107, %v363
        %v4141 = vadd.f32 %v4109, %v364
        %v4142 = vadd.f32 %v4112, %v365
        %v4143 = vadd.f32 %v4114, %v366
        %v4144 = vadd.f32 %v4117, %v367
        %v4145 = vadd.f32 %v4119, %v368
        %v4146 = vadd.f32 %v4122, %v369
        %v4147 = vadd.f32 %v4124, %v370
        %v4148 = vadd.f32 %v4127, %v371
        %v4149 = vadd.f32 %v4129, %v372
        %v4150 = vadd.f32 %v4132, %v373
        %v4151 = vadd.f32 %v4134, %v374
        %4152 = vst [vmem:[%s351] sm:$0xff] %v4136
        %4153 = vst [vmem:[%s351 + $0x8] sm:$0xff] %v4137
        %4154 = vst [vmem:[%s351 + $0x10] sm:$0xff] %v4138
        %4155 = vst [vmem:[%s351 + $0x18] sm:$0xff] %v4139
        %4156 = vst [vmem:[%s351 + $0x20] sm:$0xff] %v4140
        %4157 = vst [vmem:[%s351 + $0x28] sm:$0xff] %v4141
        %4158 = vst [vmem:[%s351 + $0x30] sm:$0xff] %v4142
        %4159 = vst [vmem:[%s351 + $0x38] sm:$0xff] %v4143
        %4160 = vst [vmem:[%s351 + $0x40] sm:$0xff] %v4144
        %4161 = vst [vmem:[%s351 + $0x48] sm:$0xff] %v4145
        %4162 = vst [vmem:[%s351 + $0x50] sm:$0xff] %v4146
        %4163 = vst [vmem:[%s351 + $0x58] sm:$0xff] %v4147
        %4164 = vst [vmem:[%s351 + $0x60] sm:$0xff] %v4148
        %4165 = vst [vmem:[%s351 + $0x68] sm:$0xff] %v4149
        %4166 = vst [vmem:[%s351 + $0x70] sm:$0xff] %v4150
        %4167 = vst [vmem:[%s351 + $0x78] sm:$0xff] %v4151
        %s4168 = sand.u32 %s203, 1
        %s4169 = scalar_lea.sflag [#allocation4], %s4168
        %s4170 = sand.u32 %s203, 1
        %s4171 = smul.addr %s4170, 128
        %s4172 = scalar_lea.vmem [#allocation8], %s4171
        // Predicated region
        $region61: #{tpu_custom_call.1} parent=47 // pred_check
          %p4173 = pneg %p213
        $region62: #{tpu_custom_call.1} parent=47 // pred_check_branch
          %4175 = sbr.rel (%p4173) target = $region64
        $region63: #{tpu_custom_call.1} parent=47 // pred_region
          %s4176 = smul.u32 8, %s30
          %4178 = vsyncadd %s4169, 0
          %s4179 = smul.addr %s4176, 2
          %s4180 = smul.addr %s29, 32
          %s4181 = sadd.s32 %s4179, %s4180
          %s4182 = smul.addr %s4181, 8
          %s4183 = scalar_lea.hbm %s7, %s4182
          %s4184 = sshll.u32 %s4172, 4
          %s4185 = int_to_ptr.vmem [resolvable:$true] %s4184
          %s4186 = sshll.u32 %s4183, 4
          %s4187 = int_to_ptr.hbm [resolvable:$true] %s4186
          %4192 = dma.vmem_to_hbm [thread:$0]  %s4185, 2048, %s4187, %s4169, 128, 128, 8
        $region64: #{tpu_custom_call.1} parent=47 // pred_fallthru
          _
      $region48: #{tpu_custom_call.1} parent=5 // pred_fallthru
        _
      %p4193 = scmp.le.s32.totalorder 2, %s20
      // Predicated region
      $region65: #{tpu_custom_call.1} parent=5 // pred_check
        %p4194 = pneg %p4193
      $region66: #{tpu_custom_call.1} parent=5 // pred_check_branch
        %4196 = sbr.rel (%p4194) target = $region68
      $region67: #{tpu_custom_call.1} parent=5 // pred_region
        %s4197 = ssub.s32 %s20, 2
        // Predicated region
        $region69: #{tpu_custom_call.1} parent=67 // pred_check
          %p4198 = pneg %p219
        $region70: #{tpu_custom_call.1} parent=67 // pred_check_branch
          %4200 = sbr.rel (%p4198) target = $region72
        $region71: #{tpu_custom_call.1} parent=67 // pred_region
          %s4201 = sand.u32 %s204, 1
          %s4202 = scalar_lea.sflag [#allocation4], %s4201
          %s4203 = sand.u32 %s204, 1
          %s4204 = smul.addr %s4203, 128
          %s4205 = scalar_lea.vmem [#allocation8], %s4204
          %4207 = dma.done %s4202, 2048
        $region72: #{tpu_custom_call.1} parent=67 // pred_fallthru
          _
      $region68: #{tpu_custom_call.1} parent=5 // pred_fallthru
        _
    $region6: #{tpu_custom_call.1} parent=1 // loop_footer
      %s24 = sadd.s32 1, %s20
    $region7: #{tpu_custom_call.1} parent=1 // loop_footer_branch
      %19 = sbr.rel target = $region3
    $region8: #{tpu_custom_call.1} parent=1 // loop_exit
      _
    %4208 = vsyncpa [#allocation3], 1
    %s4209 = scalar_lea.sflag [#allocation3], 1
    %4210 = vsyncpa %s4209, 1
    %4211 = vsyncpa [#allocation6], 1
    %4212 = vsyncpa [#allocation4], 1
    %s4213 = scalar_lea.sflag [#allocation4], 1
    %4214 = vsyncpa %s4213, 1

</llo_original>
